<compile_context>
chip_gen: v7x
topology: tpu7x:2x2x1
jax: 0.10.0
libtpu: 0.0.40
codegen_flags: <defaults>
</compile_context>

<pallas_src>
import functools
import math

import jax
import jax.numpy as jnp
import numpy as np
from jax.experimental import pallas as pl
from jax.experimental.pallas import tpu as pltpu


def _decoder_block_kernel(x_ref, enc_ref, tgt_mask_ref, src_mask_ref,
                          w_ref, w2_ref, b_ref, ln_ref, out_ref,
                          *, head_num, head_dim, model_dim, ff_dim, q_block,
                          eps, compute_dtype):
    D, F, H, hd, TQ = model_dim, ff_dim, head_num, head_dim, q_block
    cdt = compute_dtype
    f32 = jnp.float32

    row0 = pl.multiple_of(pl.program_id(1) * TQ, TQ)

    x_full = x_ref[0]                          # (S, D)    full target sequence (self-attn K/V)
    x_rows = x_ref[0, pl.ds(row0, TQ), :]      # (TQ, D)   residual-stream rows of this tile
    enc = enc_ref[0]                           # (S_src, D)

    # Additive attention masks, computed ONCE per grid step (hoisted out of all heads).
    neg = jnp.float32(-1e9)
    zero = jnp.float32(0.0)
    tgt_bias = jnp.where(tgt_mask_ref[0, 0] == 0, neg, zero)   # (TQ, S)
    src_bias = jnp.where(src_mask_ref[0, 0] == 0, neg, zero)   # (TQ, S_src)

    # LayerNormalization: alpha * (x - mean) / (std + eps) + beta, unbiased std (N-1).
    def layer_norm(t, alpha, beta):
        n = t.shape[-1]
        mean = jnp.mean(t, axis=-1, keepdims=True)
        var = jnp.sum(jnp.square(t - mean), axis=-1, keepdims=True) / (n - 1)
        inv = pl.reciprocal(jnp.sqrt(var) + eps, approx=True)   # EUP, nearly free
        return alpha * (t - mean) * inv + beta

    scale = 1.0 / math.sqrt(hd)

    def attention(qp, kp, vp, bias, wo, bo):
        """qp: (Tq, D), kp/vp: (Sk, D) f32 projections; bias: (Tq, Sk) additive mask."""
        qp = qp * scale
        # Head-major (H, seq, hd) stacks; everything below is batched over ALL heads.
        qh = jnp.stack([qp[:, h * hd:(h + 1) * hd] for h in range(H)], 0).astype(cdt)
        kh = jnp.stack([kp[:, h * hd:(h + 1) * hd] for h in range(H)], 0).astype(cdt)
        vh = jnp.stack([vp[:, h * hd:(h + 1) * hd] for h in range(H)], 0).astype(cdt)
        # Q.K^T contracting hd directly — no materialized transpose of K.
        s = jnp.einsum('hqd,hkd->hqk', qh, kh, preferred_element_type=f32)   # (H, Tq, Sk)
        s = s + bias[None, :, :]
        m = jnp.max(s, axis=-1, keepdims=True)
        e = jnp.exp(s - m)
        denom = jnp.sum(e, axis=-1, keepdims=True)                           # (H, Tq, 1)
        pv = jnp.einsum('hqk,hkd->hqd', e.astype(cdt), vh,
                        preferred_element_type=f32)                          # (H, Tq, hd)
        ctx = pv * pl.reciprocal(denom, approx=True)    # deferred softmax normalization (EUP)
        concat = jnp.concatenate([ctx[h] for h in range(H)], axis=-1)        # (Tq, D)
        return jnp.dot(concat.astype(cdt), wo, preferred_element_type=f32) + bo

    # Scalar LayerNorm parameters from SMEM.
    a0, be0 = ln_ref[0], ln_ref[1]
    a1, be1 = ln_ref[2], ln_ref[3]
    a2, be2 = ln_ref[4], ln_ref[5]

    # ---------------- 1) self-attention sublayer ----------------
    xn_rows = layer_norm(x_rows, a0, be0)                  # queries (this tile); row-wise LN
    xn_full = layer_norm(x_full, a0, be0)                  # keys/values (full sequence)
    qp = jnp.dot(xn_rows.astype(cdt), w_ref[:, 0:D],
                 preferred_element_type=f32) + b_ref[:, 0:D]
    kv = jnp.dot(xn_full.astype(cdt), w_ref[:, D:3 * D],   # fused K+V projection (N = 2D)
                 preferred_element_type=f32) + b_ref[:, D:3 * D]
    sa = attention(qp, kv[:, 0:D], kv[:, D:2 * D], tgt_bias,
                   w_ref[:, 3 * D:4 * D], b_ref[:, 3 * D:4 * D])
    x1 = x_rows + sa                                       # dropout == identity

    # ---------------- 2) cross-attention sublayer ----------------
    xn1 = layer_norm(x1, a1, be1)
    qc = jnp.dot(xn1.astype(cdt), w_ref[:, 4 * D:5 * D],
                 preferred_element_type=f32) + b_ref[:, 4 * D:5 * D]
    kvc = jnp.dot(enc.astype(cdt), w_ref[:, 5 * D:7 * D],  # fused K+V projection (raw encoder out)
                  preferred_element_type=f32) + b_ref[:, 5 * D:7 * D]
    ca = attention(qc, kvc[:, 0:D], kvc[:, D:2 * D], src_bias,
                   w_ref[:, 7 * D:8 * D], b_ref[:, 7 * D:8 * D])
    x2 = x1 + ca

    # ---------------- 3) feed-forward sublayer ----------------
    xn2 = layer_norm(x2, a2, be2)
    hmid = jnp.dot(xn2.astype(cdt), w_ref[:, 8 * D:8 * D + F],
                   preferred_element_type=f32) + b_ref[:, 8 * D:8 * D + F]
    hmid = jnp.maximum(hmid, 0.0)                          # ReLU
    ff = jnp.dot(hmid.astype(cdt), w2_ref[...],
                 preferred_element_type=f32) + b_ref[:, 8 * D + F:9 * D + F]

    out_ref[0] = (x2 + ff).astype(out_ref.dtype)


def decoder_block_forward(x, encoder_output, src_mask, tgt_mask, params, head_num,
                          *, q_block_size=None, compute_dtype=jnp.bfloat16, eps=1e-6):
    """Pallas implementation of DecoderBlock.forward (eval mode)."""
    B, S, D = x.shape
    S_src = encoder_output.shape[1]
    F = params["ff_b1"].shape[0]
    assert D % head_num == 0, "model_dim is not divisible by head_num!"
    hd = D // head_num

    if q_block_size is None or S % q_block_size != 0:
        q_block_size = S
    TQ = q_block_size
    assert TQ == S or TQ % 8 == 0, "query tile must be a multiple of 8 (sublane tiling)"

    def t(name):
        return jnp.asarray(params[name]).T

    # One fused weight slab (all (D, *) matrices) + the (F, D) second FF matrix; cast for the MXU.
    w_fused = jnp.concatenate(
        [t("self_wq"), t("self_wk"), t("self_wv"), t("self_wo"),
         t("cross_wq"), t("cross_wk"), t("cross_wv"), t("cross_wo"),
         t("ff_w1")], axis=1).astype(compute_dtype)                    # (D, 8D + F)
    w2_t = t("ff_w2").astype(compute_dtype)                            # (F, D)

    b_all = jnp.concatenate(
        [params["self_bq"], params["self_bk"], params["self_bv"], params["self_bo"],
         params["cross_bq"], params["cross_bk"], params["cross_bv"], params["cross_bo"],
         params["ff_b1"], params["ff_b2"]]).astype(jnp.float32).reshape(1, -1)   # (1, 9D + F)

    ln_vec = jnp.concatenate(
        [jnp.ravel(jnp.asarray(params[k]).astype(jnp.float32)) for k in
         ("ln0_alpha", "ln0_beta", "ln1_alpha", "ln1_beta", "ln2_alpha", "ln2_beta")])  # (6,)

    kernel = functools.partial(
        _decoder_block_kernel, head_num=head_num, head_dim=hd, model_dim=D,
        ff_dim=F, q_block=TQ, eps=eps, compute_dtype=compute_dtype)

    return pl.pallas_call(
        kernel,
        out_shape=jax.ShapeDtypeStruct((B, S, D), x.dtype),
        grid_spec=pltpu.PrefetchScalarGridSpec(
            num_scalar_prefetch=0,
            grid=(B, S // TQ),
            in_specs=[
                pl.BlockSpec((1, S, D), lambda b, i: (b, 0, 0)),            # x (full sequence)
                pl.BlockSpec((1, S_src, D), lambda b, i: (b, 0, 0)),        # encoder output
                pl.BlockSpec((1, 1, TQ, S), lambda b, i: (b, 0, i, 0)),     # tgt mask (q-tiled)
                pl.BlockSpec((1, 1, TQ, S_src), lambda b, i: (b, 0, i, 0)), # src mask (q-tiled)
                pl.BlockSpec((D, 8 * D + F), lambda b, i: (0, 0)),          # fused weights
                pl.BlockSpec((F, D), lambda b, i: (0, 0)),                  # FF second matrix
                pl.BlockSpec((1, 9 * D + F), lambda b, i: (0, 0)),          # fused biases
                pl.BlockSpec(memory_space=pltpu.MemorySpace.SMEM),          # LN scalars
            ],
            out_specs=pl.BlockSpec((1, TQ, D), lambda b, i: (b, i, 0)),
        ),
        compiler_params=pltpu.CompilerParams(
            dimension_semantics=("parallel", "parallel")),
    )(x, encoder_output, tgt_mask, src_mask, w_fused, w2_t, b_all, ln_vec)


def _reference_decoder_block(x, enc, src_mask, tgt_mask, params, head_num, eps=1e-6):
    """Pure-JAX f32 reference mirroring the PyTorch DecoderBlock (dropout = identity)."""
    B, S, D = x.shape
    hd = D // head_num

    def layer_norm(t, alpha, beta):
        mean = jnp.mean(t, axis=-1, keepdims=True)
        std = jnp.std(t, axis=-1, keepdims=True, ddof=1)   # torch.std default: unbiased
        return alpha * (t - mean) / (std + eps) + beta

    def linear(t, w, b):
        return jnp.einsum("bsd,od->bso", t, w) + b

    def mha(q, k, v, mask, pfx):
        Sq, Sk = q.shape[1], k.shape[1]
        qp = linear(q, params[f"{pfx}_wq"], params[f"{pfx}_bq"])
        kp = linear(k, params[f"{pfx}_wk"], params[f"{pfx}_bk"])
        vp = linear(v, params[f"{pfx}_wv"], params[f"{pfx}_bv"])

        def split(t):
            return t.reshape(t.shape[0], t.shape[1], head_num, hd).transpose(0, 2, 1, 3)

        qh, kh, vh = split(qp), split(kp), split(vp)
        scores = jnp.einsum("bhqd,bhkd->bhqk", qh, kh) / math.sqrt(hd)
        scores = jnp.where(mask == 0, -1e9, scores)
        attn = jax.nn.softmax(scores, axis=-1)
        out = jnp.einsum("bhqk,bhkd->bhqd", attn, vh)
        out = out.transpose(0, 2, 1, 3).reshape(B, Sq, D)
        return linear(out, params[f"{pfx}_wo"], params[f"{pfx}_bo"])

    xn0 = layer_norm(x, params["ln0_alpha"], params["ln0_beta"])
    x1 = x + mha(xn0, xn0, xn0, tgt_mask, "self")
    xn1 = layer_norm(x1, params["ln1_alpha"], params["ln1_beta"])
    x2 = x1 + mha(xn1, enc, enc, src_mask, "cross")
    xn2 = layer_norm(x2, params["ln2_alpha"], params["ln2_beta"])
    h = jax.nn.relu(jnp.einsum("bsd,fd->bsf", xn2, params["ff_w1"]) + params["ff_b1"])
    ff = jnp.einsum("bsf,df->bsd", h, params["ff_w2"]) + params["ff_b2"]
    return x2 + ff


if __name__ == "__main__":
    B, S, S_src, D, H, F = 2, 16, 32, 128, 4, 256   # batch, tgt seq, src seq, model_dim, heads, ff_dim

    key = jax.random.PRNGKey(0)
    keys = jax.random.split(key, 28)
    ki = iter(range(28))

    def rnd(shape, scale):
        return jax.random.normal(keys[next(ki)], shape, jnp.float32) * scale

    params = {}
    for pfx in ("self", "cross"):
        for nm in ("wq", "wk", "wv", "wo"):
            params[f"{pfx}_{nm}"] = rnd((D, D), 0.05)
        for nm in ("bq", "bk", "bv", "bo"):
            params[f"{pfx}_{nm}"] = rnd((D,), 0.1)
    params["ff_w1"] = rnd((F, D), 0.05)
    params["ff_b1"] = rnd((F,), 0.1)
    params["ff_w2"] = rnd((D, F), 0.05)
    params["ff_b2"] = rnd((D,), 0.1)
    for i in range(3):
        params[f"ln{i}_alpha"] = 1.0 + rnd((1,), 0.1)
        params[f"ln{i}_beta"] = rnd((1,), 0.1)

    x = jax.random.normal(keys[next(ki)], (B, S, D), jnp.float32)
    enc = jax.random.normal(keys[next(ki)], (B, S_src, D), jnp.float32)

    # Causal target mask and a padding source mask (0 => masked), broadcast over heads.
    tgt_mask = jnp.broadcast_to(
        jnp.tril(jnp.ones((S, S), jnp.int32))[None, None], (B, 1, S, S))
    src_valid = jnp.array([S_src, S_src - 8], jnp.int32)   # second batch has 8 padded positions
    src_mask = (jnp.arange(S_src, dtype=jnp.int32)[None, None, None, :]
                < src_valid[:, None, None, None]).astype(jnp.int32)
    src_mask = jnp.broadcast_to(src_mask, (B, 1, S, S_src))

    out = decoder_block_forward(x, enc, src_mask, tgt_mask, params, H,
                                q_block_size=8)            # grid = (2 batches, 2 query tiles)
    out = jax.block_until_ready(out)

    ref = _reference_decoder_block(x, enc, src_mask, tgt_mask, params, H)
    # bf16 MXU operands + approx EUP reciprocals in the kernel vs exact-f32 reference.
    np.testing.assert_allclose(np.asarray(out), np.asarray(ref), rtol=5e-2, atol=5e-2)

    print("KERNEL_OK")
</pallas_src>

<mosaic_0001>
module attributes {stable_mosaic.version = 11 : i64} {
  func.func @_decoder_block_kernel(%arg0: i32, %arg1: i32, %arg2: memref<1x16x128xf32, #tpu.memory_space<vmem>>, %arg3: memref<1x32x128xf32, #tpu.memory_space<vmem>>, %arg4: memref<1x1x8x16xi32, #tpu.memory_space<vmem>>, %arg5: memref<1x1x8x32xi32, #tpu.memory_space<vmem>>, %arg6: memref<128x1280xbf16, #tpu.memory_space<vmem>>, %arg7: memref<256x128xbf16, #tpu.memory_space<vmem>>, %arg8: memref<1x1408xf32, #tpu.memory_space<vmem>>, %arg9: memref<6xf32, #tpu.memory_space<smem>>, %arg10: memref<1x8x128xf32, #tpu.memory_space<vmem>>) attributes {dimension_semantics = [#tpu.dimension_semantics<parallel>, #tpu.dimension_semantics<parallel>], iteration_bounds = array<i64: 2, 2>, scalar_prefetch = 0 : i64, scratch_operands = 0 : i64, tpu.core_type = #tpu.core_type<tc>, window_params = [{transform_indices = @transform_0, window_bounds = array<i64: 1, 16, 128>}, {transform_indices = @transform_1, window_bounds = array<i64: 1, 32, 128>}, {transform_indices = @transform_2, window_bounds = array<i64: 1, 1, 8, 16>}, {transform_indices = @transform_3, window_bounds = array<i64: 1, 1, 8, 32>}, {pipeline_mode = #tpu.pipeline_mode<synchronous>, transform_indices = @transform_4, window_bounds = array<i64: 128, 1280>}, {pipeline_mode = #tpu.pipeline_mode<synchronous>, transform_indices = @transform_5, window_bounds = array<i64: 256, 128>}, {pipeline_mode = #tpu.pipeline_mode<synchronous>, transform_indices = @transform_6, window_bounds = array<i64: 1, 1408>}, {transform_indices = @transform_7, window_bounds = array<i64: 6>}, {transform_indices = @transform_8, window_bounds = array<i64: 1, 8, 128>}]} {
    %c8_i32 = arith.constant 8 : i32
    %0 = arith.muli %arg1, %c8_i32 : i32
    %1 = tpu.assume_multiple %0, 8 : i32
    %c0 = arith.constant 0 : index
    %c0_0 = arith.constant 0 : index
    %c0_1 = arith.constant 0 : index
    %2 = vector.load %arg2[%c0, %c0_0, %c0_1] : memref<1x16x128xf32, #tpu.memory_space<vmem>>, vector<1x16x128xf32>
    %3 = vector.shape_cast %2 : vector<1x16x128xf32> to vector<16x128xf32>
    %c0_2 = arith.constant 0 : index
    %4 = arith.index_cast %1 : i32 to index
    %c0_3 = arith.constant 0 : index
    %5 = vector.load %arg2[%c0_2, %4, %c0_3] : memref<1x16x128xf32, #tpu.memory_space<vmem>>, vector<1x8x128xf32>
    %6 = vector.shape_cast %5 : vector<1x8x128xf32> to vector<8x128xf32>
    %c0_4 = arith.constant 0 : index
    %c0_5 = arith.constant 0 : index
    %c0_6 = arith.constant 0 : index
    %7 = vector.load %arg3[%c0_4, %c0_5, %c0_6] : memref<1x32x128xf32, #tpu.memory_space<vmem>>, vector<1x32x128xf32>
    %8 = vector.shape_cast %7 : vector<1x32x128xf32> to vector<32x128xf32>
    %c0_7 = arith.constant 0 : index
    %c0_8 = arith.constant 0 : index
    %c0_9 = arith.constant 0 : index
    %c0_10 = arith.constant 0 : index
    %9 = vector.load %arg4[%c0_7, %c0_8, %c0_9, %c0_10] : memref<1x1x8x16xi32, #tpu.memory_space<vmem>>, vector<1x1x8x16xi32>
    %10 = vector.shape_cast %9 : vector<1x1x8x16xi32> to vector<8x16xi32>
    %c0_i32 = arith.constant 0 : i32
    %11 = vector.broadcast %c0_i32 : i32 to vector<8x16xi32>
    %12 = arith.cmpi eq, %10, %11 : vector<8x16xi32>
    %cst = arith.constant -1.000000e+09 : f32
    %cst_11 = arith.constant 0.000000e+00 : f32
    %13 = vector.broadcast %cst : f32 to vector<8x16xf32>
    %14 = vector.broadcast %cst_11 : f32 to vector<8x16xf32>
    %15 = arith.select %12, %13, %14 : vector<8x16xi1>, vector<8x16xf32>
    %c0_12 = arith.constant 0 : index
    %c0_13 = arith.constant 0 : index
    %c0_14 = arith.constant 0 : index
    %c0_15 = arith.constant 0 : index
    %16 = vector.load %arg5[%c0_12, %c0_13, %c0_14, %c0_15] : memref<1x1x8x32xi32, #tpu.memory_space<vmem>>, vector<1x1x8x32xi32>
    %17 = vector.shape_cast %16 : vector<1x1x8x32xi32> to vector<8x32xi32>
    %c0_i32_16 = arith.constant 0 : i32
    %18 = vector.broadcast %c0_i32_16 : i32 to vector<8x32xi32>
    %19 = arith.cmpi eq, %17, %18 : vector<8x32xi32>
    %cst_17 = arith.constant -1.000000e+09 : f32
    %cst_18 = arith.constant 0.000000e+00 : f32
    %20 = vector.broadcast %cst_17 : f32 to vector<8x32xf32>
    %21 = vector.broadcast %cst_18 : f32 to vector<8x32xf32>
    %22 = arith.select %19, %20, %21 : vector<8x32xi1>, vector<8x32xf32>
    %c0_19 = arith.constant 0 : index
    %23 = memref.load %arg9[%c0_19] : memref<6xf32, #tpu.memory_space<smem>>
    %c1 = arith.constant 1 : index
    %24 = memref.load %arg9[%c1] : memref<6xf32, #tpu.memory_space<smem>>
    %c2 = arith.constant 2 : index
    %25 = memref.load %arg9[%c2] : memref<6xf32, #tpu.memory_space<smem>>
    %c3 = arith.constant 3 : index
    %26 = memref.load %arg9[%c3] : memref<6xf32, #tpu.memory_space<smem>>
    %c4 = arith.constant 4 : index
    %27 = memref.load %arg9[%c4] : memref<6xf32, #tpu.memory_space<smem>>
    %c5 = arith.constant 5 : index
    %28 = memref.load %arg9[%c5] : memref<6xf32, #tpu.memory_space<smem>>
    %cst_20 = arith.constant dense<0.000000e+00> : vector<8xf32>
    %29 = vector.multi_reduction <add>, %6, %cst_20 [1] : vector<8x128xf32> to vector<8xf32>
    %30 = vector.shape_cast %29 : vector<8xf32> to vector<8x1xf32>
    %cst_21 = arith.constant 1.280000e+02 : f32
    %31 = vector.broadcast %cst_21 : f32 to vector<8x1xf32>
    %32 = arith.divf %30, %31 : vector<8x1xf32>
    %33 = vector.broadcast %32 : vector<8x1xf32> to vector<8x128xf32>
    %34 = arith.subf %6, %33 : vector<8x128xf32>
    %35 = arith.mulf %34, %34 : vector<8x128xf32>
    %cst_22 = arith.constant dense<0.000000e+00> : vector<8xf32>
    %36 = vector.multi_reduction <add>, %35, %cst_22 [1] : vector<8x128xf32> to vector<8xf32>
    %37 = vector.shape_cast %36 : vector<8xf32> to vector<8x1xf32>
    %cst_23 = arith.constant 1.270000e+02 : f32
    %38 = vector.broadcast %cst_23 : f32 to vector<8x1xf32>
    %39 = arith.divf %37, %38 : vector<8x1xf32>
    %40 = math.sqrt %39 : vector<8x1xf32>
    %cst_24 = arith.constant 9.99999997E-7 : f32
    %41 = vector.broadcast %cst_24 : f32 to vector<8x1xf32>
    %42 = arith.addf %40, %41 : vector<8x1xf32>
    %43 = tpu.reciprocal %42 {approx = true} : vector<8x1xf32> -> vector<8x1xf32>
    %44 = vector.broadcast %32 : vector<8x1xf32> to vector<8x128xf32>
    %45 = arith.subf %6, %44 : vector<8x128xf32>
    %46 = vector.broadcast %23 : f32 to vector<8x128xf32>
    %47 = arith.mulf %46, %45 : vector<8x128xf32>
    %48 = vector.broadcast %43 : vector<8x1xf32> to vector<8x128xf32>
    %49 = arith.mulf %47, %48 : vector<8x128xf32>
    %50 = vector.broadcast %24 : f32 to vector<8x128xf32>
    %51 = arith.addf %49, %50 : vector<8x128xf32>
    %cst_25 = arith.constant dense<0.000000e+00> : vector<16xf32>
    %52 = vector.multi_reduction <add>, %3, %cst_25 [1] : vector<16x128xf32> to vector<16xf32>
    %53 = vector.shape_cast %52 : vector<16xf32> to vector<16x1xf32>
    %cst_26 = arith.constant 1.280000e+02 : f32
    %54 = vector.broadcast %cst_26 : f32 to vector<16x1xf32>
    %55 = arith.divf %53, %54 : vector<16x1xf32>
    %56 = vector.broadcast %55 : vector<16x1xf32> to vector<16x128xf32>
    %57 = arith.subf %3, %56 : vector<16x128xf32>
    %58 = arith.mulf %57, %57 : vector<16x128xf32>
    %cst_27 = arith.constant dense<0.000000e+00> : vector<16xf32>
    %59 = vector.multi_reduction <add>, %58, %cst_27 [1] : vector<16x128xf32> to vector<16xf32>
    %60 = vector.shape_cast %59 : vector<16xf32> to vector<16x1xf32>
    %cst_28 = arith.constant 1.270000e+02 : f32
    %61 = vector.broadcast %cst_28 : f32 to vector<16x1xf32>
    %62 = arith.divf %60, %61 : vector<16x1xf32>
    %63 = math.sqrt %62 : vector<16x1xf32>
    %cst_29 = arith.constant 9.99999997E-7 : f32
    %64 = vector.broadcast %cst_29 : f32 to vector<16x1xf32>
    %65 = arith.addf %63, %64 : vector<16x1xf32>
    %66 = tpu.reciprocal %65 {approx = true} : vector<16x1xf32> -> vector<16x1xf32>
    %67 = vector.broadcast %55 : vector<16x1xf32> to vector<16x128xf32>
    %68 = arith.subf %3, %67 : vector<16x128xf32>
    %69 = vector.broadcast %23 : f32 to vector<16x128xf32>
    %70 = arith.mulf %69, %68 : vector<16x128xf32>
    %71 = vector.broadcast %66 : vector<16x1xf32> to vector<16x128xf32>
    %72 = arith.mulf %70, %71 : vector<16x128xf32>
    %73 = vector.broadcast %24 : f32 to vector<16x128xf32>
    %74 = arith.addf %72, %73 : vector<16x128xf32>
    %75 = arith.truncf %51 : vector<8x128xf32> to vector<8x128xbf16>
    %c0_30 = arith.constant 0 : index
    %c0_31 = arith.constant 0 : index
    %76 = vector.load %arg6[%c0_30, %c0_31] : memref<128x1280xbf16, #tpu.memory_space<vmem>>, vector<128x128xbf16>
    %cst_32 = arith.constant dense<0.000000e+00> : vector<8x128xf32>
    %77 = tpu.matmul %75, %76, %cst_32 {dimension_numbers = #tpu.dot_dimension_numbers<[1], [0], [0], [1], [0, 0, 1, 1], [], []>} : vector<8x128xbf16>, vector<128x128xbf16>, vector<8x128xf32> -> vector<8x128xf32>
    %c0_33 = arith.constant 0 : index
    %c0_34 = arith.constant 0 : index
    %78 = vector.load %arg8[%c0_33, %c0_34] : memref<1x1408xf32, #tpu.memory_space<vmem>>, vector<1x128xf32>
    %79 = vector.broadcast %78 : vector<1x128xf32> to vector<8x128xf32>
    %80 = arith.addf %77, %79 : vector<8x128xf32>
    %81 = arith.truncf %74 : vector<16x128xf32> to vector<16x128xbf16>
    %c0_35 = arith.constant 0 : index
    %c128 = arith.constant 128 : index
    %82 = vector.load %arg6[%c0_35, %c128] : memref<128x1280xbf16, #tpu.memory_space<vmem>>, vector<128x256xbf16>
    %cst_36 = arith.constant dense<0.000000e+00> : vector<16x256xf32>
    %83 = tpu.matmul %81, %82, %cst_36 {dimension_numbers = #tpu.dot_dimension_numbers<[1], [0], [0], [1], [0, 0, 1, 1], [], []>} : vector<16x128xbf16>, vector<128x256xbf16>, vector<16x256xf32> -> vector<16x256xf32>
    %c0_37 = arith.constant 0 : index
    %c128_38 = arith.constant 128 : index
    %84 = vector.load %arg8[%c0_37, %c128_38] : memref<1x1408xf32, #tpu.memory_space<vmem>>, vector<1x256xf32>
    %85 = vector.broadcast %84 : vector<1x256xf32> to vector<16x256xf32>
    %86 = arith.addf %83, %85 : vector<16x256xf32>
    %87 = vector.extract_strided_slice %86 {offsets = [0, 0], sizes = [16, 128], strides = [1, 1]} : vector<16x256xf32> to vector<16x128xf32>
    %88 = vector.extract_strided_slice %86 {offsets = [0, 128], sizes = [16, 128], strides = [1, 1]} : vector<16x256xf32> to vector<16x128xf32>
    %c0_39 = arith.constant 0 : index
    %c384 = arith.constant 384 : index
    %89 = vector.load %arg6[%c0_39, %c384] : memref<128x1280xbf16, #tpu.memory_space<vmem>>, vector<128x128xbf16>
    %c0_40 = arith.constant 0 : index
    %c384_41 = arith.constant 384 : index
    %90 = vector.load %arg8[%c0_40, %c384_41] : memref<1x1408xf32, #tpu.memory_space<vmem>>, vector<1x128xf32>
    %cst_42 = arith.constant 0.176776692 : f32
    %91 = vector.broadcast %cst_42 : f32 to vector<8x128xf32>
    %92 = arith.mulf %80, %91 : vector<8x128xf32>
    %93 = vector.extract_strided_slice %92 {offsets = [0, 0], sizes = [8, 32], strides = [1, 1]} : vector<8x128xf32> to vector<8x32xf32>
    %94 = vector.extract_strided_slice %92 {offsets = [0, 32], sizes = [8, 32], strides = [1, 1]} : vector<8x128xf32> to vector<8x32xf32>
    %95 = vector.extract_strided_slice %92 {offsets = [0, 64], sizes = [8, 32], strides = [1, 1]} : vector<8x128xf32> to vector<8x32xf32>
    %96 = vector.extract_strided_slice %92 {offsets = [0, 96], sizes = [8, 32], strides = [1, 1]} : vector<8x128xf32> to vector<8x32xf32>
    %97 = vector.shape_cast %93 : vector<8x32xf32> to vector<1x8x32xf32>
    %98 = vector.shape_cast %94 : vector<8x32xf32> to vector<1x8x32xf32>
    %99 = vector.shape_cast %95 : vector<8x32xf32> to vector<1x8x32xf32>
    %100 = vector.shape_cast %96 : vector<8x32xf32> to vector<1x8x32xf32>
    %101 = tpu.concatenate %97, %98, %99, %100 in 0 : vector<1x8x32xf32>, vector<1x8x32xf32>, vector<1x8x32xf32>, vector<1x8x32xf32> -> vector<4x8x32xf32>
    %102 = arith.truncf %101 : vector<4x8x32xf32> to vector<4x8x32xbf16>
    %103 = vector.extract_strided_slice %87 {offsets = [0, 0], sizes = [16, 32], strides = [1, 1]} : vector<16x128xf32> to vector<16x32xf32>
    %104 = vector.extract_strided_slice %87 {offsets = [0, 32], sizes = [16, 32], strides = [1, 1]} : vector<16x128xf32> to vector<16x32xf32>
    %105 = vector.extract_strided_slice %87 {offsets = [0, 64], sizes = [16, 32], strides = [1, 1]} : vector<16x128xf32> to vector<16x32xf32>
    %106 = vector.extract_strided_slice %87 {offsets = [0, 96], sizes = [16, 32], strides = [1, 1]} : vector<16x128xf32> to vector<16x32xf32>
    %107 = vector.shape_cast %103 : vector<16x32xf32> to vector<1x16x32xf32>
    %108 = vector.shape_cast %104 : vector<16x32xf32> to vector<1x16x32xf32>
    %109 = vector.shape_cast %105 : vector<16x32xf32> to vector<1x16x32xf32>
    %110 = vector.shape_cast %106 : vector<16x32xf32> to vector<1x16x32xf32>
    %111 = tpu.concatenate %107, %108, %109, %110 in 0 : vector<1x16x32xf32>, vector<1x16x32xf32>, vector<1x16x32xf32>, vector<1x16x32xf32> -> vector<4x16x32xf32>
    %112 = arith.truncf %111 : vector<4x16x32xf32> to vector<4x16x32xbf16>
    %113 = vector.extract_strided_slice %88 {offsets = [0, 0], sizes = [16, 32], strides = [1, 1]} : vector<16x128xf32> to vector<16x32xf32>
    %114 = vector.extract_strided_slice %88 {offsets = [0, 32], sizes = [16, 32], strides = [1, 1]} : vector<16x128xf32> to vector<16x32xf32>
    %115 = vector.extract_strided_slice %88 {offsets = [0, 64], sizes = [16, 32], strides = [1, 1]} : vector<16x128xf32> to vector<16x32xf32>
    %116 = vector.extract_strided_slice %88 {offsets = [0, 96], sizes = [16, 32], strides = [1, 1]} : vector<16x128xf32> to vector<16x32xf32>
    %117 = vector.shape_cast %113 : vector<16x32xf32> to vector<1x16x32xf32>
    %118 = vector.shape_cast %114 : vector<16x32xf32> to vector<1x16x32xf32>
    %119 = vector.shape_cast %115 : vector<16x32xf32> to vector<1x16x32xf32>
    %120 = vector.shape_cast %116 : vector<16x32xf32> to vector<1x16x32xf32>
    %121 = tpu.concatenate %117, %118, %119, %120 in 0 : vector<1x16x32xf32>, vector<1x16x32xf32>, vector<1x16x32xf32>, vector<1x16x32xf32> -> vector<4x16x32xf32>
    %122 = arith.truncf %121 : vector<4x16x32xf32> to vector<4x16x32xbf16>
    "tpu.trace_start"() <{level = 10 : i32, message = "hqd,hkd->hqk"}> : () -> ()
    %cst_43 = arith.constant dense<0.000000e+00> : vector<4x8x16xf32>
    %123 = tpu.matmul %102, %112, %cst_43 {dimension_numbers = #tpu.dot_dimension_numbers<[2], [2], [1], [1], [0, 0, 0, 1, 1, 1], [0], [0]>} : vector<4x8x32xbf16>, vector<4x16x32xbf16>, vector<4x8x16xf32> -> vector<4x8x16xf32>
    "tpu.trace_stop"() : () -> ()
    %124 = vector.shape_cast %15 : vector<8x16xf32> to vector<1x8x16xf32>
    %125 = vector.broadcast %124 : vector<1x8x16xf32> to vector<4x8x16xf32>
    %126 = arith.addf %123, %125 : vector<4x8x16xf32>
    %cst_44 = arith.constant dense<0xFF800000> : vector<4x8xf32>
    %127 = vector.multi_reduction <maximumf>, %126, %cst_44 [2] : vector<4x8x16xf32> to vector<4x8xf32>
    %128 = vector.shape_cast %127 : vector<4x8xf32> to vector<4x8x1xf32>
    %129 = vector.broadcast %128 : vector<4x8x1xf32> to vector<4x8x16xf32>
    %130 = arith.subf %126, %129 : vector<4x8x16xf32>
    %131 = math.exp %130 : vector<4x8x16xf32>
    %cst_45 = arith.constant dense<0.000000e+00> : vector<4x8xf32>
    %132 = vector.multi_reduction <add>, %131, %cst_45 [2] : vector<4x8x16xf32> to vector<4x8xf32>
    %133 = vector.shape_cast %132 : vector<4x8xf32> to vector<4x8x1xf32>
    %134 = arith.truncf %131 : vector<4x8x16xf32> to vector<4x8x16xbf16>
    "tpu.trace_start"() <{level = 10 : i32, message = "hqk,hkd->hqd"}> : () -> ()
    %cst_46 = arith.constant dense<0.000000e+00> : vector<4x8x32xf32>
    %135 = tpu.matmul %134, %122, %cst_46 {dimension_numbers = #tpu.dot_dimension_numbers<[2], [1], [1], [2], [0, 0, 0, 1, 1, 2], [0], [0]>} : vector<4x8x16xbf16>, vector<4x16x32xbf16>, vector<4x8x32xf32> -> vector<4x8x32xf32>
    "tpu.trace_stop"() : () -> ()
    %136 = tpu.reciprocal %133 {approx = true} : vector<4x8x1xf32> -> vector<4x8x1xf32>
    %137 = vector.broadcast %136 : vector<4x8x1xf32> to vector<4x8x32xf32>
    %138 = arith.mulf %135, %137 : vector<4x8x32xf32>
    %139 = vector.extract_strided_slice %138 {offsets = [0, 0, 0], sizes = [1, 8, 32], strides = [1, 1, 1]} : vector<4x8x32xf32> to vector<1x8x32xf32>
    %140 = vector.shape_cast %139 : vector<1x8x32xf32> to vector<8x32xf32>
    %141 = vector.extract_strided_slice %138 {offsets = [1, 0, 0], sizes = [1, 8, 32], strides = [1, 1, 1]} : vector<4x8x32xf32> to vector<1x8x32xf32>
    %142 = vector.shape_cast %141 : vector<1x8x32xf32> to vector<8x32xf32>
    %143 = vector.extract_strided_slice %138 {offsets = [2, 0, 0], sizes = [1, 8, 32], strides = [1, 1, 1]} : vector<4x8x32xf32> to vector<1x8x32xf32>
    %144 = vector.shape_cast %143 : vector<1x8x32xf32> to vector<8x32xf32>
    %145 = vector.extract_strided_slice %138 {offsets = [3, 0, 0], sizes = [1, 8, 32], strides = [1, 1, 1]} : vector<4x8x32xf32> to vector<1x8x32xf32>
    %146 = vector.shape_cast %145 : vector<1x8x32xf32> to vector<8x32xf32>
    %147 = tpu.concatenate %140, %142, %144, %146 in 1 : vector<8x32xf32>, vector<8x32xf32>, vector<8x32xf32>, vector<8x32xf32> -> vector<8x128xf32>
    %148 = arith.truncf %147 : vector<8x128xf32> to vector<8x128xbf16>
    %cst_47 = arith.constant dense<0.000000e+00> : vector<8x128xf32>
    %149 = tpu.matmul %148, %89, %cst_47 {dimension_numbers = #tpu.dot_dimension_numbers<[1], [0], [0], [1], [0, 0, 1, 1], [], []>} : vector<8x128xbf16>, vector<128x128xbf16>, vector<8x128xf32> -> vector<8x128xf32>
    %150 = vector.broadcast %90 : vector<1x128xf32> to vector<8x128xf32>
    %151 = arith.addf %149, %150 : vector<8x128xf32>
    %152 = arith.addf %6, %151 : vector<8x128xf32>
    %cst_48 = arith.constant dense<0.000000e+00> : vector<8xf32>
    %153 = vector.multi_reduction <add>, %152, %cst_48 [1] : vector<8x128xf32> to vector<8xf32>
    %154 = vector.shape_cast %153 : vector<8xf32> to vector<8x1xf32>
    %cst_49 = arith.constant 1.280000e+02 : f32
    %155 = vector.broadcast %cst_49 : f32 to vector<8x1xf32>
    %156 = arith.divf %154, %155 : vector<8x1xf32>
    %157 = vector.broadcast %156 : vector<8x1xf32> to vector<8x128xf32>
    %158 = arith.subf %152, %157 : vector<8x128xf32>
    %159 = arith.mulf %158, %158 : vector<8x128xf32>
    %cst_50 = arith.constant dense<0.000000e+00> : vector<8xf32>
    %160 = vector.multi_reduction <add>, %159, %cst_50 [1] : vector<8x128xf32> to vector<8xf32>
    %161 = vector.shape_cast %160 : vector<8xf32> to vector<8x1xf32>
    %cst_51 = arith.constant 1.270000e+02 : f32
    %162 = vector.broadcast %cst_51 : f32 to vector<8x1xf32>
    %163 = arith.divf %161, %162 : vector<8x1xf32>
    %164 = math.sqrt %163 : vector<8x1xf32>
    %cst_52 = arith.constant 9.99999997E-7 : f32
    %165 = vector.broadcast %cst_52 : f32 to vector<8x1xf32>
    %166 = arith.addf %164, %165 : vector<8x1xf32>
    %167 = tpu.reciprocal %166 {approx = true} : vector<8x1xf32> -> vector<8x1xf32>
    %168 = vector.broadcast %156 : vector<8x1xf32> to vector<8x128xf32>
    %169 = arith.subf %152, %168 : vector<8x128xf32>
    %170 = vector.broadcast %25 : f32 to vector<8x128xf32>
    %171 = arith.mulf %170, %169 : vector<8x128xf32>
    %172 = vector.broadcast %167 : vector<8x1xf32> to vector<8x128xf32>
    %173 = arith.mulf %171, %172 : vector<8x128xf32>
    %174 = vector.broadcast %26 : f32 to vector<8x128xf32>
    %175 = arith.addf %173, %174 : vector<8x128xf32>
    %176 = arith.truncf %175 : vector<8x128xf32> to vector<8x128xbf16>
    %c0_53 = arith.constant 0 : index
    %c512 = arith.constant 512 : index
    %177 = vector.load %arg6[%c0_53, %c512] : memref<128x1280xbf16, #tpu.memory_space<vmem>>, vector<128x128xbf16>
    %cst_54 = arith.constant dense<0.000000e+00> : vector<8x128xf32>
    %178 = tpu.matmul %176, %177, %cst_54 {dimension_numbers = #tpu.dot_dimension_numbers<[1], [0], [0], [1], [0, 0, 1, 1], [], []>} : vector<8x128xbf16>, vector<128x128xbf16>, vector<8x128xf32> -> vector<8x128xf32>
    %c0_55 = arith.constant 0 : index
    %c512_56 = arith.constant 512 : index
    %179 = vector.load %arg8[%c0_55, %c512_56] : memref<1x1408xf32, #tpu.memory_space<vmem>>, vector<1x128xf32>
    %180 = vector.broadcast %179 : vector<1x128xf32> to vector<8x128xf32>
    %181 = arith.addf %178, %180 : vector<8x128xf32>
    %182 = arith.truncf %8 : vector<32x128xf32> to vector<32x128xbf16>
    %c0_57 = arith.constant 0 : index
    %c640 = arith.constant 640 : index
    %183 = vector.load %arg6[%c0_57, %c640] : memref<128x1280xbf16, #tpu.memory_space<vmem>>, vector<128x256xbf16>
    %cst_58 = arith.constant dense<0.000000e+00> : vector<32x256xf32>
    %184 = tpu.matmul %182, %183, %cst_58 {dimension_numbers = #tpu.dot_dimension_numbers<[1], [0], [0], [1], [0, 0, 1, 1], [], []>} : vector<32x128xbf16>, vector<128x256xbf16>, vector<32x256xf32> -> vector<32x256xf32>
    %c0_59 = arith.constant 0 : index
    %c640_60 = arith.constant 640 : index
    %185 = vector.load %arg8[%c0_59, %c640_60] : memref<1x1408xf32, #tpu.memory_space<vmem>>, vector<1x256xf32>
    %186 = vector.broadcast %185 : vector<1x256xf32> to vector<32x256xf32>
    %187 = arith.addf %184, %186 : vector<32x256xf32>
    %188 = vector.extract_strided_slice %187 {offsets = [0, 0], sizes = [32, 128], strides = [1, 1]} : vector<32x256xf32> to vector<32x128xf32>
    %189 = vector.extract_strided_slice %187 {offsets = [0, 128], sizes = [32, 128], strides = [1, 1]} : vector<32x256xf32> to vector<32x128xf32>
    %c0_61 = arith.constant 0 : index
    %c896 = arith.constant 896 : index
    %190 = vector.load %arg6[%c0_61, %c896] : memref<128x1280xbf16, #tpu.memory_space<vmem>>, vector<128x128xbf16>
    %c0_62 = arith.constant 0 : index
    %c896_63 = arith.constant 896 : index
    %191 = vector.load %arg8[%c0_62, %c896_63] : memref<1x1408xf32, #tpu.memory_space<vmem>>, vector<1x128xf32>
    %cst_64 = arith.constant 0.176776692 : f32
    %192 = vector.broadcast %cst_64 : f32 to vector<8x128xf32>
    %193 = arith.mulf %181, %192 : vector<8x128xf32>
    %194 = vector.extract_strided_slice %193 {offsets = [0, 0], sizes = [8, 32], strides = [1, 1]} : vector<8x128xf32> to vector<8x32xf32>
    %195 = vector.extract_strided_slice %193 {offsets = [0, 32], sizes = [8, 32], strides = [1, 1]} : vector<8x128xf32> to vector<8x32xf32>
    %196 = vector.extract_strided_slice %193 {offsets = [0, 64], sizes = [8, 32], strides = [1, 1]} : vector<8x128xf32> to vector<8x32xf32>
    %197 = vector.extract_strided_slice %193 {offsets = [0, 96], sizes = [8, 32], strides = [1, 1]} : vector<8x128xf32> to vector<8x32xf32>
    %198 = vector.shape_cast %194 : vector<8x32xf32> to vector<1x8x32xf32>
    %199 = vector.shape_cast %195 : vector<8x32xf32> to vector<1x8x32xf32>
    %200 = vector.shape_cast %196 : vector<8x32xf32> to vector<1x8x32xf32>
    %201 = vector.shape_cast %197 : vector<8x32xf32> to vector<1x8x32xf32>
    %202 = tpu.concatenate %198, %199, %200, %201 in 0 : vector<1x8x32xf32>, vector<1x8x32xf32>, vector<1x8x32xf32>, vector<1x8x32xf32> -> vector<4x8x32xf32>
    %203 = arith.truncf %202 : vector<4x8x32xf32> to vector<4x8x32xbf16>
    %204 = vector.extract_strided_slice %188 {offsets = [0, 0], sizes = [32, 32], strides = [1, 1]} : vector<32x128xf32> to vector<32x32xf32>
    %205 = vector.extract_strided_slice %188 {offsets = [0, 32], sizes = [32, 32], strides = [1, 1]} : vector<32x128xf32> to vector<32x32xf32>
    %206 = vector.extract_strided_slice %188 {offsets = [0, 64], sizes = [32, 32], strides = [1, 1]} : vector<32x128xf32> to vector<32x32xf32>
    %207 = vector.extract_strided_slice %188 {offsets = [0, 96], sizes = [32, 32], strides = [1, 1]} : vector<32x128xf32> to vector<32x32xf32>
    %208 = vector.shape_cast %204 : vector<32x32xf32> to vector<1x32x32xf32>
    %209 = vector.shape_cast %205 : vector<32x32xf32> to vector<1x32x32xf32>
    %210 = vector.shape_cast %206 : vector<32x32xf32> to vector<1x32x32xf32>
    %211 = vector.shape_cast %207 : vector<32x32xf32> to vector<1x32x32xf32>
    %212 = tpu.concatenate %208, %209, %210, %211 in 0 : vector<1x32x32xf32>, vector<1x32x32xf32>, vector<1x32x32xf32>, vector<1x32x32xf32> -> vector<4x32x32xf32>
    %213 = arith.truncf %212 : vector<4x32x32xf32> to vector<4x32x32xbf16>
    %214 = vector.extract_strided_slice %189 {offsets = [0, 0], sizes = [32, 32], strides = [1, 1]} : vector<32x128xf32> to vector<32x32xf32>
    %215 = vector.extract_strided_slice %189 {offsets = [0, 32], sizes = [32, 32], strides = [1, 1]} : vector<32x128xf32> to vector<32x32xf32>
    %216 = vector.extract_strided_slice %189 {offsets = [0, 64], sizes = [32, 32], strides = [1, 1]} : vector<32x128xf32> to vector<32x32xf32>
    %217 = vector.extract_strided_slice %189 {offsets = [0, 96], sizes = [32, 32], strides = [1, 1]} : vector<32x128xf32> to vector<32x32xf32>
    %218 = vector.shape_cast %214 : vector<32x32xf32> to vector<1x32x32xf32>
    %219 = vector.shape_cast %215 : vector<32x32xf32> to vector<1x32x32xf32>
    %220 = vector.shape_cast %216 : vector<32x32xf32> to vector<1x32x32xf32>
    %221 = vector.shape_cast %217 : vector<32x32xf32> to vector<1x32x32xf32>
    %222 = tpu.concatenate %218, %219, %220, %221 in 0 : vector<1x32x32xf32>, vector<1x32x32xf32>, vector<1x32x32xf32>, vector<1x32x32xf32> -> vector<4x32x32xf32>
    %223 = arith.truncf %222 : vector<4x32x32xf32> to vector<4x32x32xbf16>
    "tpu.trace_start"() <{level = 10 : i32, message = "hqd,hkd->hqk"}> : () -> ()
    %cst_65 = arith.constant dense<0.000000e+00> : vector<4x8x32xf32>
    %224 = tpu.matmul %203, %213, %cst_65 {dimension_numbers = #tpu.dot_dimension_numbers<[2], [2], [1], [1], [0, 0, 0, 1, 1, 1], [0], [0]>} : vector<4x8x32xbf16>, vector<4x32x32xbf16>, vector<4x8x32xf32> -> vector<4x8x32xf32>
    "tpu.trace_stop"() : () -> ()
    %225 = vector.shape_cast %22 : vector<8x32xf32> to vector<1x8x32xf32>
    %226 = vector.broadcast %225 : vector<1x8x32xf32> to vector<4x8x32xf32>
    %227 = arith.addf %224, %226 : vector<4x8x32xf32>
    %cst_66 = arith.constant dense<0xFF800000> : vector<4x8xf32>
    %228 = vector.multi_reduction <maximumf>, %227, %cst_66 [2] : vector<4x8x32xf32> to vector<4x8xf32>
    %229 = vector.shape_cast %228 : vector<4x8xf32> to vector<4x8x1xf32>
    %230 = vector.broadcast %229 : vector<4x8x1xf32> to vector<4x8x32xf32>
    %231 = arith.subf %227, %230 : vector<4x8x32xf32>
    %232 = math.exp %231 : vector<4x8x32xf32>
    %cst_67 = arith.constant dense<0.000000e+00> : vector<4x8xf32>
    %233 = vector.multi_reduction <add>, %232, %cst_67 [2] : vector<4x8x32xf32> to vector<4x8xf32>
    %234 = vector.shape_cast %233 : vector<4x8xf32> to vector<4x8x1xf32>
    %235 = arith.truncf %232 : vector<4x8x32xf32> to vector<4x8x32xbf16>
    "tpu.trace_start"() <{level = 10 : i32, message = "hqk,hkd->hqd"}> : () -> ()
    %cst_68 = arith.constant dense<0.000000e+00> : vector<4x8x32xf32>
    %236 = tpu.matmul %235, %223, %cst_68 {dimension_numbers = #tpu.dot_dimension_numbers<[2], [1], [1], [2], [0, 0, 0, 1, 1, 2], [0], [0]>} : vector<4x8x32xbf16>, vector<4x32x32xbf16>, vector<4x8x32xf32> -> vector<4x8x32xf32>
    "tpu.trace_stop"() : () -> ()
    %237 = tpu.reciprocal %234 {approx = true} : vector<4x8x1xf32> -> vector<4x8x1xf32>
    %238 = vector.broadcast %237 : vector<4x8x1xf32> to vector<4x8x32xf32>
    %239 = arith.mulf %236, %238 : vector<4x8x32xf32>
    %240 = vector.extract_strided_slice %239 {offsets = [0, 0, 0], sizes = [1, 8, 32], strides = [1, 1, 1]} : vector<4x8x32xf32> to vector<1x8x32xf32>
    %241 = vector.shape_cast %240 : vector<1x8x32xf32> to vector<8x32xf32>
    %242 = vector.extract_strided_slice %239 {offsets = [1, 0, 0], sizes = [1, 8, 32], strides = [1, 1, 1]} : vector<4x8x32xf32> to vector<1x8x32xf32>
    %243 = vector.shape_cast %242 : vector<1x8x32xf32> to vector<8x32xf32>
    %244 = vector.extract_strided_slice %239 {offsets = [2, 0, 0], sizes = [1, 8, 32], strides = [1, 1, 1]} : vector<4x8x32xf32> to vector<1x8x32xf32>
    %245 = vector.shape_cast %244 : vector<1x8x32xf32> to vector<8x32xf32>
    %246 = vector.extract_strided_slice %239 {offsets = [3, 0, 0], sizes = [1, 8, 32], strides = [1, 1, 1]} : vector<4x8x32xf32> to vector<1x8x32xf32>
    %247 = vector.shape_cast %246 : vector<1x8x32xf32> to vector<8x32xf32>
    %248 = tpu.concatenate %241, %243, %245, %247 in 1 : vector<8x32xf32>, vector<8x32xf32>, vector<8x32xf32>, vector<8x32xf32> -> vector<8x128xf32>
    %249 = arith.truncf %248 : vector<8x128xf32> to vector<8x128xbf16>
    %cst_69 = arith.constant dense<0.000000e+00> : vector<8x128xf32>
    %250 = tpu.matmul %249, %190, %cst_69 {dimension_numbers = #tpu.dot_dimension_numbers<[1], [0], [0], [1], [0, 0, 1, 1], [], []>} : vector<8x128xbf16>, vector<128x128xbf16>, vector<8x128xf32> -> vector<8x128xf32>
    %251 = vector.broadcast %191 : vector<1x128xf32> to vector<8x128xf32>
    %252 = arith.addf %250, %251 : vector<8x128xf32>
    %253 = arith.addf %152, %252 : vector<8x128xf32>
    %cst_70 = arith.constant dense<0.000000e+00> : vector<8xf32>
    %254 = vector.multi_reduction <add>, %253, %cst_70 [1] : vector<8x128xf32> to vector<8xf32>
    %255 = vector.shape_cast %254 : vector<8xf32> to vector<8x1xf32>
    %cst_71 = arith.constant 1.280000e+02 : f32
    %256 = vector.broadcast %cst_71 : f32 to vector<8x1xf32>
    %257 = arith.divf %255, %256 : vector<8x1xf32>
    %258 = vector.broadcast %257 : vector<8x1xf32> to vector<8x128xf32>
    %259 = arith.subf %253, %258 : vector<8x128xf32>
    %260 = arith.mulf %259, %259 : vector<8x128xf32>
    %cst_72 = arith.constant dense<0.000000e+00> : vector<8xf32>
    %261 = vector.multi_reduction <add>, %260, %cst_72 [1] : vector<8x128xf32> to vector<8xf32>
    %262 = vector.shape_cast %261 : vector<8xf32> to vector<8x1xf32>
    %cst_73 = arith.constant 1.270000e+02 : f32
    %263 = vector.broadcast %cst_73 : f32 to vector<8x1xf32>
    %264 = arith.divf %262, %263 : vector<8x1xf32>
    %265 = math.sqrt %264 : vector<8x1xf32>
    %cst_74 = arith.constant 9.99999997E-7 : f32
    %266 = vector.broadcast %cst_74 : f32 to vector<8x1xf32>
    %267 = arith.addf %265, %266 : vector<8x1xf32>
    %268 = tpu.reciprocal %267 {approx = true} : vector<8x1xf32> -> vector<8x1xf32>
    %269 = vector.broadcast %257 : vector<8x1xf32> to vector<8x128xf32>
    %270 = arith.subf %253, %269 : vector<8x128xf32>
    %271 = vector.broadcast %27 : f32 to vector<8x128xf32>
    %272 = arith.mulf %271, %270 : vector<8x128xf32>
    %273 = vector.broadcast %268 : vector<8x1xf32> to vector<8x128xf32>
    %274 = arith.mulf %272, %273 : vector<8x128xf32>
    %275 = vector.broadcast %28 : f32 to vector<8x128xf32>
    %276 = arith.addf %274, %275 : vector<8x128xf32>
    %277 = arith.truncf %276 : vector<8x128xf32> to vector<8x128xbf16>
    %c0_75 = arith.constant 0 : index
    %c1024 = arith.constant 1024 : index
    %278 = vector.load %arg6[%c0_75, %c1024] : memref<128x1280xbf16, #tpu.memory_space<vmem>>, vector<128x256xbf16>
    %cst_76 = arith.constant dense<0.000000e+00> : vector<8x256xf32>
    %279 = tpu.matmul %277, %278, %cst_76 {dimension_numbers = #tpu.dot_dimension_numbers<[1], [0], [0], [1], [0, 0, 1, 1], [], []>} : vector<8x128xbf16>, vector<128x256xbf16>, vector<8x256xf32> -> vector<8x256xf32>
    %c0_77 = arith.constant 0 : index
    %c1024_78 = arith.constant 1024 : index
    %280 = vector.load %arg8[%c0_77, %c1024_78] : memref<1x1408xf32, #tpu.memory_space<vmem>>, vector<1x256xf32>
    %281 = vector.broadcast %280 : vector<1x256xf32> to vector<8x256xf32>
    %282 = arith.addf %279, %281 : vector<8x256xf32>
    %cst_79 = arith.constant 0.000000e+00 : f32
    %283 = vector.broadcast %cst_79 : f32 to vector<8x256xf32>
    %284 = arith.maximumf %282, %283 : vector<8x256xf32>
    %285 = arith.truncf %284 : vector<8x256xf32> to vector<8x256xbf16>
    %c0_80 = arith.constant 0 : index
    %c0_81 = arith.constant 0 : index
    %286 = vector.load %arg7[%c0_80, %c0_81] : memref<256x128xbf16, #tpu.memory_space<vmem>>, vector<256x128xbf16>
    %cst_82 = arith.constant dense<0.000000e+00> : vector<8x128xf32>
    %287 = tpu.matmul %285, %286, %cst_82 {dimension_numbers = #tpu.dot_dimension_numbers<[1], [0], [0], [1], [0, 0, 1, 1], [], []>} : vector<8x256xbf16>, vector<256x128xbf16>, vector<8x128xf32> -> vector<8x128xf32>
    %c0_83 = arith.constant 0 : index
    %c1280 = arith.constant 1280 : index
    %288 = vector.load %arg8[%c0_83, %c1280] : memref<1x1408xf32, #tpu.memory_space<vmem>>, vector<1x128xf32>
    %289 = vector.broadcast %288 : vector<1x128xf32> to vector<8x128xf32>
    %290 = arith.addf %287, %289 : vector<8x128xf32>
    %291 = arith.addf %253, %290 : vector<8x128xf32>
    %c0_84 = arith.constant 0 : index
    %c0_85 = arith.constant 0 : index
    %c0_86 = arith.constant 0 : index
    %292 = vector.load %arg10[%c0_84, %c0_85, %c0_86] : memref<1x8x128xf32, #tpu.memory_space<vmem>>, vector<1x8x128xf32>
    %293 = vector.shape_cast %292 : vector<1x8x128xf32> to vector<8x128xf32>
    %294 = vector.shape_cast %291 : vector<8x128xf32> to vector<1x8x128xf32>
    tpu.vector_store %arg10[%c0_84, %c0_85, %c0_86], %294 {strides = array<i32>} : memref<1x8x128xf32, #tpu.memory_space<vmem>>, vector<1x8x128xf32>,
    return
  }
  func.func @transform_0(%arg0: i32, %arg1: i32) -> (i32, i32, i32) {
    %c0_i32 = arith.constant 0 : i32
    %c0_i32_0 = arith.constant 0 : i32
    %c0_i32_1 = arith.constant 0 : i32
    return %arg0, %c0_i32, %c0_i32_0 : i32, i32, i32
  }
  func.func @transform_1(%arg0: i32, %arg1: i32) -> (i32, i32, i32) {
    %c0_i32 = arith.constant 0 : i32
    %c0_i32_0 = arith.constant 0 : i32
    %c0_i32_1 = arith.constant 0 : i32
    return %arg0, %c0_i32, %c0_i32_0 : i32, i32, i32
  }
  func.func @transform_2(%arg0: i32, %arg1: i32) -> (i32, i32, i32, i32) {
    %c0_i32 = arith.constant 0 : i32
    %c0_i32_0 = arith.constant 0 : i32
    %c0_i32_1 = arith.constant 0 : i32
    return %arg0, %c0_i32, %arg1, %c0_i32_0 : i32, i32, i32, i32
  }
  func.func @transform_3(%arg0: i32, %arg1: i32) -> (i32, i32, i32, i32) {
    %c0_i32 = arith.constant 0 : i32
    %c0_i32_0 = arith.constant 0 : i32
    %c0_i32_1 = arith.constant 0 : i32
    return %arg0, %c0_i32, %arg1, %c0_i32_0 : i32, i32, i32, i32
  }
  func.func @transform_4(%arg0: i32, %arg1: i32) -> (i32, i32) {
    %c0_i32 = arith.constant 0 : i32
    %c0_i32_0 = arith.constant 0 : i32
    %c0_i32_1 = arith.constant 0 : i32
    return %c0_i32, %c0_i32_0 : i32, i32
  }
  func.func @transform_5(%arg0: i32, %arg1: i32) -> (i32, i32) {
    %c0_i32 = arith.constant 0 : i32
    %c0_i32_0 = arith.constant 0 : i32
    %c0_i32_1 = arith.constant 0 : i32
    return %c0_i32, %c0_i32_0 : i32, i32
  }
  func.func @transform_6(%arg0: i32, %arg1: i32) -> (i32, i32) {
    %c0_i32 = arith.constant 0 : i32
    %c0_i32_0 = arith.constant 0 : i32
    %c0_i32_1 = arith.constant 0 : i32
    return %c0_i32, %c0_i32_0 : i32, i32
  }
  func.func @transform_7(%arg0: i32, %arg1: i32) -> i32 {
    %c0_i32 = arith.constant 0 : i32
    %c0_i32_0 = arith.constant 0 : i32
    return %c0_i32 : i32
  }
  func.func @transform_8(%arg0: i32, %arg1: i32) -> (i32, i32, i32) {
    %c0_i32 = arith.constant 0 : i32
    %c0_i32_0 = arith.constant 0 : i32
    return %arg0, %arg1, %c0_i32 : i32, i32, i32
  }
}

</mosaic_0001>

<llo_original>
// kernel: tpu_custom_call.1
$region0: #{tpu_custom_call.1}
  #allocation0 [shape = 'u32[]', space=smem, size = 0x4, offset = 0x4, fixed_abs, tag = 'smem constant byte address 0x4 - core index']
  #allocation1 [shape = 'u32[144,128]{1,0:T(1,128)}', space=vmem, size = 0x12000, scoped, tag = 'internal scratch']
  %s0 = inlined_call_operand.hbm [shape: f32[2,16,128], index: 0, kind: input, shape index: {}]
  %s1 = inlined_call_operand.hbm [shape: f32[2,32,128], index: 1, kind: input, shape index: {}]
  %s2 = inlined_call_operand.hbm [shape: s32[2,1,16,16], index: 2, kind: input, shape index: {}]
  %s3 = inlined_call_operand.hbm [shape: s32[2,1,16,32], index: 3, kind: input, shape index: {}]
  %s4 = inlined_call_operand.hbm [shape: bf16[128,1280], index: 4, kind: input, shape index: {}]
  %s5 = inlined_call_operand.hbm [shape: bf16[256,128], index: 5, kind: input, shape index: {}]
  %s6 = inlined_call_operand.vmem [shape: f32[1,1408], index: 6, kind: input, shape index: {}]
  %s7 = inlined_call_operand.vmem [shape: f32[6], index: 7, kind: input, shape index: {}]
  %s8 = inlined_call_operand.hbm [shape: f32[2,16,128], index: 8, kind: output, shape index: {}]
  %s9 = sld [smem:[#allocation0]]
  $region93: #{tpu_custom_call.1} parent=0
    _
  %s11 = ssub.s32 1, %s9
  %s12 = scalar_select 0, %s11, %s9
  $region1: #{tpu_custom_call.1} parent=0
    #allocation2 [shape = 'u8[16384]{0}', space=vmem, size = 0x4000, scoped, tag = 'input window, operand 0']
    #allocation3 [shape = 's32[2]{0}', space=sflag, size = 0x8, scoped, tag = 'scoped memory for tpu_custom_call.1']
    #allocation4 [shape = 's32[2]{0}', space=sflag, size = 0x8, scoped, tag = 'scoped memory for tpu_custom_call.1']
    #allocation5 [shape = 's32[2]{0}', space=sflag, size = 0x8, scoped, tag = 'scoped memory for tpu_custom_call.1']
    #allocation6 [shape = 'u8[32768]{0}', space=vmem, size = 0x8000, scoped, tag = 'input window, operand 1']
    #allocation7 [shape = 's32[2]{0}', space=sflag, size = 0x8, scoped, tag = 'scoped memory for tpu_custom_call.1']
    #allocation8 [shape = 'u8[8192]{0}', space=vmem, size = 0x2000, scoped, tag = 'input window, operand 2']
    #allocation9 [shape = 'u8[8192]{0}', space=vmem, size = 0x2000, scoped, tag = 'input window, operand 3']
    #allocation10 [shape = 's32[2]{0}', space=sflag, size = 0x8, scoped, tag = 'scoped memory for tpu_custom_call.1']
    #allocation11 [shape = 'u8[327680]{0}', space=vmem, size = 0x50000, scoped, tag = 'input window, operand 4, single buffered']
    #allocation12 [shape = 'u8[65536]{0}', space=vmem, size = 0x10000, scoped, tag = 'input window, operand 5, single buffered']
    #allocation13 [shape = 's32[1]{0}', space=sflag, size = 0x4, scoped, tag = 'scoped memory for tpu_custom_call.1']
    #allocation14 [shape = 'u8[512]{0}', space=smem, size = 0x200, scoped, tag = 'input window, operand 7, single buffered']
    #allocation15 [shape = 'u8[8192]{0}', space=vmem, size = 0x2000, scoped, tag = 'output window, operand 0']
    %13 = vsyncpa [#allocation3], 0
    %s14 = scalar_lea.sflag [#allocation3], 1
    %15 = vsyncpa %s14, 0
    %16 = vsyncpa [#allocation7], 0
    %s17 = scalar_lea.sflag [#allocation7], 1
    %18 = vsyncpa %s17, 0
    %19 = vsyncpa [#allocation10], 0
    %s20 = scalar_lea.sflag [#allocation10], 1
    %21 = vsyncpa %s20, 0
    %22 = vsyncpa [#allocation13], 0
    %23 = vsyncpa [#allocation5], 0
    %24 = vsyncpa [#allocation4], 0
    %s25 = scalar_lea.sflag [#allocation4], 1
    %26 = vsyncpa %s25, 0
    loop: start=0, step=1, limit=6
    $region2: #{tpu_custom_call.1} parent=1 // loop_pre_header
      _
    $region3: #{tpu_custom_call.1} parent=1 // loop_header
      %s28 = sphi 0, %s32
      %p29 = scmp.ge.s32.totalorder %s28, 6
      %s35 = sphi 0, %s47
      %s36 = sphi 0, %s43
      %s37 = sphi 0, %s35
      %s38 = sphi 0, %s36
      %s39 = sphi 0, %s37
      %s40 = sphi 0, %s38
      %s50 = sphi 0, %s52
      %s53 = sphi 0, %s50
      %s54 = sphi 0, %s53
      %s70 = sphi 0, %s54
      %s76 = sphi 0, %s78
      %s79 = sphi 0, %s76
      %s80 = sphi 0, %s79
      %s96 = sphi 0, %s80
      %s104 = sphi 0, %s106
      %s107 = sphi 0, %s104
      %s108 = sphi 0, %s107
      %s124 = sphi 0, %s108
      %s132 = sphi 0, %s134
      %s135 = sphi 0, %s132
      %s136 = sphi 0, %s135
      %s152 = sphi 0, %s136
      %s156 = sphi 0, %s156
      %s158 = sphi 0, %s156
      %s159 = sphi 0, %s158
      %s173 = sphi 0, %s159
      %s177 = sphi 0, %s177
      %s179 = sphi 0, %s177
      %s180 = sphi 0, %s179
      %s194 = sphi 0, %s180
      %s198 = sphi 0, %s198
      %s200 = sphi 0, %s198
      %s201 = sphi 0, %s200
      %s215 = sphi 0, %s201
      %s219 = sphi 0, %s219
      %s221 = sphi 0, %s219
      %s222 = sphi 0, %s221
      %s236 = sphi 0, %s222
      %s244 = sphi 0, %s246
      %s247 = sphi 0, %s244
      %s248 = sphi 0, %s247
      %s264 = sphi 0, %s248
    $region4: #{tpu_custom_call.1} parent=1 // loop_header_branch
      %31 = sbr.rel (%p29) target = $region8
    $region5: #{tpu_custom_call.1} parent=1 // loop_body
      %s33 = ssub.s32 %s28, 1
      %s34 = ssub.s32 %s28, 2
      %s41 = sadd.s32 1, %s36
      %p42 = scmp.ge.s32.totalorder %s41, 2
      %s43 = scalar_select %p42, 0, %s41
      %s44 = sadd.s32 1, %s35
      %s45 = scalar_select %p42, %s44, %s35
      %p46 = scmp.ge.s32.totalorder %s45, 2
      %s47 = scalar_select %p46, 0, %s45
      %s48 = ssub.s32 %s35, %s47
      %p49 = scmp.eq.s32.totalorder %s48, 0
      %s51 = sadd.s32 %s50, 1
      %s52 = scalar_select %p49, %s50, %s51
      %p55 = pneg %p49
      %p56 = scmp.eq.s32.totalorder %s28, 3
      %p57 = por %p55, %p56
      %p58 = scmp.ne.s32.totalorder %s50, %s53
      %p59 = scmp.eq.s32.totalorder %s28, 0
      %p60 = por %p58, %p59
      %p61 = scmp.ne.s32.totalorder %s50, %s53
      %p62 = scmp.eq.s32.totalorder %s33, 3
      %p63 = por %p61, %p62
      %p64 = scmp.ne.s32.totalorder %s53, %s54
      %p65 = scmp.eq.s32.totalorder %s33, 0
      %p66 = por %p64, %p65
      %p67 = scmp.ne.s32.totalorder %s53, %s54
      %p68 = scmp.eq.s32.totalorder %s34, 3
      %p69 = por %p67, %p68
      %p71 = scmp.ne.s32.totalorder %s54, %s70
      %p72 = scmp.eq.s32.totalorder %s34, 0
      %p73 = por %p71, %p72
      %s74 = ssub.s32 %s35, %s47
      %p75 = scmp.eq.s32.totalorder %s74, 0
      %s77 = sadd.s32 %s76, 1
      %s78 = scalar_select %p75, %s76, %s77
      %p81 = pneg %p75
      %p82 = scmp.eq.s32.totalorder %s28, 3
      %p83 = por %p81, %p82
      %p84 = scmp.ne.s32.totalorder %s76, %s79
      %p85 = scmp.eq.s32.totalorder %s28, 0
      %p86 = por %p84, %p85
      %p87 = scmp.ne.s32.totalorder %s76, %s79
      %p88 = scmp.eq.s32.totalorder %s33, 3
      %p89 = por %p87, %p88
      %p90 = scmp.ne.s32.totalorder %s79, %s80
      %p91 = scmp.eq.s32.totalorder %s33, 0
      %p92 = por %p90, %p91
      %p93 = scmp.ne.s32.totalorder %s79, %s80
      %p94 = scmp.eq.s32.totalorder %s34, 3
      %p95 = por %p93, %p94
      %p97 = scmp.ne.s32.totalorder %s80, %s96
      %p98 = scmp.eq.s32.totalorder %s34, 0
      %p99 = por %p97, %p98
      %s100 = ssub.s32 %s35, %s47
      %s101 = ssub.s32 %s36, %s43
      %s102 = sor.u32 %s100, %s101
      %p103 = scmp.eq.s32.totalorder %s102, 0
      %s105 = sadd.s32 %s104, 1
      %s106 = scalar_select %p103, %s104, %s105
      %p109 = pneg %p103
      %p110 = scmp.eq.s32.totalorder %s28, 3
      %p111 = por %p109, %p110
      %p112 = scmp.ne.s32.totalorder %s104, %s107
      %p113 = scmp.eq.s32.totalorder %s28, 0
      %p114 = por %p112, %p113
      %p115 = scmp.ne.s32.totalorder %s104, %s107
      %p116 = scmp.eq.s32.totalorder %s33, 3
      %p117 = por %p115, %p116
      %p118 = scmp.ne.s32.totalorder %s107, %s108
      %p119 = scmp.eq.s32.totalorder %s33, 0
      %p120 = por %p118, %p119
      %p121 = scmp.ne.s32.totalorder %s107, %s108
      %p122 = scmp.eq.s32.totalorder %s34, 3
      %p123 = por %p121, %p122
      %p125 = scmp.ne.s32.totalorder %s108, %s124
      %p126 = scmp.eq.s32.totalorder %s34, 0
      %p127 = por %p125, %p126
      %s128 = ssub.s32 %s35, %s47
      %s129 = ssub.s32 %s36, %s43
      %s130 = sor.u32 %s128, %s129
      %p131 = scmp.eq.s32.totalorder %s130, 0
      %s133 = sadd.s32 %s132, 1
      %s134 = scalar_select %p131, %s132, %s133
      %p137 = pneg %p131
      %p138 = scmp.eq.s32.totalorder %s28, 3
      %p139 = por %p137, %p138
      %p140 = scmp.ne.s32.totalorder %s132, %s135
      %p141 = scmp.eq.s32.totalorder %s28, 0
      %p142 = por %p140, %p141
      %p143 = scmp.ne.s32.totalorder %s132, %s135
      %p144 = scmp.eq.s32.totalorder %s33, 3
      %p145 = por %p143, %p144
      %p146 = scmp.ne.s32.totalorder %s135, %s136
      %p147 = scmp.eq.s32.totalorder %s33, 0
      %p148 = por %p146, %p147
      %p149 = scmp.ne.s32.totalorder %s135, %s136
      %p150 = scmp.eq.s32.totalorder %s34, 3
      %p151 = por %p149, %p150
      %p153 = scmp.ne.s32.totalorder %s136, %s152
      %p154 = scmp.eq.s32.totalorder %s34, 0
      %p155 = por %p153, %p154
      %s157 = sadd.s32 %s156, 1
      %p160 = scmp.eq.s32.totalorder %s28, 3
      %p161 = scmp.ne.s32.totalorder %s156, %s158
      %p162 = scmp.eq.s32.totalorder %s28, 0
      %p163 = por %p161, %p162
      %p164 = scmp.ne.s32.totalorder %s156, %s158
      %p165 = scmp.eq.s32.totalorder %s33, 3
      %p166 = por %p164, %p165
      %p167 = scmp.ne.s32.totalorder %s158, %s159
      %p168 = scmp.eq.s32.totalorder %s33, 0
      %p169 = por %p167, %p168
      %p170 = scmp.ne.s32.totalorder %s158, %s159
      %p171 = scmp.eq.s32.totalorder %s34, 3
      %p172 = por %p170, %p171
      %p174 = scmp.ne.s32.totalorder %s159, %s173
      %p175 = scmp.eq.s32.totalorder %s34, 0
      %p176 = por %p174, %p175
      %s178 = sadd.s32 %s177, 1
      %p181 = scmp.eq.s32.totalorder %s28, 3
      %p182 = scmp.ne.s32.totalorder %s177, %s179
      %p183 = scmp.eq.s32.totalorder %s28, 0
      %p184 = por %p182, %p183
      %p185 = scmp.ne.s32.totalorder %s177, %s179
      %p186 = scmp.eq.s32.totalorder %s33, 3
      %p187 = por %p185, %p186
      %p188 = scmp.ne.s32.totalorder %s179, %s180
      %p189 = scmp.eq.s32.totalorder %s33, 0
      %p190 = por %p188, %p189
      %p191 = scmp.ne.s32.totalorder %s179, %s180
      %p192 = scmp.eq.s32.totalorder %s34, 3
      %p193 = por %p191, %p192
      %p195 = scmp.ne.s32.totalorder %s180, %s194
      %p196 = scmp.eq.s32.totalorder %s34, 0
      %p197 = por %p195, %p196
      %s199 = sadd.s32 %s198, 1
      %p202 = scmp.eq.s32.totalorder %s28, 3
      %p203 = scmp.ne.s32.totalorder %s198, %s200
      %p204 = scmp.eq.s32.totalorder %s28, 0
      %p205 = por %p203, %p204
      %p206 = scmp.ne.s32.totalorder %s198, %s200
      %p207 = scmp.eq.s32.totalorder %s33, 3
      %p208 = por %p206, %p207
      %p209 = scmp.ne.s32.totalorder %s200, %s201
      %p210 = scmp.eq.s32.totalorder %s33, 0
      %p211 = por %p209, %p210
      %p212 = scmp.ne.s32.totalorder %s200, %s201
      %p213 = scmp.eq.s32.totalorder %s34, 3
      %p214 = por %p212, %p213
      %p216 = scmp.ne.s32.totalorder %s201, %s215
      %p217 = scmp.eq.s32.totalorder %s34, 0
      %p218 = por %p216, %p217
      %s220 = sadd.s32 %s219, 1
      %p223 = scmp.eq.s32.totalorder %s28, 3
      %p224 = scmp.ne.s32.totalorder %s219, %s221
      %p225 = scmp.eq.s32.totalorder %s28, 0
      %p226 = por %p224, %p225
      %p227 = scmp.ne.s32.totalorder %s219, %s221
      %p228 = scmp.eq.s32.totalorder %s33, 3
      %p229 = por %p227, %p228
      %p230 = scmp.ne.s32.totalorder %s221, %s222
      %p231 = scmp.eq.s32.totalorder %s33, 0
      %p232 = por %p230, %p231
      %p233 = scmp.ne.s32.totalorder %s221, %s222
      %p234 = scmp.eq.s32.totalorder %s34, 3
      %p235 = por %p233, %p234
      %p237 = scmp.ne.s32.totalorder %s222, %s236
      %p238 = scmp.eq.s32.totalorder %s34, 0
      %p239 = por %p237, %p238
      %s240 = ssub.s32 %s35, %s47
      %s241 = ssub.s32 %s36, %s43
      %s242 = sor.u32 %s240, %s241
      %p243 = scmp.eq.s32.totalorder %s242, 0
      %s245 = sadd.s32 %s244, 1
      %s246 = scalar_select %p243, %s244, %s245
      %p249 = pneg %p243
      %p250 = scmp.eq.s32.totalorder %s28, 3
      %p251 = por %p249, %p250
      %p252 = scmp.ne.s32.totalorder %s244, %s247
      %p253 = scmp.eq.s32.totalorder %s28, 0
      %p254 = por %p252, %p253
      %p255 = scmp.ne.s32.totalorder %s244, %s247
      %p256 = scmp.eq.s32.totalorder %s33, 3
      %p257 = por %p255, %p256
      %p258 = scmp.ne.s32.totalorder %s247, %s248
      %p259 = scmp.eq.s32.totalorder %s33, 0
      %p260 = por %p258, %p259
      %p261 = scmp.ne.s32.totalorder %s247, %s248
      %p262 = scmp.eq.s32.totalorder %s34, 3
      %p263 = por %p261, %p262
      %p265 = scmp.ne.s32.totalorder %s248, %s264
      %p266 = scmp.eq.s32.totalorder %s34, 0
      %p267 = por %p265, %p266
      %p268 = scmp.le.s32.totalorder 1, %s28
      %p269 = scmp.lt.s32.totalorder %s28, 5
      %p270 = pnand %p268, %p269
      %p271 = pneg %p270
      // Predicated region
      $region9: #{tpu_custom_call.1} parent=5 // pred_check
        _
      $region10: #{tpu_custom_call.1} parent=5 // pred_check_branch
        %273 = sbr.rel (%p270) target = $region12
      $region11: #{tpu_custom_call.1} parent=5 // pred_region
        %s274 = ssub.s32 %s28, 1
        // Predicated region
        $region13: #{tpu_custom_call.1} parent=11 // pred_check
          %p275 = pneg %p169
        $region14: #{tpu_custom_call.1} parent=11 // pred_check_branch
          %277 = sbr.rel (%p275) target = $region16
        $region15: #{tpu_custom_call.1} parent=11 // pred_region
          %s279 = ssub.s32 10240, 10240
          %280 = vsyncadd [#allocation10], %s279
          %s281 = sshll.u32 [#allocation11], 4
          %s282 = int_to_ptr.vmem [resolvable:$true] %s281
          %287 = dma.hbm_to_vmem [thread:$0]  %s4, 10240, %s282, [#allocation10], 640, 640, 40
        $region16: #{tpu_custom_call.1} parent=11 // pred_fallthru
          _
        // Predicated region
        $region17: #{tpu_custom_call.1} parent=11 // pred_check
          %p288 = pneg %p190
        $region18: #{tpu_custom_call.1} parent=11 // pred_check_branch
          %290 = sbr.rel (%p288) target = $region20
        $region19: #{tpu_custom_call.1} parent=11 // pred_region
          %s292 = ssub.s32 2048, 2048
          %293 = vsyncadd [#allocation13], %s292
          %s294 = sshll.u32 [#allocation12], 4
          %s295 = int_to_ptr.vmem [resolvable:$true] %s294
          %300 = dma.hbm_to_vmem [thread:$0]  %s5, 2048, %s295, [#allocation13], 64, 64, 4
        $region20: #{tpu_custom_call.1} parent=11 // pred_fallthru
          _
        // Predicated region
        $region21: #{tpu_custom_call.1} parent=11 // pred_check
          %p301 = pneg %p211
        $region22: #{tpu_custom_call.1} parent=11 // pred_check_branch
          %303 = sbr.rel (%p301) target = $region24
        $region23: #{tpu_custom_call.1} parent=11 // pred_region
          _
        $region24: #{tpu_custom_call.1} parent=11 // pred_fallthru
          _
        // Predicated region
        $region25: #{tpu_custom_call.1} parent=11 // pred_check
          %p304 = pneg %p232
        $region26: #{tpu_custom_call.1} parent=11 // pred_check_branch
          %306 = sbr.rel (%p304) target = $region28
        $region27: #{tpu_custom_call.1} parent=11 // pred_region
          %s308 = ssub.s32 16, 16
          %309 = vsyncadd [#allocation5], %s308
          %s311 = sshll.u32 %s7, 4
          %s312 = int_to_ptr.vmem [resolvable:$true] %s311
          %314 = dma.vmem_to_smem %s312, 16, [#allocation14], [#allocation5]
        $region28: #{tpu_custom_call.1} parent=11 // pred_fallthru
          _
      $region12: #{tpu_custom_call.1} parent=5 // pred_fallthru
        _
      %p315 = scmp.lt.s32.totalorder %s28, 4
      // Predicated region
      $region29: #{tpu_custom_call.1} parent=5 // pred_check
        %p316 = pneg %p315
      $region30: #{tpu_custom_call.1} parent=5 // pred_check_branch
        %318 = sbr.rel (%p316) target = $region32
      $region31: #{tpu_custom_call.1} parent=5 // pred_region
        // Predicated region
        $region33: #{tpu_custom_call.1} parent=31 // pred_check
          %p319 = pneg %p60
        $region34: #{tpu_custom_call.1} parent=31 // pred_check_branch
          %321 = sbr.rel (%p319) target = $region36
        $region35: #{tpu_custom_call.1} parent=31 // pred_region
          %s322 = sand.u32 %s50, 1
          %s323 = scalar_lea.sflag [#allocation3], %s322
          %s324 = sand.u32 %s50, 1
          %s325 = smul.addr %s324, 16
          %s326 = scalar_lea.vmem [#allocation2], %s325
          %s328 = ssub.s32 256, 256
          %329 = vsyncadd %s323, %s328
          %s330 = smul.addr %s35, 2
          %s331 = smul.addr %s330, 128
          %s332 = scalar_lea.hbm %s0, %s331
          %s333 = sshll.u32 %s326, 4
          %s334 = int_to_ptr.vmem [resolvable:$true] %s333
          %339 = dma.hbm_to_vmem [thread:$0]  %s332, 256, %s334, %s323, 128, 128, 8
        $region36: #{tpu_custom_call.1} parent=31 // pred_fallthru
          _
        // Predicated region
        $region37: #{tpu_custom_call.1} parent=31 // pred_check
          %p340 = pneg %p86
        $region38: #{tpu_custom_call.1} parent=31 // pred_check_branch
          %342 = sbr.rel (%p340) target = $region40
        $region39: #{tpu_custom_call.1} parent=31 // pred_region
          %s343 = sand.u32 %s28, 1
          %s344 = scalar_lea.sflag [#allocation7], %s343
          %s345 = sand.u32 %s76, 1
          %s346 = smul.addr %s345, 32
          %s347 = scalar_lea.vmem [#allocation6], %s346
          %s349 = ssub.s32 512, 512
          %350 = vsyncadd %s344, %s349
          %s351 = smul.addr %s35, 4
          %s352 = smul.addr %s351, 128
          %s353 = scalar_lea.hbm %s1, %s352
          %s354 = sshll.u32 %s347, 4
          %s355 = int_to_ptr.vmem [resolvable:$true] %s354
          %360 = dma.hbm_to_vmem [thread:$0]  %s353, 512, %s355, %s344, 128, 128, 8
        $region40: #{tpu_custom_call.1} parent=31 // pred_fallthru
          _
        // Predicated region
        $region41: #{tpu_custom_call.1} parent=31 // pred_check
          %p361 = pneg %p114
        $region42: #{tpu_custom_call.1} parent=31 // pred_check_branch
          %363 = sbr.rel (%p361) target = $region44
        $region43: #{tpu_custom_call.1} parent=31 // pred_region
          %s364 = sand.u32 %s28, 1
          %s365 = scalar_lea.sflag [#allocation7], %s364
          %s366 = sand.u32 %s104, 1
          %s367 = smul.addr %s366, 8
          %s368 = scalar_lea.vmem [#allocation8], %s367
          %s370 = ssub.s32 128, 128
          %371 = vsyncadd %s365, %s370
          %s372 = smul.addr %s35, 2
          %s373 = sadd.s32 %s36, %s372
          %s374 = smul.addr %s373, 128
          %s375 = scalar_lea.hbm %s2, %s374
          %s377 = sshll.u32 %s368, 4
          %s378 = int_to_ptr.vmem [resolvable:$true] %s377
          %380 = dma.hbm_to_vmem [thread:$0]  %s375, 128, %s378, %s365
        $region44: #{tpu_custom_call.1} parent=31 // pred_fallthru
          _
        // Predicated region
        $region45: #{tpu_custom_call.1} parent=31 // pred_check
          %p381 = pneg %p142
        $region46: #{tpu_custom_call.1} parent=31 // pred_check_branch
          %383 = sbr.rel (%p381) target = $region48
        $region47: #{tpu_custom_call.1} parent=31 // pred_region
          %s384 = sand.u32 %s28, 1
          %s385 = scalar_lea.sflag [#allocation10], %s384
          %s386 = sand.u32 %s132, 1
          %s387 = smul.addr %s386, 8
          %s388 = scalar_lea.vmem [#allocation9], %s387
          %s390 = ssub.s32 128, 128
          %391 = vsyncadd %s385, %s390
          %s392 = smul.addr %s35, 2
          %s393 = sadd.s32 %s36, %s392
          %s394 = smul.addr %s393, 128
          %s395 = scalar_lea.hbm %s3, %s394
          %s397 = sshll.u32 %s388, 4
          %s398 = int_to_ptr.vmem [resolvable:$true] %s397
          %400 = dma.hbm_to_vmem [thread:$0]  %s395, 128, %s398, %s385
        $region48: #{tpu_custom_call.1} parent=31 // pred_fallthru
          _
      $region32: #{tpu_custom_call.1} parent=5 // pred_fallthru
        _
      %p401 = scmp.le.s32.totalorder 1, %s28
      %p402 = scmp.lt.s32.totalorder %s28, 5
      %p403 = pnand %p401, %p402
      %p404 = pneg %p403
      // Predicated region
      $region49: #{tpu_custom_call.1} parent=5 // pred_check
        _
      $region50: #{tpu_custom_call.1} parent=5 // pred_check_branch
        %406 = sbr.rel (%p403) target = $region52
      $region51: #{tpu_custom_call.1} parent=5 // pred_region
        %s407 = ssub.s32 %s28, 1
        %s408 = sand.u32 %s53, 1
        %s409 = scalar_lea.sflag [#allocation3], %s408
        %s410 = sand.u32 %s53, 1
        %s411 = smul.addr %s410, 16
        %s412 = scalar_lea.vmem [#allocation2], %s411
        // Predicated region
        $region53: #{tpu_custom_call.1} parent=51 // pred_check
          %p413 = pneg %p66
        $region54: #{tpu_custom_call.1} parent=51 // pred_check_branch
          %415 = sbr.rel (%p413) target = $region56
        $region55: #{tpu_custom_call.1} parent=51 // pred_region
          %416 = dma.done %s409, 256
        $region56: #{tpu_custom_call.1} parent=51 // pred_fallthru
          _
        %s417 = sand.u32 %s33, 1
        %s418 = scalar_lea.sflag [#allocation7], %s417
        %s419 = sand.u32 %s79, 1
        %s420 = smul.addr %s419, 32
        %s421 = scalar_lea.vmem [#allocation6], %s420
        // Predicated region
        $region57: #{tpu_custom_call.1} parent=51 // pred_check
          %p422 = pneg %p92
        $region58: #{tpu_custom_call.1} parent=51 // pred_check_branch
          %424 = sbr.rel (%p422) target = $region60
        $region59: #{tpu_custom_call.1} parent=51 // pred_region
          %425 = dma.done %s418, 512
        $region60: #{tpu_custom_call.1} parent=51 // pred_fallthru
          _
        %s426 = sand.u32 %s33, 1
        %s427 = scalar_lea.sflag [#allocation7], %s426
        %s428 = sand.u32 %s107, 1
        %s429 = smul.addr %s428, 8
        %s430 = scalar_lea.vmem [#allocation8], %s429
        // Predicated region
        $region61: #{tpu_custom_call.1} parent=51 // pred_check
          %p431 = pneg %p120
        $region62: #{tpu_custom_call.1} parent=51 // pred_check_branch
          %433 = sbr.rel (%p431) target = $region64
        $region63: #{tpu_custom_call.1} parent=51 // pred_region
          %434 = dma.done %s427, 128
        $region64: #{tpu_custom_call.1} parent=51 // pred_fallthru
          _
        %s435 = sand.u32 %s33, 1
        %s436 = scalar_lea.sflag [#allocation10], %s435
        %s437 = sand.u32 %s135, 1
        %s438 = smul.addr %s437, 8
        %s439 = scalar_lea.vmem [#allocation9], %s438
        // Predicated region
        $region65: #{tpu_custom_call.1} parent=51 // pred_check
          %p440 = pneg %p148
        $region66: #{tpu_custom_call.1} parent=51 // pred_check_branch
          %442 = sbr.rel (%p440) target = $region68
        $region67: #{tpu_custom_call.1} parent=51 // pred_region
          %443 = dma.done %s436, 128
        $region68: #{tpu_custom_call.1} parent=51 // pred_fallthru
          _
        // Predicated region
        $region69: #{tpu_custom_call.1} parent=51 // pred_check
          %p444 = pneg %p169
        $region70: #{tpu_custom_call.1} parent=51 // pred_check_branch
          %446 = sbr.rel (%p444) target = $region72
        $region71: #{tpu_custom_call.1} parent=51 // pred_region
          %447 = dma.done [#allocation10], 10240
        $region72: #{tpu_custom_call.1} parent=51 // pred_fallthru
          _
        // Predicated region
        $region73: #{tpu_custom_call.1} parent=51 // pred_check
          %p448 = pneg %p190
        $region74: #{tpu_custom_call.1} parent=51 // pred_check_branch
          %450 = sbr.rel (%p448) target = $region76
        $region75: #{tpu_custom_call.1} parent=51 // pred_region
          %451 = dma.done [#allocation13], 2048
        $region76: #{tpu_custom_call.1} parent=51 // pred_fallthru
          _
        // Predicated region
        $region77: #{tpu_custom_call.1} parent=51 // pred_check
          %p452 = pneg %p232
        $region78: #{tpu_custom_call.1} parent=51 // pred_check_branch
          %454 = sbr.rel (%p452) target = $region80
        $region79: #{tpu_custom_call.1} parent=51 // pred_region
          %455 = dma.done [#allocation5], 16
        $region80: #{tpu_custom_call.1} parent=51 // pred_fallthru
          _
        %456 = sfence
        %s457 = sand.u32 %s53, 1
        %s458 = scalar_lea.sflag [#allocation3], %s457
        %s459 = sand.u32 %s53, 1
        %s460 = smul.addr %s459, 16
        %s461 = scalar_lea.vmem [#allocation2], %s460
        %p462 = pneg %p66
        %p463 = pneg %p63
        %s464 = sand.u32 %s33, 1
        %s465 = scalar_lea.sflag [#allocation7], %s464
        %s466 = sand.u32 %s79, 1
        %s467 = smul.addr %s466, 32
        %s468 = scalar_lea.vmem [#allocation6], %s467
        %p469 = pneg %p92
        %p470 = pneg %p89
        %s471 = sand.u32 %s33, 1
        %s472 = scalar_lea.sflag [#allocation7], %s471
        %s473 = sand.u32 %s107, 1
        %s474 = smul.addr %s473, 8
        %s475 = scalar_lea.vmem [#allocation8], %s474
        %p476 = pneg %p120
        %p477 = pneg %p117
        %s478 = sand.u32 %s33, 1
        %s479 = scalar_lea.sflag [#allocation10], %s478
        %s480 = sand.u32 %s135, 1
        %s481 = smul.addr %s480, 8
        %s482 = scalar_lea.vmem [#allocation9], %s481
        %p483 = pneg %p148
        %p484 = pneg %p145
        %p485 = pneg %p169
        %p486 = pneg %p166
        %p487 = pneg %p190
        %p488 = pneg %p187
        %p489 = pneg %p211
        %p490 = pneg %p208
        %p491 = pneg %p232
        %p492 = pneg %p229
        %p493 = pneg %p260
        %p494 = pneg %p257
        %s495 = sand.u32 %s247, 1
        %s496 = scalar_lea.sflag [#allocation4], %s495
        %s497 = sand.u32 %s247, 1
        %s498 = smul.addr %s497, 8
        %s499 = scalar_lea.vmem [#allocation15], %s498
        %s501 = smul.u32 %s38, 8
        %v502 = vld [vmem:[%s412] sm:$0xff]
        %v503 = vld [vmem:[%s412 + $0x8] sm:$0xff]
        %s504 = scalar_lea.vmem %s412, %s501 [#allocation2]
        %v505 = vld [vmem:[%s504] sm:$0xff]
        %v506 = vld [vmem:[%s421] sm:$0xff]
        %v507 = vld [vmem:[%s421 + $0x8] sm:$0xff]
        %v508 = vld [vmem:[%s421 + $0x10] sm:$0xff]
        %v509 = vld [vmem:[%s421 + $0x18] sm:$0xff]
        %v510 = vld [vmem:[%s430] sm:$0xff]
        %vm511 = vcmp.eq.s32.totalorder %v510, 0
        %v512 = vsel %vm511, -1e+09, 0.0
        %v513 = vld [vmem:[%s439] sm:$0xff]
        %vm514 = vcmp.eq.s32.totalorder %v513, 0
        %v515 = vsel %vm514, -1e+09, 0.0
        %s516 = sld [smem:[#allocation14]]
        %s517 = sld [smem:[#allocation14 + $0x1]]
        %s518 = sld [smem:[#allocation14 + $0x2]]
        %s519 = sld [smem:[#allocation14 + $0x3]]
        %s520 = sld [smem:[#allocation14 + $0x4]]
        %s521 = sld [smem:[#allocation14 + $0x5]]
        %522 = vadd.xlane.f32.xlu0 %v505
        %v523 = vpop.xlane.xlu0 %522
        %v524 = vrcp.pop 128.0
        %v525 = vmul.f32 %v523, %v524
        %v526 = vsub.f32 %v505, %v525
        %v527 = vmul.f32 %v526, %v526
        %528 = vadd.xlane.f32.xlu0 %v527
        %v529 = vpop.xlane.xlu0 %528
        %v530 = vrcp.pop 127.0
        %v531 = vmul.f32 %v529, %v530
        %v532 = vrsqrt.pop %v531
        %v533 = vmul.f32 %v531, %v532
        %vm534 = vcmp.eq.f32.partialorder %v531, inf
        %v535 = vsel %vm534, %v531, %v533
        %vm536 = vcmp.eq.f32.partialorder %v531, 0.0
        %v537 = vand.u32 %v531, 2147483648
        %v538 = vsel %vm536, %v537, %v535
        %v539 = vadd.f32 %v538, 1e-06
        %v540 = vrcp.pop %v539
        %v541 = vstv %s516
        %v542 = vmul.f32 %v541, %v526
        %v543 = vmul.f32 %v542, %v540
        %v544 = vstv %s517
        %v545 = vadd.f32 %v543, %v544
        %546 = vadd.xlane.f32.xlu0 %v502
        %v547 = vpop.xlane.xlu0 %546
        %548 = vadd.xlane.f32.xlu0 %v503
        %v549 = vpop.xlane.xlu0 %548
        %v550 = vmul.f32 %v547, %v524
        %v551 = vmul.f32 %v549, %v524
        %v552 = vsub.f32 %v502, %v550
        %v553 = vsub.f32 %v503, %v551
        %v554 = vmul.f32 %v552, %v552
        %v555 = vmul.f32 %v553, %v553
        %556 = vadd.xlane.f32.xlu0 %v554
        %v557 = vpop.xlane.xlu0 %556
        %558 = vadd.xlane.f32.xlu0 %v555
        %v559 = vpop.xlane.xlu0 %558
        %v560 = vmul.f32 %v557, %v530
        %v561 = vmul.f32 %v559, %v530
        %v562 = vrsqrt.pop %v560
        %v563 = vmul.f32 %v560, %v562
        %vm564 = vcmp.eq.f32.partialorder %v560, inf
        %v565 = vsel %vm564, %v560, %v563
        %vm566 = vcmp.eq.f32.partialorder %v560, 0.0
        %v567 = vand.u32 %v560, 2147483648
        %v568 = vsel %vm566, %v567, %v565
        %v569 = vrsqrt.pop %v561
        %v570 = vmul.f32 %v561, %v569
        %vm571 = vcmp.eq.f32.partialorder %v561, inf
        %v572 = vsel %vm571, %v561, %v570
        %vm573 = vcmp.eq.f32.partialorder %v561, 0.0
        %v574 = vand.u32 %v561, 2147483648
        %v575 = vsel %vm573, %v574, %v572
        %v576 = vadd.f32 %v568, 1e-06
        %v577 = vadd.f32 %v575, 1e-06
        %v578 = vrcp.pop %v576
        %v579 = vrcp.pop %v577
        %v580 = vmul.f32 %v541, %v552
        %v581 = vmul.f32 %v541, %v553
        %v582 = vmul.f32 %v580, %v578
        %v583 = vmul.f32 %v581, %v579
        %v584 = vadd.f32 %v582, %v544
        %v585 = vadd.f32 %v583, %v544
        %v586 = vpack.c.bf16 %v545, %v545
        %v587 = vld [vmem:[#allocation11] sm:$0xf]
        %v588 = vld [vmem:[#allocation11 + $0x28] sm:$0xf]
        %v589 = vld [vmem:[#allocation11 + $0x50] sm:$0xf]
        %v590 = vld [vmem:[#allocation11 + $0x78] sm:$0xf]
        %v591 = vld [vmem:[#allocation11 + $0xa0] sm:$0xf]
        %v592 = vld [vmem:[#allocation11 + $0xc8] sm:$0xf]
        %v593 = vld [vmem:[#allocation11 + $0xf0] sm:$0xf]
        %v594 = vld [vmem:[#allocation11 + $0x118] sm:$0xf]
        %v595 = vld [vmem:[#allocation11 + $0x140] sm:$0xf]
        %v596 = vld [vmem:[#allocation11 + $0x168] sm:$0xf]
        %v597 = vld [vmem:[#allocation11 + $0x190] sm:$0xf]
        %v598 = vld [vmem:[#allocation11 + $0x1b8] sm:$0xf]
        %v599 = vld [vmem:[#allocation11 + $0x1e0] sm:$0xf]
        %v600 = vld [vmem:[#allocation11 + $0x208] sm:$0xf]
        %v601 = vld [vmem:[#allocation11 + $0x230] sm:$0xf]
        %v602 = vld [vmem:[#allocation11 + $0x258] sm:$0xf]
        %v603 = vld [vmem:[%s6] sm:$0x1]
        %v605 = vlaneseq
        %v606 = vshrl.u32 %v605, 7
        %v607 = vsub.s32 0, %v606
        %v608 = vrot.slane %v603, %v607
        %v626 = vunpack.c.l.b16 %v587
        %v627 = vunpack.c.l.b16 %v588
        %v628 = vunpack.c.l.b16 %v589
        %v629 = vunpack.c.l.b16 %v590
        %v630 = vunpack.c.l.b16 %v591
        %v631 = vunpack.c.l.b16 %v592
        %v632 = vunpack.c.l.b16 %v593
        %v633 = vunpack.c.l.b16 %v594
        %v634 = vunpack.c.l.b16 %v595
        %v635 = vunpack.c.l.b16 %v596
        %v636 = vunpack.c.l.b16 %v597
        %v637 = vunpack.c.l.b16 %v598
        %v638 = vunpack.c.l.b16 %v599
        %v639 = vunpack.c.l.b16 %v600
        %v640 = vunpack.c.l.b16 %v601
        %v641 = vunpack.c.l.b16 %v602
        %v642 = vpack.c.b16 %v627, %v626
        %v643 = vpack.c.b16 %v629, %v628
        %v644 = vpack.c.b16 %v631, %v630
        %v645 = vpack.c.b16 %v633, %v632
        %v646 = vpack.c.b16 %v635, %v634
        %v647 = vpack.c.b16 %v637, %v636
        %v648 = vpack.c.b16 %v639, %v638
        %v649 = vpack.c.b16 %v641, %v640
        %658 = vmatprep.subr.bf16.mxu0 0
        %659 = vmatpush1.bf16.msra.mxu0 %v642
        %660 = vmatprep.subr.bf16.mxu0 0
        %661 = vmatpush1.bf16.msra.mxu0 %v643
        %662 = vmatprep.subr.bf16.mxu0 0
        %663 = vmatpush1.bf16.msra.mxu0 %v644
        %664 = vmatprep.subr.bf16.mxu0 0
        %665 = vmatpush1.bf16.msra.mxu0 %v645
        %666 = vmatprep.subr.bf16.mxu0 0
        %667 = vmatpush1.bf16.msra.mxu0 %v646
        %668 = vmatprep.subr.bf16.mxu0 0
        %669 = vmatpush1.bf16.msra.mxu0 %v647
        %670 = vmatprep.subr.bf16.mxu0 0
        %671 = vmatpush1.bf16.msra.mxu0 %v648
        %672 = vmatprep.subr.bf16.mxu0 0
        %673 = vmatpush1.bf16.msra.mxu0 %v649
        %674 = vmatprep.subr.bf16.mxu0 0
        %675 = vmatpush1.bf16.msra.mxu0 0
        %676 = vmatprep.subr.bf16.mxu0 0
        %677 = vmatpush1.bf16.msra.mxu0 0
        %678 = vmatprep.subr.bf16.mxu0 0
        %679 = vmatpush1.bf16.msra.mxu0 0
        %680 = vmatprep.subr.bf16.mxu0 0
        %681 = vmatpush1.bf16.msra.mxu0 0
        %682 = vmatprep.subr.bf16.mxu0 0
        %683 = vmatpush1.bf16.msra.mxu0 0
        %684 = vmatprep.subr.bf16.mxu0 0
        %685 = vmatpush1.bf16.msra.mxu0 0
        %686 = vmatprep.subr.bf16.mxu0 0
        %687 = vmatpush1.bf16.msra.mxu0 0
        %688 = vmatprep.subr.bf16.mxu0 0
        %689 = vmatpush1.bf16.msra.mxu0 0
        %690 = vmatprep.mubr.bf16.mxu0 0
        %691 = vmatmul.mubr.bf16.gmra.mrb[0].mxu0 %v586
        %v692 = vpop.f32.mrb[0].mxu0
        %v693 = vadd.f32 %v608, %v692
        %v694 = vpop.f32.mrb[0].mxu0
        %v695 = vpop.f32.mrb[0].mxu0
        %v696 = vpop.f32.mrb[0].mxu0
        %697 = vdwg.mxu0
        %v698 = vpack.c.bf16 %v585, %v584
        %v699 = vld [vmem:[#allocation11 + $0x4] sm:$0xff]
        %v700 = vld [vmem:[#allocation11 + $0x2c] sm:$0xff]
        %v701 = vld [vmem:[#allocation11 + $0x54] sm:$0xff]
        %v702 = vld [vmem:[#allocation11 + $0x7c] sm:$0xff]
        %v703 = vld [vmem:[#allocation11 + $0xa4] sm:$0xff]
        %v704 = vld [vmem:[#allocation11 + $0xcc] sm:$0xff]
        %v705 = vld [vmem:[#allocation11 + $0xf4] sm:$0xff]
        %v706 = vld [vmem:[#allocation11 + $0x11c] sm:$0xff]
        %v707 = vld [vmem:[#allocation11 + $0x144] sm:$0xff]
        %v708 = vld [vmem:[#allocation11 + $0x16c] sm:$0xff]
        %v709 = vld [vmem:[#allocation11 + $0x194] sm:$0xff]
        %v710 = vld [vmem:[#allocation11 + $0x1bc] sm:$0xff]
        %v711 = vld [vmem:[#allocation11 + $0x1e4] sm:$0xff]
        %v712 = vld [vmem:[#allocation11 + $0x20c] sm:$0xff]
        %v713 = vld [vmem:[#allocation11 + $0x234] sm:$0xff]
        %v714 = vld [vmem:[#allocation11 + $0x25c] sm:$0xff]
        %v715 = vld [vmem:[%s6 + $0x1] sm:$0x3]
        %v717 = vlaneseq
        %v718 = vshrl.u32 %v717, 7
        %v719 = vsub.s32 0, %v718
        %v720 = vrot.slane %v715, %v719
        %v721 = vlaneseq
        %v722 = vshrl.u32 %v721, 7
        %v723 = vsub.s32 1, %v722
        %v724 = vrot.slane %v715, %v723
        %v743 = vunpack.c.l.b16 %v699
        %v744 = vunpack.c.h.b16 %v699
        %v745 = vunpack.c.l.b16 %v700
        %v746 = vunpack.c.h.b16 %v700
        %v747 = vunpack.c.l.b16 %v701
        %v748 = vunpack.c.h.b16 %v701
        %v749 = vunpack.c.l.b16 %v702
        %v750 = vunpack.c.h.b16 %v702
        %v751 = vunpack.c.l.b16 %v703
        %v752 = vunpack.c.h.b16 %v703
        %v753 = vunpack.c.l.b16 %v704
        %v754 = vunpack.c.h.b16 %v704
        %v755 = vunpack.c.l.b16 %v705
        %v756 = vunpack.c.h.b16 %v705
        %v757 = vunpack.c.l.b16 %v706
        %v758 = vunpack.c.h.b16 %v706
        %v759 = vunpack.c.l.b16 %v707
        %v760 = vunpack.c.h.b16 %v707
        %v761 = vunpack.c.l.b16 %v708
        %v762 = vunpack.c.h.b16 %v708
        %v763 = vunpack.c.l.b16 %v709
        %v764 = vunpack.c.h.b16 %v709
        %v765 = vunpack.c.l.b16 %v710
        %v766 = vunpack.c.h.b16 %v710
        %v767 = vunpack.c.l.b16 %v711
        %v768 = vunpack.c.h.b16 %v711
        %v769 = vunpack.c.l.b16 %v712
        %v770 = vunpack.c.h.b16 %v712
        %v771 = vunpack.c.l.b16 %v713
        %v772 = vunpack.c.h.b16 %v713
        %v773 = vunpack.c.l.b16 %v714
        %v774 = vunpack.c.h.b16 %v714
        %v775 = vpack.c.b16 %v745, %v743
        %v776 = vpack.c.b16 %v746, %v744
        %v777 = vpack.c.b16 %v749, %v747
        %v778 = vpack.c.b16 %v750, %v748
        %v779 = vpack.c.b16 %v753, %v751
        %v780 = vpack.c.b16 %v754, %v752
        %v781 = vpack.c.b16 %v757, %v755
        %v782 = vpack.c.b16 %v758, %v756
        %v783 = vpack.c.b16 %v761, %v759
        %v784 = vpack.c.b16 %v762, %v760
        %v785 = vpack.c.b16 %v765, %v763
        %v786 = vpack.c.b16 %v766, %v764
        %v787 = vpack.c.b16 %v769, %v767
        %v788 = vpack.c.b16 %v770, %v768
        %v789 = vpack.c.b16 %v773, %v771
        %v790 = vpack.c.b16 %v774, %v772
        %807 = vmatprep.subr.bf16.mxu0 %v776
        %808 = vmatpush1.bf16.msra.mxu0 %v775
        %809 = vmatprep.subr.bf16.mxu0 %v778
        %810 = vmatpush1.bf16.msra.mxu0 %v777
        %811 = vmatprep.subr.bf16.mxu0 %v780
        %812 = vmatpush1.bf16.msra.mxu0 %v779
        %813 = vmatprep.subr.bf16.mxu0 %v782
        %814 = vmatpush1.bf16.msra.mxu0 %v781
        %815 = vmatprep.subr.bf16.mxu0 %v784
        %816 = vmatpush1.bf16.msra.mxu0 %v783
        %817 = vmatprep.subr.bf16.mxu0 %v786
        %818 = vmatpush1.bf16.msra.mxu0 %v785
        %819 = vmatprep.subr.bf16.mxu0 %v788
        %820 = vmatpush1.bf16.msra.mxu0 %v787
        %821 = vmatprep.subr.bf16.mxu0 %v790
        %822 = vmatpush1.bf16.msra.mxu0 %v789
        %823 = vmatprep.subr.bf16.mxu0 0
        %824 = vmatpush1.bf16.msra.mxu0 0
        %825 = vmatprep.subr.bf16.mxu0 0
        %826 = vmatpush1.bf16.msra.mxu0 0
        %827 = vmatprep.subr.bf16.mxu0 0
        %828 = vmatpush1.bf16.msra.mxu0 0
        %829 = vmatprep.subr.bf16.mxu0 0
        %830 = vmatpush1.bf16.msra.mxu0 0
        %831 = vmatprep.subr.bf16.mxu0 0
        %832 = vmatpush1.bf16.msra.mxu0 0
        %833 = vmatprep.subr.bf16.mxu0 0
        %834 = vmatpush1.bf16.msra.mxu0 0
        %835 = vmatprep.subr.bf16.mxu0 0
        %836 = vmatpush1.bf16.msra.mxu0 0
        %837 = vmatprep.subr.bf16.mxu0 0
        %838 = vmatpush1.bf16.msra.mxu0 0
        %839 = vmatprep.mubr.bf16.mxu0 0
        %840 = vmatmul.mubr.bf16.gmra.mrb[0].mxu0 %v698
        %v841 = vpop.f32.mrb[0].mxu0
        %v842 = vadd.f32 %v720, %v841
        %v843 = vpop.f32.mrb[0].mxu0
        %v844 = vadd.f32 %v724, %v843
        %v845 = vpop.f32.mrb[0].mxu0
        %v846 = vadd.f32 %v720, %v845
        %v847 = vpop.f32.mrb[0].mxu0
        %v848 = vadd.f32 %v724, %v847
        %849 = vdwg.mxu0
        %v850 = vld [vmem:[#allocation11 + $0xc] sm:$0xf]
        %v851 = vld [vmem:[#allocation11 + $0x34] sm:$0xf]
        %v852 = vld [vmem:[#allocation11 + $0x5c] sm:$0xf]
        %v853 = vld [vmem:[#allocation11 + $0x84] sm:$0xf]
        %v854 = vld [vmem:[#allocation11 + $0xac] sm:$0xf]
        %v855 = vld [vmem:[#allocation11 + $0xd4] sm:$0xf]
        %v856 = vld [vmem:[#allocation11 + $0xfc] sm:$0xf]
        %v857 = vld [vmem:[#allocation11 + $0x124] sm:$0xf]
        %v858 = vld [vmem:[#allocation11 + $0x14c] sm:$0xf]
        %v859 = vld [vmem:[#allocation11 + $0x174] sm:$0xf]
        %v860 = vld [vmem:[#allocation11 + $0x19c] sm:$0xf]
        %v861 = vld [vmem:[#allocation11 + $0x1c4] sm:$0xf]
        %v862 = vld [vmem:[#allocation11 + $0x1ec] sm:$0xf]
        %v863 = vld [vmem:[#allocation11 + $0x214] sm:$0xf]
        %v864 = vld [vmem:[#allocation11 + $0x23c] sm:$0xf]
        %v865 = vld [vmem:[#allocation11 + $0x264] sm:$0xf]
        %v866 = vld [vmem:[%s6 + $0x3] sm:$0x1]
        %v867 = vmul.f32 %v693, 0.17677669
        %869 = vrot.lane.b32.xlu0 %v867, 96
        %v870 = vpop.permute.xlu0 %869
        %872 = vrot.lane.b32.xlu0 %v867, 64
        %v873 = vpop.permute.xlu0 %872
        %875 = vrot.lane.b32.xlu0 %v867, 32
        %v876 = vpop.permute.xlu0 %875
        %v878 = vpack.c.bf16 %v867, %v867
        %v879 = vpack.c.bf16 %v870, %v870
        %v880 = vpack.c.bf16 %v873, %v873
        %v881 = vpack.c.bf16 %v876, %v876
        %884 = vrot.lane.b32.xlu0 %v842, 96
        %v885 = vpop.permute.xlu0 %884
        %886 = vrot.lane.b32.xlu0 %v846, 96
        %v887 = vpop.permute.xlu0 %886
        %890 = vrot.lane.b32.xlu0 %v842, 64
        %v891 = vpop.permute.xlu0 %890
        %892 = vrot.lane.b32.xlu0 %v846, 64
        %v893 = vpop.permute.xlu0 %892
        %896 = vrot.lane.b32.xlu0 %v842, 32
        %v897 = vpop.permute.xlu0 %896
        %898 = vrot.lane.b32.xlu0 %v846, 32
        %v899 = vpop.permute.xlu0 %898
        %v902 = vpack.c.bf16 %v846, %v842
        %v903 = vpack.c.bf16 %v887, %v885
        %v904 = vpack.c.bf16 %v893, %v891
        %v905 = vpack.c.bf16 %v899, %v897
        %908 = vrot.lane.b32.xlu0 %v844, 96
        %v909 = vpop.permute.xlu0 %908
        %910 = vrot.lane.b32.xlu0 %v848, 96
        %v911 = vpop.permute.xlu0 %910
        %914 = vrot.lane.b32.xlu0 %v844, 64
        %v915 = vpop.permute.xlu0 %914
        %916 = vrot.lane.b32.xlu0 %v848, 64
        %v917 = vpop.permute.xlu0 %916
        %920 = vrot.lane.b32.xlu0 %v844, 32
        %v921 = vpop.permute.xlu0 %920
        %922 = vrot.lane.b32.xlu0 %v848, 32
        %v923 = vpop.permute.xlu0 %922
        %v926 = vpack.c.bf16 %v848, %v844
        %v927 = vpack.c.bf16 %v911, %v909
        %v928 = vpack.c.bf16 %v917, %v915
        %v929 = vpack.c.bf16 %v923, %v921
        %vm930 = vcmask 261120
        %v932 = vsel %vm930, %v878, 0
        %v935 = vsel %vm930, %v902, 0
        %937 = vmatprep.subr.bf16.mxu0 0
        %938 = vmatpush1.bf16.xpose.msra.mxu0 %v935
        %939 = vmatprep.subr.bf16.mxu0 0
        %940 = vmatpush1.bf16.xpose.msra.mxu0 0
        %941 = vmatprep.subr.bf16.mxu0 0
        %942 = vmatpush1.bf16.xpose.msra.mxu0 0
        %943 = vmatprep.subr.bf16.mxu0 0
        %944 = vmatpush1.bf16.xpose.msra.mxu0 0
        %945 = vmatprep.subr.bf16.mxu0 0
        %946 = vmatpush1.bf16.xpose.msra.mxu0 0
        %947 = vmatprep.subr.bf16.mxu0 0
        %948 = vmatpush1.bf16.xpose.msra.mxu0 0
        %949 = vmatprep.subr.bf16.mxu0 0
        %950 = vmatpush1.bf16.xpose.msra.mxu0 0
        %951 = vmatprep.subr.bf16.mxu0 0
        %952 = vmatpush1.bf16.xpose.msra.mxu0 0
        %953 = vmatprep.subr.bf16.mxu0 0
        %954 = vmatpush1.bf16.xpose.msra.mxu0 0
        %955 = vmatprep.subr.bf16.mxu0 0
        %956 = vmatpush1.bf16.xpose.msra.mxu0 0
        %957 = vmatprep.subr.bf16.mxu0 0
        %958 = vmatpush1.bf16.xpose.msra.mxu0 0
        %959 = vmatprep.subr.bf16.mxu0 0
        %960 = vmatpush1.bf16.xpose.msra.mxu0 0
        %961 = vmatprep.subr.bf16.mxu0 0
        %962 = vmatpush1.bf16.xpose.msra.mxu0 0
        %963 = vmatprep.subr.bf16.mxu0 0
        %964 = vmatpush1.bf16.xpose.msra.mxu0 0
        %965 = vmatprep.subr.bf16.mxu0 0
        %966 = vmatpush1.bf16.xpose.msra.mxu0 0
        %967 = vmatprep.subr.bf16.mxu0 0
        %968 = vmatpush1.bf16.xpose.msra.mxu0 0
        %969 = vmatprep.mubr.bf16.mxu0 0
        %970 = vmatmul.mubr.bf16.gmra.mrb[0].mxu0 %v932
        %v971 = vpop.f32.mrb[0].mxu0
        %v972 = vadd.f32 %v512, %v971
        %v973 = vpop.f32.mrb[0].mxu0
        %v974 = vpop.f32.mrb[0].mxu0
        %v975 = vpop.f32.mrb[0].mxu0
        %976 = vdwg.mxu0
        %v978 = vsel %vm930, %v879, 0
        %v981 = vsel %vm930, %v903, 0
        %983 = vmatprep.subr.bf16.mxu0 0
        %984 = vmatpush1.bf16.xpose.msra.mxu0 %v981
        %985 = vmatprep.subr.bf16.mxu0 0
        %986 = vmatpush1.bf16.xpose.msra.mxu0 0
        %987 = vmatprep.subr.bf16.mxu0 0
        %988 = vmatpush1.bf16.xpose.msra.mxu0 0
        %989 = vmatprep.subr.bf16.mxu0 0
        %990 = vmatpush1.bf16.xpose.msra.mxu0 0
        %991 = vmatprep.subr.bf16.mxu0 0
        %992 = vmatpush1.bf16.xpose.msra.mxu0 0
        %993 = vmatprep.subr.bf16.mxu0 0
        %994 = vmatpush1.bf16.xpose.msra.mxu0 0
        %995 = vmatprep.subr.bf16.mxu0 0
        %996 = vmatpush1.bf16.xpose.msra.mxu0 0
        %997 = vmatprep.subr.bf16.mxu0 0
        %998 = vmatpush1.bf16.xpose.msra.mxu0 0
        %999 = vmatprep.subr.bf16.mxu0 0
        %1000 = vmatpush1.bf16.xpose.msra.mxu0 0
        %1001 = vmatprep.subr.bf16.mxu0 0
        %1002 = vmatpush1.bf16.xpose.msra.mxu0 0
        %1003 = vmatprep.subr.bf16.mxu0 0
        %1004 = vmatpush1.bf16.xpose.msra.mxu0 0
        %1005 = vmatprep.subr.bf16.mxu0 0
        %1006 = vmatpush1.bf16.xpose.msra.mxu0 0
        %1007 = vmatprep.subr.bf16.mxu0 0
        %1008 = vmatpush1.bf16.xpose.msra.mxu0 0
        %1009 = vmatprep.subr.bf16.mxu0 0
        %1010 = vmatpush1.bf16.xpose.msra.mxu0 0
        %1011 = vmatprep.subr.bf16.mxu0 0
        %1012 = vmatpush1.bf16.xpose.msra.mxu0 0
        %1013 = vmatprep.subr.bf16.mxu0 0
        %1014 = vmatpush1.bf16.xpose.msra.mxu0 0
        %1015 = vmatprep.mubr.bf16.mxu0 0
        %1016 = vmatmul.mubr.bf16.gmra.mrb[0].mxu0 %v978
        %v1017 = vpop.f32.mrb[0].mxu0
        %v1018 = vadd.f32 %v512, %v1017
        %v1019 = vpop.f32.mrb[0].mxu0
        %v1020 = vpop.f32.mrb[0].mxu0
        %v1021 = vpop.f32.mrb[0].mxu0
        %1022 = vdwg.mxu0
        %v1024 = vsel %vm930, %v880, 0
        %v1027 = vsel %vm930, %v904, 0
        %1029 = vmatprep.subr.bf16.mxu0 0
        %1030 = vmatpush1.bf16.xpose.msra.mxu0 %v1027
        %1031 = vmatprep.subr.bf16.mxu0 0
        %1032 = vmatpush1.bf16.xpose.msra.mxu0 0
        %1033 = vmatprep.subr.bf16.mxu0 0
        %1034 = vmatpush1.bf16.xpose.msra.mxu0 0
        %1035 = vmatprep.subr.bf16.mxu0 0
        %1036 = vmatpush1.bf16.xpose.msra.mxu0 0
        %1037 = vmatprep.subr.bf16.mxu0 0
        %1038 = vmatpush1.bf16.xpose.msra.mxu0 0
        %1039 = vmatprep.subr.bf16.mxu0 0
        %1040 = vmatpush1.bf16.xpose.msra.mxu0 0
        %1041 = vmatprep.subr.bf16.mxu0 0
        %1042 = vmatpush1.bf16.xpose.msra.mxu0 0
        %1043 = vmatprep.subr.bf16.mxu0 0
        %1044 = vmatpush1.bf16.xpose.msra.mxu0 0
        %1045 = vmatprep.subr.bf16.mxu0 0
        %1046 = vmatpush1.bf16.xpose.msra.mxu0 0
        %1047 = vmatprep.subr.bf16.mxu0 0
        %1048 = vmatpush1.bf16.xpose.msra.mxu0 0
        %1049 = vmatprep.subr.bf16.mxu0 0
        %1050 = vmatpush1.bf16.xpose.msra.mxu0 0
        %1051 = vmatprep.subr.bf16.mxu0 0
        %1052 = vmatpush1.bf16.xpose.msra.mxu0 0
        %1053 = vmatprep.subr.bf16.mxu0 0
        %1054 = vmatpush1.bf16.xpose.msra.mxu0 0
        %1055 = vmatprep.subr.bf16.mxu0 0
        %1056 = vmatpush1.bf16.xpose.msra.mxu0 0
        %1057 = vmatprep.subr.bf16.mxu0 0
        %1058 = vmatpush1.bf16.xpose.msra.mxu0 0
        %1059 = vmatprep.subr.bf16.mxu0 0
        %1060 = vmatpush1.bf16.xpose.msra.mxu0 0
        %1061 = vmatprep.mubr.bf16.mxu0 0
        %1062 = vmatmul.mubr.bf16.gmra.mrb[0].mxu0 %v1024
        %v1063 = vpop.f32.mrb[0].mxu0
        %v1064 = vadd.f32 %v512, %v1063
        %v1065 = vpop.f32.mrb[0].mxu0
        %v1066 = vpop.f32.mrb[0].mxu0
        %v1067 = vpop.f32.mrb[0].mxu0
        %1068 = vdwg.mxu0
        %v1070 = vsel %vm930, %v881, 0
        %v1073 = vsel %vm930, %v905, 0
        %1075 = vmatprep.subr.bf16.mxu0 0
        %1076 = vmatpush1.bf16.xpose.msra.mxu0 %v1073
        %1077 = vmatprep.subr.bf16.mxu0 0
        %1078 = vmatpush1.bf16.xpose.msra.mxu0 0
        %1079 = vmatprep.subr.bf16.mxu0 0
        %1080 = vmatpush1.bf16.xpose.msra.mxu0 0
        %1081 = vmatprep.subr.bf16.mxu0 0
        %1082 = vmatpush1.bf16.xpose.msra.mxu0 0
        %1083 = vmatprep.subr.bf16.mxu0 0
        %1084 = vmatpush1.bf16.xpose.msra.mxu0 0
        %1085 = vmatprep.subr.bf16.mxu0 0
        %1086 = vmatpush1.bf16.xpose.msra.mxu0 0
        %1087 = vmatprep.subr.bf16.mxu0 0
        %1088 = vmatpush1.bf16.xpose.msra.mxu0 0
        %1089 = vmatprep.subr.bf16.mxu0 0
        %1090 = vmatpush1.bf16.xpose.msra.mxu0 0
        %1091 = vmatprep.subr.bf16.mxu0 0
        %1092 = vmatpush1.bf16.xpose.msra.mxu0 0
        %1093 = vmatprep.subr.bf16.mxu0 0
        %1094 = vmatpush1.bf16.xpose.msra.mxu0 0
        %1095 = vmatprep.subr.bf16.mxu0 0
        %1096 = vmatpush1.bf16.xpose.msra.mxu0 0
        %1097 = vmatprep.subr.bf16.mxu0 0
        %1098 = vmatpush1.bf16.xpose.msra.mxu0 0
        %1099 = vmatprep.subr.bf16.mxu0 0
        %1100 = vmatpush1.bf16.xpose.msra.mxu0 0
        %1101 = vmatprep.subr.bf16.mxu0 0
        %1102 = vmatpush1.bf16.xpose.msra.mxu0 0
        %1103 = vmatprep.subr.bf16.mxu0 0
        %1104 = vmatpush1.bf16.xpose.msra.mxu0 0
        %1105 = vmatprep.subr.bf16.mxu0 0
        %1106 = vmatpush1.bf16.xpose.msra.mxu0 0
        %1107 = vmatprep.mubr.bf16.mxu0 0
        %1108 = vmatmul.mubr.bf16.gmra.mrb[0].mxu0 %v1070
        %v1109 = vpop.f32.mrb[0].mxu0
        %v1110 = vadd.f32 %v512, %v1109
        %v1111 = vpop.f32.mrb[0].mxu0
        %v1112 = vpop.f32.mrb[0].mxu0
        %v1113 = vpop.f32.mrb[0].mxu0
        %1114 = vdwg.mxu0
        %vm1115 = vcmask 130048
        %v1116 = vsel %vm1115, %v972, -inf
        %1117 = vmax.xlane.f32.xlu0 %v1116
        %v1118 = vpop.xlane.xlu0 %1117
        %v1119 = vsel %vm1115, %v1018, -inf
        %1120 = vmax.xlane.f32.xlu0 %v1119
        %v1121 = vpop.xlane.xlu0 %1120
        %v1122 = vsel %vm1115, %v1064, -inf
        %1123 = vmax.xlane.f32.xlu0 %v1122
        %v1124 = vpop.xlane.xlu0 %1123
        %v1125 = vsel %vm1115, %v1110, -inf
        %1126 = vmax.xlane.f32.xlu0 %v1125
        %v1127 = vpop.xlane.xlu0 %1126
        %v1128 = vsub.f32 %v972, %v1118
        %v1129 = vsub.f32 %v1018, %v1121
        %v1130 = vsub.f32 %v1064, %v1124
        %v1131 = vsub.f32 %v1110, %v1127
        %v1132 = vmul.f32 %v1128, 1.442695
        %v1133 = vpow.pop %v1132
        %v1134 = vmul.f32 %v1129, 1.442695
        %v1135 = vpow.pop %v1134
        %v1136 = vmul.f32 %v1130, 1.442695
        %v1137 = vpow.pop %v1136
        %v1138 = vmul.f32 %v1131, 1.442695
        %v1139 = vpow.pop %v1138
        %v1140 = vsel %vm1115, %v1133, 0.0
        %1141 = vadd.xlane.f32.xlu0 %v1140
        %v1142 = vpop.xlane.xlu0 %1141
        %v1143 = vsel %vm1115, %v1135, 0.0
        %1144 = vadd.xlane.f32.xlu0 %v1143
        %v1145 = vpop.xlane.xlu0 %1144
        %v1146 = vsel %vm1115, %v1137, 0.0
        %1147 = vadd.xlane.f32.xlu0 %v1146
        %v1148 = vpop.xlane.xlu0 %1147
        %v1149 = vsel %vm1115, %v1139, 0.0
        %1150 = vadd.xlane.f32.xlu0 %v1149
        %v1151 = vpop.xlane.xlu0 %1150
        %v1152 = vpack.c.bf16 %v1133, %v1133
        %v1153 = vpack.c.bf16 %v1135, %v1135
        %v1154 = vpack.c.bf16 %v1137, %v1137
        %v1155 = vpack.c.bf16 %v1139, %v1139
        %v1157 = vsel %vm1115, %v1152, 0
        %1159 = vmatprep.subr.bf16.mxu0 0
        %1160 = vmatpush1.bf16.msra.mxu0 %v926
        %1161 = vmatprep.subr.bf16.mxu0 0
        %1162 = vmatpush1.bf16.msra.mxu0 0
        %1163 = vmatprep.subr.bf16.mxu0 0
        %1164 = vmatpush1.bf16.msra.mxu0 0
        %1165 = vmatprep.subr.bf16.mxu0 0
        %1166 = vmatpush1.bf16.msra.mxu0 0
        %1167 = vmatprep.subr.bf16.mxu0 0
        %1168 = vmatpush1.bf16.msra.mxu0 0
        %1169 = vmatprep.subr.bf16.mxu0 0
        %1170 = vmatpush1.bf16.msra.mxu0 0
        %1171 = vmatprep.subr.bf16.mxu0 0
        %1172 = vmatpush1.bf16.msra.mxu0 0
        %1173 = vmatprep.subr.bf16.mxu0 0
        %1174 = vmatpush1.bf16.msra.mxu0 0
        %1175 = vmatprep.subr.bf16.mxu0 0
        %1176 = vmatpush1.bf16.msra.mxu0 0
        %1177 = vmatprep.subr.bf16.mxu0 0
        %1178 = vmatpush1.bf16.msra.mxu0 0
        %1179 = vmatprep.subr.bf16.mxu0 0
        %1180 = vmatpush1.bf16.msra.mxu0 0
        %1181 = vmatprep.subr.bf16.mxu0 0
        %1182 = vmatpush1.bf16.msra.mxu0 0
        %1183 = vmatprep.subr.bf16.mxu0 0
        %1184 = vmatpush1.bf16.msra.mxu0 0
        %1185 = vmatprep.subr.bf16.mxu0 0
        %1186 = vmatpush1.bf16.msra.mxu0 0
        %1187 = vmatprep.subr.bf16.mxu0 0
        %1188 = vmatpush1.bf16.msra.mxu0 0
        %1189 = vmatprep.subr.bf16.mxu0 0
        %1190 = vmatpush1.bf16.msra.mxu0 0
        %1191 = vmatprep.mubr.bf16.mxu0 0
        %1192 = vmatmul.mubr.bf16.gmra.mrb[0].mxu0 %v1157
        %v1193 = vpop.f32.mrb[0].mxu0
        %v1194 = vadd.f32 0.0, %v1193
        %v1195 = vpop.f32.mrb[0].mxu0
        %v1196 = vpop.f32.mrb[0].mxu0
        %v1197 = vpop.f32.mrb[0].mxu0
        %1198 = vdwg.mxu0
        %v1200 = vsel %vm1115, %v1153, 0
        %1202 = vmatprep.subr.bf16.mxu0 0
        %1203 = vmatpush1.bf16.msra.mxu0 %v927
        %1204 = vmatprep.subr.bf16.mxu0 0
        %1205 = vmatpush1.bf16.msra.mxu0 0
        %1206 = vmatprep.subr.bf16.mxu0 0
        %1207 = vmatpush1.bf16.msra.mxu0 0
        %1208 = vmatprep.subr.bf16.mxu0 0
        %1209 = vmatpush1.bf16.msra.mxu0 0
        %1210 = vmatprep.subr.bf16.mxu0 0
        %1211 = vmatpush1.bf16.msra.mxu0 0
        %1212 = vmatprep.subr.bf16.mxu0 0
        %1213 = vmatpush1.bf16.msra.mxu0 0
        %1214 = vmatprep.subr.bf16.mxu0 0
        %1215 = vmatpush1.bf16.msra.mxu0 0
        %1216 = vmatprep.subr.bf16.mxu0 0
        %1217 = vmatpush1.bf16.msra.mxu0 0
        %1218 = vmatprep.subr.bf16.mxu0 0
        %1219 = vmatpush1.bf16.msra.mxu0 0
        %1220 = vmatprep.subr.bf16.mxu0 0
        %1221 = vmatpush1.bf16.msra.mxu0 0
        %1222 = vmatprep.subr.bf16.mxu0 0
        %1223 = vmatpush1.bf16.msra.mxu0 0
        %1224 = vmatprep.subr.bf16.mxu0 0
        %1225 = vmatpush1.bf16.msra.mxu0 0
        %1226 = vmatprep.subr.bf16.mxu0 0
        %1227 = vmatpush1.bf16.msra.mxu0 0
        %1228 = vmatprep.subr.bf16.mxu0 0
        %1229 = vmatpush1.bf16.msra.mxu0 0
        %1230 = vmatprep.subr.bf16.mxu0 0
        %1231 = vmatpush1.bf16.msra.mxu0 0
        %1232 = vmatprep.subr.bf16.mxu0 0
        %1233 = vmatpush1.bf16.msra.mxu0 0
        %1234 = vmatprep.mubr.bf16.mxu0 0
        %1235 = vmatmul.mubr.bf16.gmra.mrb[0].mxu0 %v1200
        %v1236 = vpop.f32.mrb[0].mxu0
        %v1237 = vadd.f32 0.0, %v1236
        %v1238 = vpop.f32.mrb[0].mxu0
        %v1239 = vpop.f32.mrb[0].mxu0
        %v1240 = vpop.f32.mrb[0].mxu0
        %1241 = vdwg.mxu0
        %v1243 = vsel %vm1115, %v1154, 0
        %1245 = vmatprep.subr.bf16.mxu0 0
        %1246 = vmatpush1.bf16.msra.mxu0 %v928
        %1247 = vmatprep.subr.bf16.mxu0 0
        %1248 = vmatpush1.bf16.msra.mxu0 0
        %1249 = vmatprep.subr.bf16.mxu0 0
        %1250 = vmatpush1.bf16.msra.mxu0 0
        %1251 = vmatprep.subr.bf16.mxu0 0
        %1252 = vmatpush1.bf16.msra.mxu0 0
        %1253 = vmatprep.subr.bf16.mxu0 0
        %1254 = vmatpush1.bf16.msra.mxu0 0
        %1255 = vmatprep.subr.bf16.mxu0 0
        %1256 = vmatpush1.bf16.msra.mxu0 0
        %1257 = vmatprep.subr.bf16.mxu0 0
        %1258 = vmatpush1.bf16.msra.mxu0 0
        %1259 = vmatprep.subr.bf16.mxu0 0
        %1260 = vmatpush1.bf16.msra.mxu0 0
        %1261 = vmatprep.subr.bf16.mxu0 0
        %1262 = vmatpush1.bf16.msra.mxu0 0
        %1263 = vmatprep.subr.bf16.mxu0 0
        %1264 = vmatpush1.bf16.msra.mxu0 0
        %1265 = vmatprep.subr.bf16.mxu0 0
        %1266 = vmatpush1.bf16.msra.mxu0 0
        %1267 = vmatprep.subr.bf16.mxu0 0
        %1268 = vmatpush1.bf16.msra.mxu0 0
        %1269 = vmatprep.subr.bf16.mxu0 0
        %1270 = vmatpush1.bf16.msra.mxu0 0
        %1271 = vmatprep.subr.bf16.mxu0 0
        %1272 = vmatpush1.bf16.msra.mxu0 0
        %1273 = vmatprep.subr.bf16.mxu0 0
        %1274 = vmatpush1.bf16.msra.mxu0 0
        %1275 = vmatprep.subr.bf16.mxu0 0
        %1276 = vmatpush1.bf16.msra.mxu0 0
        %1277 = vmatprep.mubr.bf16.mxu0 0
        %1278 = vmatmul.mubr.bf16.gmra.mrb[0].mxu0 %v1243
        %v1279 = vpop.f32.mrb[0].mxu0
        %v1280 = vadd.f32 0.0, %v1279
        %v1281 = vpop.f32.mrb[0].mxu0
        %v1282 = vpop.f32.mrb[0].mxu0
        %v1283 = vpop.f32.mrb[0].mxu0
        %1284 = vdwg.mxu0
        %v1286 = vsel %vm1115, %v1155, 0
        %1288 = vmatprep.subr.bf16.mxu0 0
        %1289 = vmatpush1.bf16.msra.mxu0 %v929
        %1290 = vmatprep.subr.bf16.mxu0 0
        %1291 = vmatpush1.bf16.msra.mxu0 0
        %1292 = vmatprep.subr.bf16.mxu0 0
        %1293 = vmatpush1.bf16.msra.mxu0 0
        %1294 = vmatprep.subr.bf16.mxu0 0
        %1295 = vmatpush1.bf16.msra.mxu0 0
        %1296 = vmatprep.subr.bf16.mxu0 0
        %1297 = vmatpush1.bf16.msra.mxu0 0
        %1298 = vmatprep.subr.bf16.mxu0 0
        %1299 = vmatpush1.bf16.msra.mxu0 0
        %1300 = vmatprep.subr.bf16.mxu0 0
        %1301 = vmatpush1.bf16.msra.mxu0 0
        %1302 = vmatprep.subr.bf16.mxu0 0
        %1303 = vmatpush1.bf16.msra.mxu0 0
        %1304 = vmatprep.subr.bf16.mxu0 0
        %1305 = vmatpush1.bf16.msra.mxu0 0
        %1306 = vmatprep.subr.bf16.mxu0 0
        %1307 = vmatpush1.bf16.msra.mxu0 0
        %1308 = vmatprep.subr.bf16.mxu0 0
        %1309 = vmatpush1.bf16.msra.mxu0 0
        %1310 = vmatprep.subr.bf16.mxu0 0
        %1311 = vmatpush1.bf16.msra.mxu0 0
        %1312 = vmatprep.subr.bf16.mxu0 0
        %1313 = vmatpush1.bf16.msra.mxu0 0
        %1314 = vmatprep.subr.bf16.mxu0 0
        %1315 = vmatpush1.bf16.msra.mxu0 0
        %1316 = vmatprep.subr.bf16.mxu0 0
        %1317 = vmatpush1.bf16.msra.mxu0 0
        %1318 = vmatprep.subr.bf16.mxu0 0
        %1319 = vmatpush1.bf16.msra.mxu0 0
        %1320 = vmatprep.mubr.bf16.mxu0 0
        %1321 = vmatmul.mubr.bf16.gmra.mrb[0].mxu0 %v1286
        %v1322 = vpop.f32.mrb[0].mxu0
        %v1323 = vadd.f32 0.0, %v1322
        %v1324 = vpop.f32.mrb[0].mxu0
        %v1325 = vpop.f32.mrb[0].mxu0
        %v1326 = vpop.f32.mrb[0].mxu0
        %1327 = vdwg.mxu0
        %v1328 = vrcp.pop %v1142
        %v1329 = vrcp.pop %v1145
        %v1330 = vrcp.pop %v1148
        %v1331 = vrcp.pop %v1151
        %v1332 = vmul.f32 %v1194, %v1328
        %v1333 = vmul.f32 %v1237, %v1329
        %v1334 = vmul.f32 %v1280, %v1330
        %v1335 = vmul.f32 %v1323, %v1331
        %1337 = vrot.lane.b32.xlu0 %v1333, 32
        %v1338 = vpop.permute.xlu0 %1337
        %1341 = vrot.lane.b32.xlu0 %v1334, 64
        %v1342 = vpop.permute.xlu0 %1341
        %1345 = vrot.lane.b32.xlu0 %v1335, 96
        %v1346 = vpop.permute.xlu0 %1345
        %v1348 = vsel %vm930, %v1332, %v1338
        %vm1349 = vcmask 523264
        %v1350 = vsel %vm1349, %v1348, %v1342
        %vm1351 = vcmask 785408
        %v1352 = vsel %vm1351, %v1350, %v1346
        %v1353 = vpack.c.bf16 %v1352, %v1352
        %v1355 = vlaneseq
        %v1356 = vshrl.u32 %v1355, 7
        %v1357 = vsub.s32 0, %v1356
        %v1358 = vrot.slane %v866, %v1357
        %v1376 = vunpack.c.l.b16 %v850
        %v1377 = vunpack.c.l.b16 %v851
        %v1378 = vunpack.c.l.b16 %v852
        %v1379 = vunpack.c.l.b16 %v853
        %v1380 = vunpack.c.l.b16 %v854
        %v1381 = vunpack.c.l.b16 %v855
        %v1382 = vunpack.c.l.b16 %v856
        %v1383 = vunpack.c.l.b16 %v857
        %v1384 = vunpack.c.l.b16 %v858
        %v1385 = vunpack.c.l.b16 %v859
        %v1386 = vunpack.c.l.b16 %v860
        %v1387 = vunpack.c.l.b16 %v861
        %v1388 = vunpack.c.l.b16 %v862
        %v1389 = vunpack.c.l.b16 %v863
        %v1390 = vunpack.c.l.b16 %v864
        %v1391 = vunpack.c.l.b16 %v865
        %v1392 = vpack.c.b16 %v1377, %v1376
        %v1393 = vpack.c.b16 %v1379, %v1378
        %v1394 = vpack.c.b16 %v1381, %v1380
        %v1395 = vpack.c.b16 %v1383, %v1382
        %v1396 = vpack.c.b16 %v1385, %v1384
        %v1397 = vpack.c.b16 %v1387, %v1386
        %v1398 = vpack.c.b16 %v1389, %v1388
        %v1399 = vpack.c.b16 %v1391, %v1390
        %1408 = vmatprep.subr.bf16.mxu0 0
        %1409 = vmatpush1.bf16.msra.mxu0 %v1392
        %1410 = vmatprep.subr.bf16.mxu0 0
        %1411 = vmatpush1.bf16.msra.mxu0 %v1393
        %1412 = vmatprep.subr.bf16.mxu0 0
        %1413 = vmatpush1.bf16.msra.mxu0 %v1394
        %1414 = vmatprep.subr.bf16.mxu0 0
        %1415 = vmatpush1.bf16.msra.mxu0 %v1395
        %1416 = vmatprep.subr.bf16.mxu0 0
        %1417 = vmatpush1.bf16.msra.mxu0 %v1396
        %1418 = vmatprep.subr.bf16.mxu0 0
        %1419 = vmatpush1.bf16.msra.mxu0 %v1397
        %1420 = vmatprep.subr.bf16.mxu0 0
        %1421 = vmatpush1.bf16.msra.mxu0 %v1398
        %1422 = vmatprep.subr.bf16.mxu0 0
        %1423 = vmatpush1.bf16.msra.mxu0 %v1399
        %1424 = vmatprep.subr.bf16.mxu0 0
        %1425 = vmatpush1.bf16.msra.mxu0 0
        %1426 = vmatprep.subr.bf16.mxu0 0
        %1427 = vmatpush1.bf16.msra.mxu0 0
        %1428 = vmatprep.subr.bf16.mxu0 0
        %1429 = vmatpush1.bf16.msra.mxu0 0
        %1430 = vmatprep.subr.bf16.mxu0 0
        %1431 = vmatpush1.bf16.msra.mxu0 0
        %1432 = vmatprep.subr.bf16.mxu0 0
        %1433 = vmatpush1.bf16.msra.mxu0 0
        %1434 = vmatprep.subr.bf16.mxu0 0
        %1435 = vmatpush1.bf16.msra.mxu0 0
        %1436 = vmatprep.subr.bf16.mxu0 0
        %1437 = vmatpush1.bf16.msra.mxu0 0
        %1438 = vmatprep.subr.bf16.mxu0 0
        %1439 = vmatpush1.bf16.msra.mxu0 0
        %1440 = vmatprep.mubr.bf16.mxu0 0
        %1441 = vmatmul.mubr.bf16.gmra.mrb[0].mxu0 %v1353
        %v1442 = vpop.f32.mrb[0].mxu0
        %v1443 = vadd.f32 %v1358, %v1442
        %v1444 = vpop.f32.mrb[0].mxu0
        %v1445 = vpop.f32.mrb[0].mxu0
        %v1446 = vpop.f32.mrb[0].mxu0
        %1447 = vdwg.mxu0
        %v1448 = vadd.f32 %v505, %v1443
        %1449 = vadd.xlane.f32.xlu0 %v1448
        %v1450 = vpop.xlane.xlu0 %1449
        %v1451 = vmul.f32 %v1450, %v524
        %v1452 = vsub.f32 %v1448, %v1451
        %v1453 = vmul.f32 %v1452, %v1452
        %1454 = vadd.xlane.f32.xlu0 %v1453
        %v1455 = vpop.xlane.xlu0 %1454
        %v1456 = vmul.f32 %v1455, %v530
        %v1457 = vrsqrt.pop %v1456
        %v1458 = vmul.f32 %v1456, %v1457
        %vm1459 = vcmp.eq.f32.partialorder %v1456, inf
        %v1460 = vsel %vm1459, %v1456, %v1458
        %vm1461 = vcmp.eq.f32.partialorder %v1456, 0.0
        %v1462 = vand.u32 %v1456, 2147483648
        %v1463 = vsel %vm1461, %v1462, %v1460
        %v1464 = vadd.f32 %v1463, 1e-06
        %v1465 = vrcp.pop %v1464
        %v1466 = vstv %s518
        %v1467 = vmul.f32 %v1466, %v1452
        %v1468 = vmul.f32 %v1467, %v1465
        %v1469 = vstv %s519
        %v1470 = vadd.f32 %v1468, %v1469
        %v1471 = vpack.c.bf16 %v1470, %v1470
        %v1472 = vld [vmem:[#allocation11 + $0x10] sm:$0xf]
        %v1473 = vld [vmem:[#allocation11 + $0x38] sm:$0xf]
        %v1474 = vld [vmem:[#allocation11 + $0x60] sm:$0xf]
        %v1475 = vld [vmem:[#allocation11 + $0x88] sm:$0xf]
        %v1476 = vld [vmem:[#allocation11 + $0xb0] sm:$0xf]
        %v1477 = vld [vmem:[#allocation11 + $0xd8] sm:$0xf]
        %v1478 = vld [vmem:[#allocation11 + $0x100] sm:$0xf]
        %v1479 = vld [vmem:[#allocation11 + $0x128] sm:$0xf]
        %v1480 = vld [vmem:[#allocation11 + $0x150] sm:$0xf]
        %v1481 = vld [vmem:[#allocation11 + $0x178] sm:$0xf]
        %v1482 = vld [vmem:[#allocation11 + $0x1a0] sm:$0xf]
        %v1483 = vld [vmem:[#allocation11 + $0x1c8] sm:$0xf]
        %v1484 = vld [vmem:[#allocation11 + $0x1f0] sm:$0xf]
        %v1485 = vld [vmem:[#allocation11 + $0x218] sm:$0xf]
        %v1486 = vld [vmem:[#allocation11 + $0x240] sm:$0xf]
        %v1487 = vld [vmem:[#allocation11 + $0x268] sm:$0xf]
        %v1488 = vld [vmem:[%s6 + $0x4] sm:$0x1]
        %v1490 = vlaneseq
        %v1491 = vshrl.u32 %v1490, 7
        %v1492 = vsub.s32 0, %v1491
        %v1493 = vrot.slane %v1488, %v1492
        %v1511 = vunpack.c.l.b16 %v1472
        %v1512 = vunpack.c.l.b16 %v1473
        %v1513 = vunpack.c.l.b16 %v1474
        %v1514 = vunpack.c.l.b16 %v1475
        %v1515 = vunpack.c.l.b16 %v1476
        %v1516 = vunpack.c.l.b16 %v1477
        %v1517 = vunpack.c.l.b16 %v1478
        %v1518 = vunpack.c.l.b16 %v1479
        %v1519 = vunpack.c.l.b16 %v1480
        %v1520 = vunpack.c.l.b16 %v1481
        %v1521 = vunpack.c.l.b16 %v1482
        %v1522 = vunpack.c.l.b16 %v1483
        %v1523 = vunpack.c.l.b16 %v1484
        %v1524 = vunpack.c.l.b16 %v1485
        %v1525 = vunpack.c.l.b16 %v1486
        %v1526 = vunpack.c.l.b16 %v1487
        %v1527 = vpack.c.b16 %v1512, %v1511
        %v1528 = vpack.c.b16 %v1514, %v1513
        %v1529 = vpack.c.b16 %v1516, %v1515
        %v1530 = vpack.c.b16 %v1518, %v1517
        %v1531 = vpack.c.b16 %v1520, %v1519
        %v1532 = vpack.c.b16 %v1522, %v1521
        %v1533 = vpack.c.b16 %v1524, %v1523
        %v1534 = vpack.c.b16 %v1526, %v1525
        %1543 = vmatprep.subr.bf16.mxu0 0
        %1544 = vmatpush1.bf16.msra.mxu0 %v1527
        %1545 = vmatprep.subr.bf16.mxu0 0
        %1546 = vmatpush1.bf16.msra.mxu0 %v1528
        %1547 = vmatprep.subr.bf16.mxu0 0
        %1548 = vmatpush1.bf16.msra.mxu0 %v1529
        %1549 = vmatprep.subr.bf16.mxu0 0
        %1550 = vmatpush1.bf16.msra.mxu0 %v1530
        %1551 = vmatprep.subr.bf16.mxu0 0
        %1552 = vmatpush1.bf16.msra.mxu0 %v1531
        %1553 = vmatprep.subr.bf16.mxu0 0
        %1554 = vmatpush1.bf16.msra.mxu0 %v1532
        %1555 = vmatprep.subr.bf16.mxu0 0
        %1556 = vmatpush1.bf16.msra.mxu0 %v1533
        %1557 = vmatprep.subr.bf16.mxu0 0
        %1558 = vmatpush1.bf16.msra.mxu0 %v1534
        %1559 = vmatprep.subr.bf16.mxu0 0
        %1560 = vmatpush1.bf16.msra.mxu0 0
        %1561 = vmatprep.subr.bf16.mxu0 0
        %1562 = vmatpush1.bf16.msra.mxu0 0
        %1563 = vmatprep.subr.bf16.mxu0 0
        %1564 = vmatpush1.bf16.msra.mxu0 0
        %1565 = vmatprep.subr.bf16.mxu0 0
        %1566 = vmatpush1.bf16.msra.mxu0 0
        %1567 = vmatprep.subr.bf16.mxu0 0
        %1568 = vmatpush1.bf16.msra.mxu0 0
        %1569 = vmatprep.subr.bf16.mxu0 0
        %1570 = vmatpush1.bf16.msra.mxu0 0
        %1571 = vmatprep.subr.bf16.mxu0 0
        %1572 = vmatpush1.bf16.msra.mxu0 0
        %1573 = vmatprep.subr.bf16.mxu0 0
        %1574 = vmatpush1.bf16.msra.mxu0 0
        %1575 = vmatprep.mubr.bf16.mxu0 0
        %1576 = vmatmul.mubr.bf16.gmra.mrb[0].mxu0 %v1471
        %v1577 = vpop.f32.mrb[0].mxu0
        %v1578 = vadd.f32 %v1493, %v1577
        %v1579 = vpop.f32.mrb[0].mxu0
        %v1580 = vpop.f32.mrb[0].mxu0
        %v1581 = vpop.f32.mrb[0].mxu0
        %1582 = vdwg.mxu0
        %v1583 = vpack.c.bf16 %v507, %v506
        %v1584 = vpack.c.bf16 %v509, %v508
        %v1585 = vld [vmem:[#allocation11 + $0x14] sm:$0xff]
        %v1586 = vld [vmem:[#allocation11 + $0x3c] sm:$0xff]
        %v1587 = vld [vmem:[#allocation11 + $0x64] sm:$0xff]
        %v1588 = vld [vmem:[#allocation11 + $0x8c] sm:$0xff]
        %v1589 = vld [vmem:[#allocation11 + $0xb4] sm:$0xff]
        %v1590 = vld [vmem:[#allocation11 + $0xdc] sm:$0xff]
        %v1591 = vld [vmem:[#allocation11 + $0x104] sm:$0xff]
        %v1592 = vld [vmem:[#allocation11 + $0x12c] sm:$0xff]
        %v1593 = vld [vmem:[#allocation11 + $0x154] sm:$0xff]
        %v1594 = vld [vmem:[#allocation11 + $0x17c] sm:$0xff]
        %v1595 = vld [vmem:[#allocation11 + $0x1a4] sm:$0xff]
        %v1596 = vld [vmem:[#allocation11 + $0x1cc] sm:$0xff]
        %v1597 = vld [vmem:[#allocation11 + $0x1f4] sm:$0xff]
        %v1598 = vld [vmem:[#allocation11 + $0x21c] sm:$0xff]
        %v1599 = vld [vmem:[#allocation11 + $0x244] sm:$0xff]
        %v1600 = vld [vmem:[#allocation11 + $0x26c] sm:$0xff]
        %v1601 = vld [vmem:[%s6 + $0x5] sm:$0x3]
        %v1603 = vlaneseq
        %v1604 = vshrl.u32 %v1603, 7
        %v1605 = vsub.s32 0, %v1604
        %v1606 = vrot.slane %v1601, %v1605
        %v1607 = vlaneseq
        %v1608 = vshrl.u32 %v1607, 7
        %v1609 = vsub.s32 1, %v1608
        %v1610 = vrot.slane %v1601, %v1609
        %v1629 = vunpack.c.l.b16 %v1585
        %v1630 = vunpack.c.h.b16 %v1585
        %v1631 = vunpack.c.l.b16 %v1586
        %v1632 = vunpack.c.h.b16 %v1586
        %v1633 = vunpack.c.l.b16 %v1587
        %v1634 = vunpack.c.h.b16 %v1587
        %v1635 = vunpack.c.l.b16 %v1588
        %v1636 = vunpack.c.h.b16 %v1588
        %v1637 = vunpack.c.l.b16 %v1589
        %v1638 = vunpack.c.h.b16 %v1589
        %v1639 = vunpack.c.l.b16 %v1590
        %v1640 = vunpack.c.h.b16 %v1590
        %v1641 = vunpack.c.l.b16 %v1591
        %v1642 = vunpack.c.h.b16 %v1591
        %v1643 = vunpack.c.l.b16 %v1592
        %v1644 = vunpack.c.h.b16 %v1592
        %v1645 = vunpack.c.l.b16 %v1593
        %v1646 = vunpack.c.h.b16 %v1593
        %v1647 = vunpack.c.l.b16 %v1594
        %v1648 = vunpack.c.h.b16 %v1594
        %v1649 = vunpack.c.l.b16 %v1595
        %v1650 = vunpack.c.h.b16 %v1595
        %v1651 = vunpack.c.l.b16 %v1596
        %v1652 = vunpack.c.h.b16 %v1596
        %v1653 = vunpack.c.l.b16 %v1597
        %v1654 = vunpack.c.h.b16 %v1597
        %v1655 = vunpack.c.l.b16 %v1598
        %v1656 = vunpack.c.h.b16 %v1598
        %v1657 = vunpack.c.l.b16 %v1599
        %v1658 = vunpack.c.h.b16 %v1599
        %v1659 = vunpack.c.l.b16 %v1600
        %v1660 = vunpack.c.h.b16 %v1600
        %v1661 = vpack.c.b16 %v1631, %v1629
        %v1662 = vpack.c.b16 %v1632, %v1630
        %v1663 = vpack.c.b16 %v1635, %v1633
        %v1664 = vpack.c.b16 %v1636, %v1634
        %v1665 = vpack.c.b16 %v1639, %v1637
        %v1666 = vpack.c.b16 %v1640, %v1638
        %v1667 = vpack.c.b16 %v1643, %v1641
        %v1668 = vpack.c.b16 %v1644, %v1642
        %v1669 = vpack.c.b16 %v1647, %v1645
        %v1670 = vpack.c.b16 %v1648, %v1646
        %v1671 = vpack.c.b16 %v1651, %v1649
        %v1672 = vpack.c.b16 %v1652, %v1650
        %v1673 = vpack.c.b16 %v1655, %v1653
        %v1674 = vpack.c.b16 %v1656, %v1654
        %v1675 = vpack.c.b16 %v1659, %v1657
        %v1676 = vpack.c.b16 %v1660, %v1658
        %1693 = vmatprep.subr.bf16.mxu0 %v1662
        %1694 = vmatpush1.bf16.msra.mxu0 %v1661
        %1695 = vmatprep.subr.bf16.mxu0 %v1664
        %1696 = vmatpush1.bf16.msra.mxu0 %v1663
        %1697 = vmatprep.subr.bf16.mxu0 %v1666
        %1698 = vmatpush1.bf16.msra.mxu0 %v1665
        %1699 = vmatprep.subr.bf16.mxu0 %v1668
        %1700 = vmatpush1.bf16.msra.mxu0 %v1667
        %1701 = vmatprep.subr.bf16.mxu0 %v1670
        %1702 = vmatpush1.bf16.msra.mxu0 %v1669
        %1703 = vmatprep.subr.bf16.mxu0 %v1672
        %1704 = vmatpush1.bf16.msra.mxu0 %v1671
        %1705 = vmatprep.subr.bf16.mxu0 %v1674
        %1706 = vmatpush1.bf16.msra.mxu0 %v1673
        %1707 = vmatprep.subr.bf16.mxu0 %v1676
        %1708 = vmatpush1.bf16.msra.mxu0 %v1675
        %1709 = vmatprep.subr.bf16.mxu0 0
        %1710 = vmatpush1.bf16.msra.mxu0 0
        %1711 = vmatprep.subr.bf16.mxu0 0
        %1712 = vmatpush1.bf16.msra.mxu0 0
        %1713 = vmatprep.subr.bf16.mxu0 0
        %1714 = vmatpush1.bf16.msra.mxu0 0
        %1715 = vmatprep.subr.bf16.mxu0 0
        %1716 = vmatpush1.bf16.msra.mxu0 0
        %1717 = vmatprep.subr.bf16.mxu0 0
        %1718 = vmatpush1.bf16.msra.mxu0 0
        %1719 = vmatprep.subr.bf16.mxu0 0
        %1720 = vmatpush1.bf16.msra.mxu0 0
        %1721 = vmatprep.subr.bf16.mxu0 0
        %1722 = vmatpush1.bf16.msra.mxu0 0
        %1723 = vmatprep.subr.bf16.mxu0 0
        %1724 = vmatpush1.bf16.msra.mxu0 0
        %1725 = vmatprep.mubr.bf16.mxu0 0
        %1726 = vmatmul.mubr.bf16.gmra.mrb[0].mxu0 %v1583
        %v1727 = vpop.f32.mrb[0].mxu0
        %v1728 = vadd.f32 %v1606, %v1727
        %v1729 = vpop.f32.mrb[0].mxu0
        %v1730 = vadd.f32 %v1610, %v1729
        %v1731 = vpop.f32.mrb[0].mxu0
        %v1732 = vadd.f32 %v1606, %v1731
        %v1733 = vpop.f32.mrb[0].mxu0
        %v1734 = vadd.f32 %v1610, %v1733
        %1735 = vmatprep.mubr.bf16.mxu0 0
        %1736 = vmatmul.mubr.bf16.gmra.mrb[0].mxu0 %v1584
        %v1737 = vpop.f32.mrb[0].mxu0
        %v1738 = vadd.f32 %v1606, %v1737
        %v1739 = vpop.f32.mrb[0].mxu0
        %v1740 = vadd.f32 %v1610, %v1739
        %v1741 = vpop.f32.mrb[0].mxu0
        %v1742 = vadd.f32 %v1606, %v1741
        %v1743 = vpop.f32.mrb[0].mxu0
        %v1744 = vadd.f32 %v1610, %v1743
        %1745 = vdwg.mxu0
        %v1746 = vld [vmem:[#allocation11 + $0x1c] sm:$0xf]
        %v1747 = vld [vmem:[#allocation11 + $0x44] sm:$0xf]
        %v1748 = vld [vmem:[#allocation11 + $0x6c] sm:$0xf]
        %v1749 = vld [vmem:[#allocation11 + $0x94] sm:$0xf]
        %v1750 = vld [vmem:[#allocation11 + $0xbc] sm:$0xf]
        %v1751 = vld [vmem:[#allocation11 + $0xe4] sm:$0xf]
        %v1752 = vld [vmem:[#allocation11 + $0x10c] sm:$0xf]
        %v1753 = vld [vmem:[#allocation11 + $0x134] sm:$0xf]
        %v1754 = vld [vmem:[#allocation11 + $0x15c] sm:$0xf]
        %v1755 = vld [vmem:[#allocation11 + $0x184] sm:$0xf]
        %v1756 = vld [vmem:[#allocation11 + $0x1ac] sm:$0xf]
        %v1757 = vld [vmem:[#allocation11 + $0x1d4] sm:$0xf]
        %v1758 = vld [vmem:[#allocation11 + $0x1fc] sm:$0xf]
        %v1759 = vld [vmem:[#allocation11 + $0x224] sm:$0xf]
        %v1760 = vld [vmem:[#allocation11 + $0x24c] sm:$0xf]
        %v1761 = vld [vmem:[#allocation11 + $0x274] sm:$0xf]
        %v1762 = vld [vmem:[%s6 + $0x7] sm:$0x1]
        %v1763 = vmul.f32 %v1578, 0.17677669
        %1765 = vrot.lane.b32.xlu0 %v1763, 96
        %v1766 = vpop.permute.xlu0 %1765
        %1768 = vrot.lane.b32.xlu0 %v1763, 64
        %v1769 = vpop.permute.xlu0 %1768
        %1771 = vrot.lane.b32.xlu0 %v1763, 32
        %v1772 = vpop.permute.xlu0 %1771
        %v1774 = vpack.c.bf16 %v1763, %v1763
        %v1775 = vpack.c.bf16 %v1766, %v1766
        %v1776 = vpack.c.bf16 %v1769, %v1769
        %v1777 = vpack.c.bf16 %v1772, %v1772
        %1782 = vrot.lane.b32.xlu0 %v1728, 96
        %v1783 = vpop.permute.xlu0 %1782
        %1784 = vrot.lane.b32.xlu0 %v1732, 96
        %v1785 = vpop.permute.xlu0 %1784
        %1786 = vrot.lane.b32.xlu0 %v1738, 96
        %v1787 = vpop.permute.xlu0 %1786
        %1788 = vrot.lane.b32.xlu0 %v1742, 96
        %v1789 = vpop.permute.xlu0 %1788
        %1794 = vrot.lane.b32.xlu0 %v1728, 64
        %v1795 = vpop.permute.xlu0 %1794
        %1796 = vrot.lane.b32.xlu0 %v1732, 64
        %v1797 = vpop.permute.xlu0 %1796
        %1798 = vrot.lane.b32.xlu0 %v1738, 64
        %v1799 = vpop.permute.xlu0 %1798
        %1800 = vrot.lane.b32.xlu0 %v1742, 64
        %v1801 = vpop.permute.xlu0 %1800
        %1806 = vrot.lane.b32.xlu0 %v1728, 32
        %v1807 = vpop.permute.xlu0 %1806
        %1808 = vrot.lane.b32.xlu0 %v1732, 32
        %v1809 = vpop.permute.xlu0 %1808
        %1810 = vrot.lane.b32.xlu0 %v1738, 32
        %v1811 = vpop.permute.xlu0 %1810
        %1812 = vrot.lane.b32.xlu0 %v1742, 32
        %v1813 = vpop.permute.xlu0 %1812
        %v1818 = vpack.c.bf16 %v1732, %v1728
        %v1819 = vpack.c.bf16 %v1742, %v1738
        %v1820 = vpack.c.bf16 %v1785, %v1783
        %v1821 = vpack.c.bf16 %v1789, %v1787
        %v1822 = vpack.c.bf16 %v1797, %v1795
        %v1823 = vpack.c.bf16 %v1801, %v1799
        %v1824 = vpack.c.bf16 %v1809, %v1807
        %v1825 = vpack.c.bf16 %v1813, %v1811
        %1830 = vrot.lane.b32.xlu0 %v1730, 96
        %v1831 = vpop.permute.xlu0 %1830
        %1832 = vrot.lane.b32.xlu0 %v1734, 96
        %v1833 = vpop.permute.xlu0 %1832
        %1834 = vrot.lane.b32.xlu0 %v1740, 96
        %v1835 = vpop.permute.xlu0 %1834
        %1836 = vrot.lane.b32.xlu0 %v1744, 96
        %v1837 = vpop.permute.xlu0 %1836
        %1842 = vrot.lane.b32.xlu0 %v1730, 64
        %v1843 = vpop.permute.xlu0 %1842
        %1844 = vrot.lane.b32.xlu0 %v1734, 64
        %v1845 = vpop.permute.xlu0 %1844
        %1846 = vrot.lane.b32.xlu0 %v1740, 64
        %v1847 = vpop.permute.xlu0 %1846
        %1848 = vrot.lane.b32.xlu0 %v1744, 64
        %v1849 = vpop.permute.xlu0 %1848
        %1854 = vrot.lane.b32.xlu0 %v1730, 32
        %v1855 = vpop.permute.xlu0 %1854
        %1856 = vrot.lane.b32.xlu0 %v1734, 32
        %v1857 = vpop.permute.xlu0 %1856
        %1858 = vrot.lane.b32.xlu0 %v1740, 32
        %v1859 = vpop.permute.xlu0 %1858
        %1860 = vrot.lane.b32.xlu0 %v1744, 32
        %v1861 = vpop.permute.xlu0 %1860
        %v1866 = vpack.c.bf16 %v1734, %v1730
        %v1867 = vpack.c.bf16 %v1744, %v1740
        %v1868 = vpack.c.bf16 %v1833, %v1831
        %v1869 = vpack.c.bf16 %v1837, %v1835
        %v1870 = vpack.c.bf16 %v1845, %v1843
        %v1871 = vpack.c.bf16 %v1849, %v1847
        %v1872 = vpack.c.bf16 %v1857, %v1855
        %v1873 = vpack.c.bf16 %v1861, %v1859
        %v1875 = vsel %vm930, %v1774, 0
        %v1878 = vsel %vm930, %v1818, 0
        %v1881 = vsel %vm930, %v1819, 0
        %1883 = vmatprep.subr.bf16.mxu0 0
        %1884 = vmatpush1.bf16.xpose.msra.mxu0 %v1878
        %1885 = vmatprep.subr.bf16.mxu0 0
        %1886 = vmatpush1.bf16.xpose.msra.mxu0 %v1881
        %1887 = vmatprep.subr.bf16.mxu0 0
        %1888 = vmatpush1.bf16.xpose.msra.mxu0 0
        %1889 = vmatprep.subr.bf16.mxu0 0
        %1890 = vmatpush1.bf16.xpose.msra.mxu0 0
        %1891 = vmatprep.subr.bf16.mxu0 0
        %1892 = vmatpush1.bf16.xpose.msra.mxu0 0
        %1893 = vmatprep.subr.bf16.mxu0 0
        %1894 = vmatpush1.bf16.xpose.msra.mxu0 0
        %1895 = vmatprep.subr.bf16.mxu0 0
        %1896 = vmatpush1.bf16.xpose.msra.mxu0 0
        %1897 = vmatprep.subr.bf16.mxu0 0
        %1898 = vmatpush1.bf16.xpose.msra.mxu0 0
        %1899 = vmatprep.subr.bf16.mxu0 0
        %1900 = vmatpush1.bf16.xpose.msra.mxu0 0
        %1901 = vmatprep.subr.bf16.mxu0 0
        %1902 = vmatpush1.bf16.xpose.msra.mxu0 0
        %1903 = vmatprep.subr.bf16.mxu0 0
        %1904 = vmatpush1.bf16.xpose.msra.mxu0 0
        %1905 = vmatprep.subr.bf16.mxu0 0
        %1906 = vmatpush1.bf16.xpose.msra.mxu0 0
        %1907 = vmatprep.subr.bf16.mxu0 0
        %1908 = vmatpush1.bf16.xpose.msra.mxu0 0
        %1909 = vmatprep.subr.bf16.mxu0 0
        %1910 = vmatpush1.bf16.xpose.msra.mxu0 0
        %1911 = vmatprep.subr.bf16.mxu0 0
        %1912 = vmatpush1.bf16.xpose.msra.mxu0 0
        %1913 = vmatprep.subr.bf16.mxu0 0
        %1914 = vmatpush1.bf16.xpose.msra.mxu0 0
        %1915 = vmatprep.mubr.bf16.mxu0 0
        %1916 = vmatmul.mubr.bf16.gmra.mrb[0].mxu0 %v1875
        %v1917 = vpop.f32.mrb[0].mxu0
        %v1918 = vadd.f32 %v515, %v1917
        %v1919 = vpop.f32.mrb[0].mxu0
        %v1920 = vpop.f32.mrb[0].mxu0
        %v1921 = vpop.f32.mrb[0].mxu0
        %1922 = vdwg.mxu0
        %v1924 = vsel %vm930, %v1775, 0
        %v1927 = vsel %vm930, %v1820, 0
        %v1930 = vsel %vm930, %v1821, 0
        %1932 = vmatprep.subr.bf16.mxu0 0
        %1933 = vmatpush1.bf16.xpose.msra.mxu0 %v1927
        %1934 = vmatprep.subr.bf16.mxu0 0
        %1935 = vmatpush1.bf16.xpose.msra.mxu0 %v1930
        %1936 = vmatprep.subr.bf16.mxu0 0
        %1937 = vmatpush1.bf16.xpose.msra.mxu0 0
        %1938 = vmatprep.subr.bf16.mxu0 0
        %1939 = vmatpush1.bf16.xpose.msra.mxu0 0
        %1940 = vmatprep.subr.bf16.mxu0 0
        %1941 = vmatpush1.bf16.xpose.msra.mxu0 0
        %1942 = vmatprep.subr.bf16.mxu0 0
        %1943 = vmatpush1.bf16.xpose.msra.mxu0 0
        %1944 = vmatprep.subr.bf16.mxu0 0
        %1945 = vmatpush1.bf16.xpose.msra.mxu0 0
        %1946 = vmatprep.subr.bf16.mxu0 0
        %1947 = vmatpush1.bf16.xpose.msra.mxu0 0
        %1948 = vmatprep.subr.bf16.mxu0 0
        %1949 = vmatpush1.bf16.xpose.msra.mxu0 0
        %1950 = vmatprep.subr.bf16.mxu0 0
        %1951 = vmatpush1.bf16.xpose.msra.mxu0 0
        %1952 = vmatprep.subr.bf16.mxu0 0
        %1953 = vmatpush1.bf16.xpose.msra.mxu0 0
        %1954 = vmatprep.subr.bf16.mxu0 0
        %1955 = vmatpush1.bf16.xpose.msra.mxu0 0
        %1956 = vmatprep.subr.bf16.mxu0 0
        %1957 = vmatpush1.bf16.xpose.msra.mxu0 0
        %1958 = vmatprep.subr.bf16.mxu0 0
        %1959 = vmatpush1.bf16.xpose.msra.mxu0 0
        %1960 = vmatprep.subr.bf16.mxu0 0
        %1961 = vmatpush1.bf16.xpose.msra.mxu0 0
        %1962 = vmatprep.subr.bf16.mxu0 0
        %1963 = vmatpush1.bf16.xpose.msra.mxu0 0
        %1964 = vmatprep.mubr.bf16.mxu0 0
        %1965 = vmatmul.mubr.bf16.gmra.mrb[0].mxu0 %v1924
        %v1966 = vpop.f32.mrb[0].mxu0
        %v1967 = vadd.f32 %v515, %v1966
        %v1968 = vpop.f32.mrb[0].mxu0
        %v1969 = vpop.f32.mrb[0].mxu0
        %v1970 = vpop.f32.mrb[0].mxu0
        %1971 = vdwg.mxu0
        %v1973 = vsel %vm930, %v1776, 0
        %v1976 = vsel %vm930, %v1822, 0
        %v1979 = vsel %vm930, %v1823, 0
        %1981 = vmatprep.subr.bf16.mxu0 0
        %1982 = vmatpush1.bf16.xpose.msra.mxu0 %v1976
        %1983 = vmatprep.subr.bf16.mxu0 0
        %1984 = vmatpush1.bf16.xpose.msra.mxu0 %v1979
        %1985 = vmatprep.subr.bf16.mxu0 0
        %1986 = vmatpush1.bf16.xpose.msra.mxu0 0
        %1987 = vmatprep.subr.bf16.mxu0 0
        %1988 = vmatpush1.bf16.xpose.msra.mxu0 0
        %1989 = vmatprep.subr.bf16.mxu0 0
        %1990 = vmatpush1.bf16.xpose.msra.mxu0 0
        %1991 = vmatprep.subr.bf16.mxu0 0
        %1992 = vmatpush1.bf16.xpose.msra.mxu0 0
        %1993 = vmatprep.subr.bf16.mxu0 0
        %1994 = vmatpush1.bf16.xpose.msra.mxu0 0
        %1995 = vmatprep.subr.bf16.mxu0 0
        %1996 = vmatpush1.bf16.xpose.msra.mxu0 0
        %1997 = vmatprep.subr.bf16.mxu0 0
        %1998 = vmatpush1.bf16.xpose.msra.mxu0 0
        %1999 = vmatprep.subr.bf16.mxu0 0
        %2000 = vmatpush1.bf16.xpose.msra.mxu0 0
        %2001 = vmatprep.subr.bf16.mxu0 0
        %2002 = vmatpush1.bf16.xpose.msra.mxu0 0
        %2003 = vmatprep.subr.bf16.mxu0 0
        %2004 = vmatpush1.bf16.xpose.msra.mxu0 0
        %2005 = vmatprep.subr.bf16.mxu0 0
        %2006 = vmatpush1.bf16.xpose.msra.mxu0 0
        %2007 = vmatprep.subr.bf16.mxu0 0
        %2008 = vmatpush1.bf16.xpose.msra.mxu0 0
        %2009 = vmatprep.subr.bf16.mxu0 0
        %2010 = vmatpush1.bf16.xpose.msra.mxu0 0
        %2011 = vmatprep.subr.bf16.mxu0 0
        %2012 = vmatpush1.bf16.xpose.msra.mxu0 0
        %2013 = vmatprep.mubr.bf16.mxu0 0
        %2014 = vmatmul.mubr.bf16.gmra.mrb[0].mxu0 %v1973
        %v2015 = vpop.f32.mrb[0].mxu0
        %v2016 = vadd.f32 %v515, %v2015
        %v2017 = vpop.f32.mrb[0].mxu0
        %v2018 = vpop.f32.mrb[0].mxu0
        %v2019 = vpop.f32.mrb[0].mxu0
        %2020 = vdwg.mxu0
        %v2022 = vsel %vm930, %v1777, 0
        %v2025 = vsel %vm930, %v1824, 0
        %v2028 = vsel %vm930, %v1825, 0
        %2030 = vmatprep.subr.bf16.mxu0 0
        %2031 = vmatpush1.bf16.xpose.msra.mxu0 %v2025
        %2032 = vmatprep.subr.bf16.mxu0 0
        %2033 = vmatpush1.bf16.xpose.msra.mxu0 %v2028
        %2034 = vmatprep.subr.bf16.mxu0 0
        %2035 = vmatpush1.bf16.xpose.msra.mxu0 0
        %2036 = vmatprep.subr.bf16.mxu0 0
        %2037 = vmatpush1.bf16.xpose.msra.mxu0 0
        %2038 = vmatprep.subr.bf16.mxu0 0
        %2039 = vmatpush1.bf16.xpose.msra.mxu0 0
        %2040 = vmatprep.subr.bf16.mxu0 0
        %2041 = vmatpush1.bf16.xpose.msra.mxu0 0
        %2042 = vmatprep.subr.bf16.mxu0 0
        %2043 = vmatpush1.bf16.xpose.msra.mxu0 0
        %2044 = vmatprep.subr.bf16.mxu0 0
        %2045 = vmatpush1.bf16.xpose.msra.mxu0 0
        %2046 = vmatprep.subr.bf16.mxu0 0
        %2047 = vmatpush1.bf16.xpose.msra.mxu0 0
        %2048 = vmatprep.subr.bf16.mxu0 0
        %2049 = vmatpush1.bf16.xpose.msra.mxu0 0
        %2050 = vmatprep.subr.bf16.mxu0 0
        %2051 = vmatpush1.bf16.xpose.msra.mxu0 0
        %2052 = vmatprep.subr.bf16.mxu0 0
        %2053 = vmatpush1.bf16.xpose.msra.mxu0 0
        %2054 = vmatprep.subr.bf16.mxu0 0
        %2055 = vmatpush1.bf16.xpose.msra.mxu0 0
        %2056 = vmatprep.subr.bf16.mxu0 0
        %2057 = vmatpush1.bf16.xpose.msra.mxu0 0
        %2058 = vmatprep.subr.bf16.mxu0 0
        %2059 = vmatpush1.bf16.xpose.msra.mxu0 0
        %2060 = vmatprep.subr.bf16.mxu0 0
        %2061 = vmatpush1.bf16.xpose.msra.mxu0 0
        %2062 = vmatprep.mubr.bf16.mxu0 0
        %2063 = vmatmul.mubr.bf16.gmra.mrb[0].mxu0 %v2022
        %v2064 = vpop.f32.mrb[0].mxu0
        %v2065 = vadd.f32 %v515, %v2064
        %v2066 = vpop.f32.mrb[0].mxu0
        %v2067 = vpop.f32.mrb[0].mxu0
        %v2068 = vpop.f32.mrb[0].mxu0
        %2069 = vdwg.mxu0
        %v2070 = vsel %vm930, %v1918, -inf
        %2071 = vmax.xlane.f32.xlu0 %v2070
        %v2072 = vpop.xlane.xlu0 %2071
        %v2073 = vsel %vm930, %v1967, -inf
        %2074 = vmax.xlane.f32.xlu0 %v2073
        %v2075 = vpop.xlane.xlu0 %2074
        %v2076 = vsel %vm930, %v2016, -inf
        %2077 = vmax.xlane.f32.xlu0 %v2076
        %v2078 = vpop.xlane.xlu0 %2077
        %v2079 = vsel %vm930, %v2065, -inf
        %2080 = vmax.xlane.f32.xlu0 %v2079
        %v2081 = vpop.xlane.xlu0 %2080
        %v2082 = vsub.f32 %v1918, %v2072
        %v2083 = vsub.f32 %v1967, %v2075
        %v2084 = vsub.f32 %v2016, %v2078
        %v2085 = vsub.f32 %v2065, %v2081
        %v2086 = vmul.f32 %v2082, 1.442695
        %v2087 = vpow.pop %v2086
        %v2088 = vmul.f32 %v2083, 1.442695
        %v2089 = vpow.pop %v2088
        %v2090 = vmul.f32 %v2084, 1.442695
        %v2091 = vpow.pop %v2090
        %v2092 = vmul.f32 %v2085, 1.442695
        %v2093 = vpow.pop %v2092
        %v2094 = vsel %vm930, %v2087, 0.0
        %2095 = vadd.xlane.f32.xlu0 %v2094
        %v2096 = vpop.xlane.xlu0 %2095
        %v2097 = vsel %vm930, %v2089, 0.0
        %2098 = vadd.xlane.f32.xlu0 %v2097
        %v2099 = vpop.xlane.xlu0 %2098
        %v2100 = vsel %vm930, %v2091, 0.0
        %2101 = vadd.xlane.f32.xlu0 %v2100
        %v2102 = vpop.xlane.xlu0 %2101
        %v2103 = vsel %vm930, %v2093, 0.0
        %2104 = vadd.xlane.f32.xlu0 %v2103
        %v2105 = vpop.xlane.xlu0 %2104
        %v2106 = vpack.c.bf16 %v2087, %v2087
        %v2107 = vpack.c.bf16 %v2089, %v2089
        %v2108 = vpack.c.bf16 %v2091, %v2091
        %v2109 = vpack.c.bf16 %v2093, %v2093
        %v2111 = vsel %vm930, %v2106, 0
        %2113 = vmatprep.subr.bf16.mxu0 0
        %2114 = vmatpush1.bf16.msra.mxu0 %v1866
        %2115 = vmatprep.subr.bf16.mxu0 0
        %2116 = vmatpush1.bf16.msra.mxu0 %v1867
        %2117 = vmatprep.subr.bf16.mxu0 0
        %2118 = vmatpush1.bf16.msra.mxu0 0
        %2119 = vmatprep.subr.bf16.mxu0 0
        %2120 = vmatpush1.bf16.msra.mxu0 0
        %2121 = vmatprep.subr.bf16.mxu0 0
        %2122 = vmatpush1.bf16.msra.mxu0 0
        %2123 = vmatprep.subr.bf16.mxu0 0
        %2124 = vmatpush1.bf16.msra.mxu0 0
        %2125 = vmatprep.subr.bf16.mxu0 0
        %2126 = vmatpush1.bf16.msra.mxu0 0
        %2127 = vmatprep.subr.bf16.mxu0 0
        %2128 = vmatpush1.bf16.msra.mxu0 0
        %2129 = vmatprep.subr.bf16.mxu0 0
        %2130 = vmatpush1.bf16.msra.mxu0 0
        %2131 = vmatprep.subr.bf16.mxu0 0
        %2132 = vmatpush1.bf16.msra.mxu0 0
        %2133 = vmatprep.subr.bf16.mxu0 0
        %2134 = vmatpush1.bf16.msra.mxu0 0
        %2135 = vmatprep.subr.bf16.mxu0 0
        %2136 = vmatpush1.bf16.msra.mxu0 0
        %2137 = vmatprep.subr.bf16.mxu0 0
        %2138 = vmatpush1.bf16.msra.mxu0 0
        %2139 = vmatprep.subr.bf16.mxu0 0
        %2140 = vmatpush1.bf16.msra.mxu0 0
        %2141 = vmatprep.subr.bf16.mxu0 0
        %2142 = vmatpush1.bf16.msra.mxu0 0
        %2143 = vmatprep.subr.bf16.mxu0 0
        %2144 = vmatpush1.bf16.msra.mxu0 0
        %2145 = vmatprep.mubr.bf16.mxu0 0
        %2146 = vmatmul.mubr.bf16.gmra.mrb[0].mxu0 %v2111
        %v2147 = vpop.f32.mrb[0].mxu0
        %v2148 = vadd.f32 0.0, %v2147
        %v2149 = vpop.f32.mrb[0].mxu0
        %v2150 = vpop.f32.mrb[0].mxu0
        %v2151 = vpop.f32.mrb[0].mxu0
        %2152 = vdwg.mxu0
        %v2154 = vsel %vm930, %v2107, 0
        %2156 = vmatprep.subr.bf16.mxu0 0
        %2157 = vmatpush1.bf16.msra.mxu0 %v1868
        %2158 = vmatprep.subr.bf16.mxu0 0
        %2159 = vmatpush1.bf16.msra.mxu0 %v1869
        %2160 = vmatprep.subr.bf16.mxu0 0
        %2161 = vmatpush1.bf16.msra.mxu0 0
        %2162 = vmatprep.subr.bf16.mxu0 0
        %2163 = vmatpush1.bf16.msra.mxu0 0
        %2164 = vmatprep.subr.bf16.mxu0 0
        %2165 = vmatpush1.bf16.msra.mxu0 0
        %2166 = vmatprep.subr.bf16.mxu0 0
        %2167 = vmatpush1.bf16.msra.mxu0 0
        %2168 = vmatprep.subr.bf16.mxu0 0
        %2169 = vmatpush1.bf16.msra.mxu0 0
        %2170 = vmatprep.subr.bf16.mxu0 0
        %2171 = vmatpush1.bf16.msra.mxu0 0
        %2172 = vmatprep.subr.bf16.mxu0 0
        %2173 = vmatpush1.bf16.msra.mxu0 0
        %2174 = vmatprep.subr.bf16.mxu0 0
        %2175 = vmatpush1.bf16.msra.mxu0 0
        %2176 = vmatprep.subr.bf16.mxu0 0
        %2177 = vmatpush1.bf16.msra.mxu0 0
        %2178 = vmatprep.subr.bf16.mxu0 0
        %2179 = vmatpush1.bf16.msra.mxu0 0
        %2180 = vmatprep.subr.bf16.mxu0 0
        %2181 = vmatpush1.bf16.msra.mxu0 0
        %2182 = vmatprep.subr.bf16.mxu0 0
        %2183 = vmatpush1.bf16.msra.mxu0 0
        %2184 = vmatprep.subr.bf16.mxu0 0
        %2185 = vmatpush1.bf16.msra.mxu0 0
        %2186 = vmatprep.subr.bf16.mxu0 0
        %2187 = vmatpush1.bf16.msra.mxu0 0
        %2188 = vmatprep.mubr.bf16.mxu0 0
        %2189 = vmatmul.mubr.bf16.gmra.mrb[0].mxu0 %v2154
        %v2190 = vpop.f32.mrb[0].mxu0
        %v2191 = vadd.f32 0.0, %v2190
        %v2192 = vpop.f32.mrb[0].mxu0
        %v2193 = vpop.f32.mrb[0].mxu0
        %v2194 = vpop.f32.mrb[0].mxu0
        %2195 = vdwg.mxu0
        %v2197 = vsel %vm930, %v2108, 0
        %2199 = vmatprep.subr.bf16.mxu0 0
        %2200 = vmatpush1.bf16.msra.mxu0 %v1870
        %2201 = vmatprep.subr.bf16.mxu0 0
        %2202 = vmatpush1.bf16.msra.mxu0 %v1871
        %2203 = vmatprep.subr.bf16.mxu0 0
        %2204 = vmatpush1.bf16.msra.mxu0 0
        %2205 = vmatprep.subr.bf16.mxu0 0
        %2206 = vmatpush1.bf16.msra.mxu0 0
        %2207 = vmatprep.subr.bf16.mxu0 0
        %2208 = vmatpush1.bf16.msra.mxu0 0
        %2209 = vmatprep.subr.bf16.mxu0 0
        %2210 = vmatpush1.bf16.msra.mxu0 0
        %2211 = vmatprep.subr.bf16.mxu0 0
        %2212 = vmatpush1.bf16.msra.mxu0 0
        %2213 = vmatprep.subr.bf16.mxu0 0
        %2214 = vmatpush1.bf16.msra.mxu0 0
        %2215 = vmatprep.subr.bf16.mxu0 0
        %2216 = vmatpush1.bf16.msra.mxu0 0
        %2217 = vmatprep.subr.bf16.mxu0 0
        %2218 = vmatpush1.bf16.msra.mxu0 0
        %2219 = vmatprep.subr.bf16.mxu0 0
        %2220 = vmatpush1.bf16.msra.mxu0 0
        %2221 = vmatprep.subr.bf16.mxu0 0
        %2222 = vmatpush1.bf16.msra.mxu0 0
        %2223 = vmatprep.subr.bf16.mxu0 0
        %2224 = vmatpush1.bf16.msra.mxu0 0
        %2225 = vmatprep.subr.bf16.mxu0 0
        %2226 = vmatpush1.bf16.msra.mxu0 0
        %2227 = vmatprep.subr.bf16.mxu0 0
        %2228 = vmatpush1.bf16.msra.mxu0 0
        %2229 = vmatprep.subr.bf16.mxu0 0
        %2230 = vmatpush1.bf16.msra.mxu0 0
        %2231 = vmatprep.mubr.bf16.mxu0 0
        %2232 = vmatmul.mubr.bf16.gmra.mrb[0].mxu0 %v2197
        %v2233 = vpop.f32.mrb[0].mxu0
        %v2234 = vadd.f32 0.0, %v2233
        %v2235 = vpop.f32.mrb[0].mxu0
        %v2236 = vpop.f32.mrb[0].mxu0
        %v2237 = vpop.f32.mrb[0].mxu0
        %2238 = vdwg.mxu0
        %v2240 = vsel %vm930, %v2109, 0
        %2242 = vmatprep.subr.bf16.mxu0 0
        %2243 = vmatpush1.bf16.msra.mxu0 %v1872
        %2244 = vmatprep.subr.bf16.mxu0 0
        %2245 = vmatpush1.bf16.msra.mxu0 %v1873
        %2246 = vmatprep.subr.bf16.mxu0 0
        %2247 = vmatpush1.bf16.msra.mxu0 0
        %2248 = vmatprep.subr.bf16.mxu0 0
        %2249 = vmatpush1.bf16.msra.mxu0 0
        %2250 = vmatprep.subr.bf16.mxu0 0
        %2251 = vmatpush1.bf16.msra.mxu0 0
        %2252 = vmatprep.subr.bf16.mxu0 0
        %2253 = vmatpush1.bf16.msra.mxu0 0
        %2254 = vmatprep.subr.bf16.mxu0 0
        %2255 = vmatpush1.bf16.msra.mxu0 0
        %2256 = vmatprep.subr.bf16.mxu0 0
        %2257 = vmatpush1.bf16.msra.mxu0 0
        %2258 = vmatprep.subr.bf16.mxu0 0
        %2259 = vmatpush1.bf16.msra.mxu0 0
        %2260 = vmatprep.subr.bf16.mxu0 0
        %2261 = vmatpush1.bf16.msra.mxu0 0
        %2262 = vmatprep.subr.bf16.mxu0 0
        %2263 = vmatpush1.bf16.msra.mxu0 0
        %2264 = vmatprep.subr.bf16.mxu0 0
        %2265 = vmatpush1.bf16.msra.mxu0 0
        %2266 = vmatprep.subr.bf16.mxu0 0
        %2267 = vmatpush1.bf16.msra.mxu0 0
        %2268 = vmatprep.subr.bf16.mxu0 0
        %2269 = vmatpush1.bf16.msra.mxu0 0
        %2270 = vmatprep.subr.bf16.mxu0 0
        %2271 = vmatpush1.bf16.msra.mxu0 0
        %2272 = vmatprep.subr.bf16.mxu0 0
        %2273 = vmatpush1.bf16.msra.mxu0 0
        %2274 = vmatprep.mubr.bf16.mxu0 0
        %2275 = vmatmul.mubr.bf16.gmra.mrb[0].mxu0 %v2240
        %v2276 = vpop.f32.mrb[0].mxu0
        %v2277 = vadd.f32 0.0, %v2276
        %v2278 = vpop.f32.mrb[0].mxu0
        %v2279 = vpop.f32.mrb[0].mxu0
        %v2280 = vpop.f32.mrb[0].mxu0
        %2281 = vdwg.mxu0
        %v2282 = vrcp.pop %v2096
        %v2283 = vrcp.pop %v2099
        %v2284 = vrcp.pop %v2102
        %v2285 = vrcp.pop %v2105
        %v2286 = vmul.f32 %v2148, %v2282
        %v2287 = vmul.f32 %v2191, %v2283
        %v2288 = vmul.f32 %v2234, %v2284
        %v2289 = vmul.f32 %v2277, %v2285
        %2291 = vrot.lane.b32.xlu0 %v2287, 32
        %v2292 = vpop.permute.xlu0 %2291
        %2295 = vrot.lane.b32.xlu0 %v2288, 64
        %v2296 = vpop.permute.xlu0 %2295
        %2299 = vrot.lane.b32.xlu0 %v2289, 96
        %v2300 = vpop.permute.xlu0 %2299
        %v2302 = vsel %vm930, %v2286, %v2292
        %v2303 = vsel %vm1349, %v2302, %v2296
        %v2304 = vsel %vm1351, %v2303, %v2300
        %v2305 = vpack.c.bf16 %v2304, %v2304
        %v2307 = vlaneseq
        %v2308 = vshrl.u32 %v2307, 7
        %v2309 = vsub.s32 0, %v2308
        %v2310 = vrot.slane %v1762, %v2309
        %v2328 = vunpack.c.l.b16 %v1746
        %v2329 = vunpack.c.l.b16 %v1747
        %v2330 = vunpack.c.l.b16 %v1748
        %v2331 = vunpack.c.l.b16 %v1749
        %v2332 = vunpack.c.l.b16 %v1750
        %v2333 = vunpack.c.l.b16 %v1751
        %v2334 = vunpack.c.l.b16 %v1752
        %v2335 = vunpack.c.l.b16 %v1753
        %v2336 = vunpack.c.l.b16 %v1754
        %v2337 = vunpack.c.l.b16 %v1755
        %v2338 = vunpack.c.l.b16 %v1756
        %v2339 = vunpack.c.l.b16 %v1757
        %v2340 = vunpack.c.l.b16 %v1758
        %v2341 = vunpack.c.l.b16 %v1759
        %v2342 = vunpack.c.l.b16 %v1760
        %v2343 = vunpack.c.l.b16 %v1761
        %v2344 = vpack.c.b16 %v2329, %v2328
        %v2345 = vpack.c.b16 %v2331, %v2330
        %v2346 = vpack.c.b16 %v2333, %v2332
        %v2347 = vpack.c.b16 %v2335, %v2334
        %v2348 = vpack.c.b16 %v2337, %v2336
        %v2349 = vpack.c.b16 %v2339, %v2338
        %v2350 = vpack.c.b16 %v2341, %v2340
        %v2351 = vpack.c.b16 %v2343, %v2342
        %2360 = vmatprep.subr.bf16.mxu0 0
        %2361 = vmatpush1.bf16.msra.mxu0 %v2344
        %2362 = vmatprep.subr.bf16.mxu0 0
        %2363 = vmatpush1.bf16.msra.mxu0 %v2345
        %2364 = vmatprep.subr.bf16.mxu0 0
        %2365 = vmatpush1.bf16.msra.mxu0 %v2346
        %2366 = vmatprep.subr.bf16.mxu0 0
        %2367 = vmatpush1.bf16.msra.mxu0 %v2347
        %2368 = vmatprep.subr.bf16.mxu0 0
        %2369 = vmatpush1.bf16.msra.mxu0 %v2348
        %2370 = vmatprep.subr.bf16.mxu0 0
        %2371 = vmatpush1.bf16.msra.mxu0 %v2349
        %2372 = vmatprep.subr.bf16.mxu0 0
        %2373 = vmatpush1.bf16.msra.mxu0 %v2350
        %2374 = vmatprep.subr.bf16.mxu0 0
        %2375 = vmatpush1.bf16.msra.mxu0 %v2351
        %2376 = vmatprep.subr.bf16.mxu0 0
        %2377 = vmatpush1.bf16.msra.mxu0 0
        %2378 = vmatprep.subr.bf16.mxu0 0
        %2379 = vmatpush1.bf16.msra.mxu0 0
        %2380 = vmatprep.subr.bf16.mxu0 0
        %2381 = vmatpush1.bf16.msra.mxu0 0
        %2382 = vmatprep.subr.bf16.mxu0 0
        %2383 = vmatpush1.bf16.msra.mxu0 0
        %2384 = vmatprep.subr.bf16.mxu0 0
        %2385 = vmatpush1.bf16.msra.mxu0 0
        %2386 = vmatprep.subr.bf16.mxu0 0
        %2387 = vmatpush1.bf16.msra.mxu0 0
        %2388 = vmatprep.subr.bf16.mxu0 0
        %2389 = vmatpush1.bf16.msra.mxu0 0
        %2390 = vmatprep.subr.bf16.mxu0 0
        %2391 = vmatpush1.bf16.msra.mxu0 0
        %2392 = vmatprep.mubr.bf16.mxu0 0
        %2393 = vmatmul.mubr.bf16.gmra.mrb[0].mxu0 %v2305
        %v2394 = vpop.f32.mrb[0].mxu0
        %v2395 = vadd.f32 %v2310, %v2394
        %v2396 = vpop.f32.mrb[0].mxu0
        %v2397 = vpop.f32.mrb[0].mxu0
        %v2398 = vpop.f32.mrb[0].mxu0
        %2399 = vdwg.mxu0
        %v2400 = vadd.f32 %v1448, %v2395
        %2401 = vadd.xlane.f32.xlu0 %v2400
        %v2402 = vpop.xlane.xlu0 %2401
        %v2403 = vmul.f32 %v2402, %v524
        %v2404 = vsub.f32 %v2400, %v2403
        %v2405 = vmul.f32 %v2404, %v2404
        %2406 = vadd.xlane.f32.xlu0 %v2405
        %v2407 = vpop.xlane.xlu0 %2406
        %v2408 = vmul.f32 %v2407, %v530
        %v2409 = vrsqrt.pop %v2408
        %v2410 = vmul.f32 %v2408, %v2409
        %vm2411 = vcmp.eq.f32.partialorder %v2408, inf
        %v2412 = vsel %vm2411, %v2408, %v2410
        %vm2413 = vcmp.eq.f32.partialorder %v2408, 0.0
        %v2414 = vand.u32 %v2408, 2147483648
        %v2415 = vsel %vm2413, %v2414, %v2412
        %v2416 = vadd.f32 %v2415, 1e-06
        %v2417 = vrcp.pop %v2416
        %v2418 = vstv %s520
        %v2419 = vmul.f32 %v2418, %v2404
        %v2420 = vmul.f32 %v2419, %v2417
        %v2421 = vstv %s521
        %v2422 = vadd.f32 %v2420, %v2421
        %v2423 = vpack.c.bf16 %v2422, %v2422
        %v2424 = vld [vmem:[#allocation11 + $0x20] sm:$0xff]
        %v2425 = vld [vmem:[#allocation11 + $0x48] sm:$0xff]
        %v2426 = vld [vmem:[#allocation11 + $0x70] sm:$0xff]
        %v2427 = vld [vmem:[#allocation11 + $0x98] sm:$0xff]
        %v2428 = vld [vmem:[#allocation11 + $0xc0] sm:$0xff]
        %v2429 = vld [vmem:[#allocation11 + $0xe8] sm:$0xff]
        %v2430 = vld [vmem:[#allocation11 + $0x110] sm:$0xff]
        %v2431 = vld [vmem:[#allocation11 + $0x138] sm:$0xff]
        %v2432 = vld [vmem:[#allocation11 + $0x160] sm:$0xff]
        %v2433 = vld [vmem:[#allocation11 + $0x188] sm:$0xff]
        %v2434 = vld [vmem:[#allocation11 + $0x1b0] sm:$0xff]
        %v2435 = vld [vmem:[#allocation11 + $0x1d8] sm:$0xff]
        %v2436 = vld [vmem:[#allocation11 + $0x200] sm:$0xff]
        %v2437 = vld [vmem:[#allocation11 + $0x228] sm:$0xff]
        %v2438 = vld [vmem:[#allocation11 + $0x250] sm:$0xff]
        %v2439 = vld [vmem:[#allocation11 + $0x278] sm:$0xff]
        %v2440 = vld [vmem:[%s6 + $0x8] sm:$0x3]
        %v2442 = vlaneseq
        %v2443 = vshrl.u32 %v2442, 7
        %v2444 = vsub.s32 0, %v2443
        %v2445 = vrot.slane %v2440, %v2444
        %v2446 = vlaneseq
        %v2447 = vshrl.u32 %v2446, 7
        %v2448 = vsub.s32 1, %v2447
        %v2449 = vrot.slane %v2440, %v2448
        %v2468 = vunpack.c.l.b16 %v2424
        %v2469 = vunpack.c.h.b16 %v2424
        %v2470 = vunpack.c.l.b16 %v2425
        %v2471 = vunpack.c.h.b16 %v2425
        %v2472 = vunpack.c.l.b16 %v2426
        %v2473 = vunpack.c.h.b16 %v2426
        %v2474 = vunpack.c.l.b16 %v2427
        %v2475 = vunpack.c.h.b16 %v2427
        %v2476 = vunpack.c.l.b16 %v2428
        %v2477 = vunpack.c.h.b16 %v2428
        %v2478 = vunpack.c.l.b16 %v2429
        %v2479 = vunpack.c.h.b16 %v2429
        %v2480 = vunpack.c.l.b16 %v2430
        %v2481 = vunpack.c.h.b16 %v2430
        %v2482 = vunpack.c.l.b16 %v2431
        %v2483 = vunpack.c.h.b16 %v2431
        %v2484 = vunpack.c.l.b16 %v2432
        %v2485 = vunpack.c.h.b16 %v2432
        %v2486 = vunpack.c.l.b16 %v2433
        %v2487 = vunpack.c.h.b16 %v2433
        %v2488 = vunpack.c.l.b16 %v2434
        %v2489 = vunpack.c.h.b16 %v2434
        %v2490 = vunpack.c.l.b16 %v2435
        %v2491 = vunpack.c.h.b16 %v2435
        %v2492 = vunpack.c.l.b16 %v2436
        %v2493 = vunpack.c.h.b16 %v2436
        %v2494 = vunpack.c.l.b16 %v2437
        %v2495 = vunpack.c.h.b16 %v2437
        %v2496 = vunpack.c.l.b16 %v2438
        %v2497 = vunpack.c.h.b16 %v2438
        %v2498 = vunpack.c.l.b16 %v2439
        %v2499 = vunpack.c.h.b16 %v2439
        %v2500 = vpack.c.b16 %v2470, %v2468
        %v2501 = vpack.c.b16 %v2471, %v2469
        %v2502 = vpack.c.b16 %v2474, %v2472
        %v2503 = vpack.c.b16 %v2475, %v2473
        %v2504 = vpack.c.b16 %v2478, %v2476
        %v2505 = vpack.c.b16 %v2479, %v2477
        %v2506 = vpack.c.b16 %v2482, %v2480
        %v2507 = vpack.c.b16 %v2483, %v2481
        %v2508 = vpack.c.b16 %v2486, %v2484
        %v2509 = vpack.c.b16 %v2487, %v2485
        %v2510 = vpack.c.b16 %v2490, %v2488
        %v2511 = vpack.c.b16 %v2491, %v2489
        %v2512 = vpack.c.b16 %v2494, %v2492
        %v2513 = vpack.c.b16 %v2495, %v2493
        %v2514 = vpack.c.b16 %v2498, %v2496
        %v2515 = vpack.c.b16 %v2499, %v2497
        %2532 = vmatprep.subr.bf16.mxu0 %v2501
        %2533 = vmatpush1.bf16.msra.mxu0 %v2500
        %2534 = vmatprep.subr.bf16.mxu0 %v2503
        %2535 = vmatpush1.bf16.msra.mxu0 %v2502
        %2536 = vmatprep.subr.bf16.mxu0 %v2505
        %2537 = vmatpush1.bf16.msra.mxu0 %v2504
        %2538 = vmatprep.subr.bf16.mxu0 %v2507
        %2539 = vmatpush1.bf16.msra.mxu0 %v2506
        %2540 = vmatprep.subr.bf16.mxu0 %v2509
        %2541 = vmatpush1.bf16.msra.mxu0 %v2508
        %2542 = vmatprep.subr.bf16.mxu0 %v2511
        %2543 = vmatpush1.bf16.msra.mxu0 %v2510
        %2544 = vmatprep.subr.bf16.mxu0 %v2513
        %2545 = vmatpush1.bf16.msra.mxu0 %v2512
        %2546 = vmatprep.subr.bf16.mxu0 %v2515
        %2547 = vmatpush1.bf16.msra.mxu0 %v2514
        %2548 = vmatprep.subr.bf16.mxu0 0
        %2549 = vmatpush1.bf16.msra.mxu0 0
        %2550 = vmatprep.subr.bf16.mxu0 0
        %2551 = vmatpush1.bf16.msra.mxu0 0
        %2552 = vmatprep.subr.bf16.mxu0 0
        %2553 = vmatpush1.bf16.msra.mxu0 0
        %2554 = vmatprep.subr.bf16.mxu0 0
        %2555 = vmatpush1.bf16.msra.mxu0 0
        %2556 = vmatprep.subr.bf16.mxu0 0
        %2557 = vmatpush1.bf16.msra.mxu0 0
        %2558 = vmatprep.subr.bf16.mxu0 0
        %2559 = vmatpush1.bf16.msra.mxu0 0
        %2560 = vmatprep.subr.bf16.mxu0 0
        %2561 = vmatpush1.bf16.msra.mxu0 0
        %2562 = vmatprep.subr.bf16.mxu0 0
        %2563 = vmatpush1.bf16.msra.mxu0 0
        %2564 = vmatprep.mubr.bf16.mxu0 0
        %2565 = vmatmul.mubr.bf16.gmra.mrb[0].mxu0 %v2423
        %v2566 = vpop.f32.mrb[0].mxu0
        %v2567 = vadd.f32 %v2445, %v2566
        %v2568 = vpop.f32.mrb[0].mxu0
        %v2569 = vadd.f32 %v2449, %v2568
        %v2570 = vpop.f32.mrb[0].mxu0
        %v2571 = vpop.f32.mrb[0].mxu0
        %2572 = vdwg.mxu0
        %v2573 = vmax.f32 %v2567, 0.0
        %v2574 = vmax.f32 %v2569, 0.0
        %v2575 = vpack.c.bf16 %v2573, %v2573
        %v2576 = vpack.c.bf16 %v2574, %v2574
        %v2577 = vld [vmem:[#allocation12] sm:$0xf]
        %v2578 = vld [vmem:[#allocation12 + $0x4] sm:$0xf]
        %v2579 = vld [vmem:[#allocation12 + $0x8] sm:$0xf]
        %v2580 = vld [vmem:[#allocation12 + $0xc] sm:$0xf]
        %v2581 = vld [vmem:[#allocation12 + $0x10] sm:$0xf]
        %v2582 = vld [vmem:[#allocation12 + $0x14] sm:$0xf]
        %v2583 = vld [vmem:[#allocation12 + $0x18] sm:$0xf]
        %v2584 = vld [vmem:[#allocation12 + $0x1c] sm:$0xf]
        %v2585 = vld [vmem:[#allocation12 + $0x20] sm:$0xf]
        %v2586 = vld [vmem:[#allocation12 + $0x24] sm:$0xf]
        %v2587 = vld [vmem:[#allocation12 + $0x28] sm:$0xf]
        %v2588 = vld [vmem:[#allocation12 + $0x2c] sm:$0xf]
        %v2589 = vld [vmem:[#allocation12 + $0x30] sm:$0xf]
        %v2590 = vld [vmem:[#allocation12 + $0x34] sm:$0xf]
        %v2591 = vld [vmem:[#allocation12 + $0x38] sm:$0xf]
        %v2592 = vld [vmem:[#allocation12 + $0x3c] sm:$0xf]
        %v2593 = vld [vmem:[#allocation12 + $0x40] sm:$0xf]
        %v2594 = vld [vmem:[#allocation12 + $0x44] sm:$0xf]
        %v2595 = vld [vmem:[#allocation12 + $0x48] sm:$0xf]
        %v2596 = vld [vmem:[#allocation12 + $0x4c] sm:$0xf]
        %v2597 = vld [vmem:[#allocation12 + $0x50] sm:$0xf]
        %v2598 = vld [vmem:[#allocation12 + $0x54] sm:$0xf]
        %v2599 = vld [vmem:[#allocation12 + $0x58] sm:$0xf]
        %v2600 = vld [vmem:[#allocation12 + $0x5c] sm:$0xf]
        %v2601 = vld [vmem:[#allocation12 + $0x60] sm:$0xf]
        %v2602 = vld [vmem:[#allocation12 + $0x64] sm:$0xf]
        %v2603 = vld [vmem:[#allocation12 + $0x68] sm:$0xf]
        %v2604 = vld [vmem:[#allocation12 + $0x6c] sm:$0xf]
        %v2605 = vld [vmem:[#allocation12 + $0x70] sm:$0xf]
        %v2606 = vld [vmem:[#allocation12 + $0x74] sm:$0xf]
        %v2607 = vld [vmem:[#allocation12 + $0x78] sm:$0xf]
        %v2608 = vld [vmem:[#allocation12 + $0x7c] sm:$0xf]
        %v2609 = vld [vmem:[%s6 + $0xa] sm:$0x1]
        %v2611 = vlaneseq
        %v2612 = vshrl.u32 %v2611, 7
        %v2613 = vsub.s32 0, %v2612
        %v2614 = vrot.slane %v2609, %v2613
        %v2648 = vunpack.c.l.b16 %v2577
        %v2649 = vunpack.c.l.b16 %v2578
        %v2650 = vunpack.c.l.b16 %v2579
        %v2651 = vunpack.c.l.b16 %v2580
        %v2652 = vunpack.c.l.b16 %v2581
        %v2653 = vunpack.c.l.b16 %v2582
        %v2654 = vunpack.c.l.b16 %v2583
        %v2655 = vunpack.c.l.b16 %v2584
        %v2656 = vunpack.c.l.b16 %v2585
        %v2657 = vunpack.c.l.b16 %v2586
        %v2658 = vunpack.c.l.b16 %v2587
        %v2659 = vunpack.c.l.b16 %v2588
        %v2660 = vunpack.c.l.b16 %v2589
        %v2661 = vunpack.c.l.b16 %v2590
        %v2662 = vunpack.c.l.b16 %v2591
        %v2663 = vunpack.c.l.b16 %v2592
        %v2664 = vunpack.c.l.b16 %v2593
        %v2665 = vunpack.c.l.b16 %v2594
        %v2666 = vunpack.c.l.b16 %v2595
        %v2667 = vunpack.c.l.b16 %v2596
        %v2668 = vunpack.c.l.b16 %v2597
        %v2669 = vunpack.c.l.b16 %v2598
        %v2670 = vunpack.c.l.b16 %v2599
        %v2671 = vunpack.c.l.b16 %v2600
        %v2672 = vunpack.c.l.b16 %v2601
        %v2673 = vunpack.c.l.b16 %v2602
        %v2674 = vunpack.c.l.b16 %v2603
        %v2675 = vunpack.c.l.b16 %v2604
        %v2676 = vunpack.c.l.b16 %v2605
        %v2677 = vunpack.c.l.b16 %v2606
        %v2678 = vunpack.c.l.b16 %v2607
        %v2679 = vunpack.c.l.b16 %v2608
        %v2680 = vpack.c.b16 %v2649, %v2648
        %v2681 = vpack.c.b16 %v2651, %v2650
        %v2682 = vpack.c.b16 %v2653, %v2652
        %v2683 = vpack.c.b16 %v2655, %v2654
        %v2684 = vpack.c.b16 %v2657, %v2656
        %v2685 = vpack.c.b16 %v2659, %v2658
        %v2686 = vpack.c.b16 %v2661, %v2660
        %v2687 = vpack.c.b16 %v2663, %v2662
        %v2688 = vpack.c.b16 %v2665, %v2664
        %v2689 = vpack.c.b16 %v2667, %v2666
        %v2690 = vpack.c.b16 %v2669, %v2668
        %v2691 = vpack.c.b16 %v2671, %v2670
        %v2692 = vpack.c.b16 %v2673, %v2672
        %v2693 = vpack.c.b16 %v2675, %v2674
        %v2694 = vpack.c.b16 %v2677, %v2676
        %v2695 = vpack.c.b16 %v2679, %v2678
        %2712 = vmatprep.subr.bf16.mxu0 0
        %2713 = vmatpush1.bf16.msra.mxu0 %v2680
        %2714 = vmatprep.subr.bf16.mxu0 0
        %2715 = vmatpush1.bf16.msra.mxu0 %v2681
        %2716 = vmatprep.subr.bf16.mxu0 0
        %2717 = vmatpush1.bf16.msra.mxu0 %v2682
        %2718 = vmatprep.subr.bf16.mxu0 0
        %2719 = vmatpush1.bf16.msra.mxu0 %v2683
        %2720 = vmatprep.subr.bf16.mxu0 0
        %2721 = vmatpush1.bf16.msra.mxu0 %v2684
        %2722 = vmatprep.subr.bf16.mxu0 0
        %2723 = vmatpush1.bf16.msra.mxu0 %v2685
        %2724 = vmatprep.subr.bf16.mxu0 0
        %2725 = vmatpush1.bf16.msra.mxu0 %v2686
        %2726 = vmatprep.subr.bf16.mxu0 0
        %2727 = vmatpush1.bf16.msra.mxu0 %v2687
        %2728 = vmatprep.subr.bf16.mxu0 0
        %2729 = vmatpush1.bf16.msra.mxu0 %v2688
        %2730 = vmatprep.subr.bf16.mxu0 0
        %2731 = vmatpush1.bf16.msra.mxu0 %v2689
        %2732 = vmatprep.subr.bf16.mxu0 0
        %2733 = vmatpush1.bf16.msra.mxu0 %v2690
        %2734 = vmatprep.subr.bf16.mxu0 0
        %2735 = vmatpush1.bf16.msra.mxu0 %v2691
        %2736 = vmatprep.subr.bf16.mxu0 0
        %2737 = vmatpush1.bf16.msra.mxu0 %v2692
        %2738 = vmatprep.subr.bf16.mxu0 0
        %2739 = vmatpush1.bf16.msra.mxu0 %v2693
        %2740 = vmatprep.subr.bf16.mxu0 0
        %2741 = vmatpush1.bf16.msra.mxu0 %v2694
        %2742 = vmatprep.subr.bf16.mxu0 0
        %2743 = vmatpush1.bf16.msra.mxu0 %v2695
        %2744 = vmatprep.mubr.bf16.mxu0 %v2576
        %2745 = vmatmul.mubr.bf16.gmra.mrb[0].mxu0 %v2575
        %v2746 = vpop.f32.mrb[0].mxu0
        %v2747 = vadd.f32 %v2614, %v2746
        %v2748 = vpop.f32.mrb[0].mxu0
        %v2749 = vpop.f32.mrb[0].mxu0
        %v2750 = vpop.f32.mrb[0].mxu0
        %2751 = vdwg.mxu0
        %v2752 = vadd.f32 %v2400, %v2747
        %2753 = vst [vmem:[%s499] sm:$0xff] %v2752
        %s2754 = sand.u32 %s247, 1
        %s2755 = scalar_lea.sflag [#allocation4], %s2754
        %s2756 = sand.u32 %s247, 1
        %s2757 = smul.addr %s2756, 8
        %s2758 = scalar_lea.vmem [#allocation15], %s2757
        // Predicated region
        $region81: #{tpu_custom_call.1} parent=51 // pred_check
          %p2759 = pneg %p257
        $region82: #{tpu_custom_call.1} parent=51 // pred_check_branch
          %2761 = sbr.rel (%p2759) target = $region84
        $region83: #{tpu_custom_call.1} parent=51 // pred_region
          %s2763 = ssub.s32 128, 128
          %2764 = vsyncadd %s2755, %s2763
          %s2765 = smul.addr %s37, 2
          %s2766 = sadd.s32 %s38, %s2765
          %s2767 = smul.addr %s2766, 128
          %s2768 = scalar_lea.hbm %s8, %s2767
          %s2770 = sshll.u32 %s2758, 4
          %s2771 = int_to_ptr.vmem [resolvable:$true] %s2770
          %2773 = dma.vmem_to_hbm [thread:$0]  %s2771, 128, %s2768, %s2755
        $region84: #{tpu_custom_call.1} parent=51 // pred_fallthru
          _
      $region52: #{tpu_custom_call.1} parent=5 // pred_fallthru
        _
      %p2774 = scmp.le.s32.totalorder 2, %s28
      // Predicated region
      $region85: #{tpu_custom_call.1} parent=5 // pred_check
        %p2775 = pneg %p2774
      $region86: #{tpu_custom_call.1} parent=5 // pred_check_branch
        %2777 = sbr.rel (%p2775) target = $region88
      $region87: #{tpu_custom_call.1} parent=5 // pred_region
        %s2778 = ssub.s32 %s28, 2
        // Predicated region
        $region89: #{tpu_custom_call.1} parent=87 // pred_check
          %p2779 = pneg %p263
        $region90: #{tpu_custom_call.1} parent=87 // pred_check_branch
          %2781 = sbr.rel (%p2779) target = $region92
        $region91: #{tpu_custom_call.1} parent=87 // pred_region
          %s2782 = sand.u32 %s248, 1
          %s2783 = scalar_lea.sflag [#allocation4], %s2782
          %s2784 = sand.u32 %s248, 1
          %s2785 = smul.addr %s2784, 8
          %s2786 = scalar_lea.vmem [#allocation15], %s2785
          %2787 = dma.done %s2783, 128
        $region92: #{tpu_custom_call.1} parent=87 // pred_fallthru
          _
      $region88: #{tpu_custom_call.1} parent=5 // pred_fallthru
        _
    $region6: #{tpu_custom_call.1} parent=1 // loop_footer
      %s32 = sadd.s32 1, %s28
    $region7: #{tpu_custom_call.1} parent=1 // loop_footer_branch
      %27 = sbr.rel target = $region3
    $region8: #{tpu_custom_call.1} parent=1 // loop_exit
      _
    %2788 = vsyncpa [#allocation3], 1
    %s2789 = scalar_lea.sflag [#allocation3], 1
    %2790 = vsyncpa %s2789, 1
    %2791 = vsyncpa [#allocation7], 1
    %s2792 = scalar_lea.sflag [#allocation7], 1
    %2793 = vsyncpa %s2792, 1
    %2794 = vsyncpa [#allocation10], 1
    %s2795 = scalar_lea.sflag [#allocation10], 1
    %2796 = vsyncpa %s2795, 1
    %2797 = vsyncpa [#allocation13], 1
    %2798 = vsyncpa [#allocation4], 1
    %s2799 = scalar_lea.sflag [#allocation4], 1
    %2800 = vsyncpa %s2799, 1
    %2801 = vsyncpa [#allocation5], 1
    %s2802 = scalar_lea.sflag [#allocation5], 1
    %2803 = vsyncpa %s2802, 1

</llo_original>
